<compile_context>
chip_gen: v6e
topology: v6e:2x2x1
jax: 0.10.0
libtpu: 0.0.40
codegen_flags: <defaults>
</compile_context>

<pallas_src>
import functools
import math

import jax
import jax.numpy as jnp
from jax import lax
from jax.experimental import pallas as pl
from jax.experimental.pallas import tpu as pltpu

_LANE = 128     # lane (last-dim) granularity
_SUBLANE = 8    # f32 sublane granularity


def _round_up(x, m):
    return (x + m - 1) // m * m


# ----------------------------------------------------------------------------
# Pallas kernel: one full bidirectional LSTM layer over the whole sequence.
# grid=(1,): everything resident in VMEM, recurrence via in-kernel loop.
#
#   x_ref      : (T*Bp, Din)   time-major, batch padded to a sublane multiple
#   w_in_ref   : (Din, 2*Gp)   [W_ih_fwd^T | W_ih_bwd^T], gate cols i,f,g,o
#   b_ref      : (1, 2*Gp)     (b_ih + b_hh) per direction, same column layout
#   whh_*_ref  : (H, Gp)       W_hh^T per direction
#   out_ref    : (2, T*Bp, H)  out[0] = forward h_t, out[1] = backward h_t
#   xproj_ref  : (T*Bp, 2*Gp)  VMEM scratch for the hoisted input projection
# ----------------------------------------------------------------------------
def _bilstm_layer_kernel(T, Bp, H, Gp, x_ref, w_in_ref, b_ref,
                         whh_f_ref, whh_b_ref, out_ref, xproj_ref):
    # 1) Hoisted input projection: one MXU matmul with M = T*Bp rows, both
    #    directions fused along N, biases folded in (added once, not per step).
    xproj_ref[...] = (
        jnp.dot(x_ref[...], w_in_ref[...], preferred_element_type=jnp.float32)
        + b_ref[...])

    # Hoist recurrent weights (and avoid re-loading them every step).
    whh_f = whh_f_ref[...]
    whh_b = whh_b_ref[...]

    def sigmoid(v):
        # exact sigmoid via a single EUP tanh + cheap VPU mul/add
        return 0.5 * jnp.tanh(0.5 * v) + 0.5

    def cell(xp, h, c, whh):
        # gates = (W_ih x + b)  [precomputed]  +  W_hh h
        gates = xp + jnp.dot(h, whh, preferred_element_type=jnp.float32)
        i_g = sigmoid(gates[:, 0 * H:1 * H])
        f_g = sigmoid(gates[:, 1 * H:2 * H])
        g_g = jnp.tanh(gates[:, 2 * H:3 * H])
        o_g = sigmoid(gates[:, 3 * H:4 * H])
        c_new = f_g * c + i_g * g_g
        h_new = o_g * jnp.tanh(c_new)
        return h_new, c_new

    def step(t, carry):
        h_f, c_f, h_b, c_b = carry
        # forward direction consumes x[t]
        rf = pl.multiple_of(t * Bp, Bp)
        h_f, c_f = cell(xproj_ref[pl.ds(rf, Bp), pl.ds(0, Gp)],
                        h_f, c_f, whh_f)
        out_ref[0, pl.ds(rf, Bp), :] = h_f
        # backward direction consumes x[T-1-t]
        rb = pl.multiple_of((T - 1 - t) * Bp, Bp)
        h_b, c_b = cell(xproj_ref[pl.ds(rb, Bp), pl.ds(Gp, Gp)],
                        h_b, c_b, whh_b)
        out_ref[1, pl.ds(rb, Bp), :] = h_b
        return (h_f, c_f, h_b, c_b)

    zeros = jnp.zeros((Bp, H), jnp.float32)
    lax.fori_loop(0, T, step, (zeros, zeros, zeros, zeros),
                  unroll=min(8, T))


def _bilstm_layer(x2d, T, Bp, H, w_in, b, whh_f, whh_b):
    """One bidirectional LSTM layer.  x2d: (T*Bp, Din) f32 -> (2, T*Bp, H)."""
    TB, Din = x2d.shape
    assert TB == T * Bp
    Hrec, Gp = whh_f.shape
    assert Hrec == H
    G2 = w_in.shape[1]
    assert G2 == 2 * Gp

    kernel = functools.partial(_bilstm_layer_kernel, T, Bp, H, Gp)

    flops = 2 * TB * Din * G2 + 4 * T * Bp * H * Gp      # proj + 2 dirs recur
    transcendentals = 2 * T * Bp * 5 * H                  # 4 gates + tanh(c)
    bytes_accessed = 4 * (x2d.size + w_in.size + b.size + whh_f.size
                          + whh_b.size + 2 * TB * H)

    # grid=(1,): double-buffered full-array blocks + the projection scratch.
    vmem_needed = 4 * (2 * (x2d.size + w_in.size + b.size + whh_f.size
                            + whh_b.size + 2 * TB * H) + TB * G2)
    vmem_limit = int(min(max(vmem_needed + (1 << 20), 4 << 20), 64 << 20))

    return pl.pallas_call(
        kernel,
        out_shape=jax.ShapeDtypeStruct((2, TB, H), jnp.float32),
        grid_spec=pltpu.PrefetchScalarGridSpec(
            num_scalar_prefetch=0,
            grid=(1,),
            in_specs=[
                pl.BlockSpec((TB, Din), lambda i: (0, 0)),
                pl.BlockSpec((Din, G2), lambda i: (0, 0)),
                pl.BlockSpec((1, G2), lambda i: (0, 0)),
                pl.BlockSpec((H, Gp), lambda i: (0, 0)),
                pl.BlockSpec((H, Gp), lambda i: (0, 0)),
            ],
            out_specs=pl.BlockSpec((2, TB, H), lambda i: (0, 0, 0)),
            scratch_shapes=[
                pltpu.VMEM((TB, G2), jnp.float32),   # hoisted input projection
            ],
        ),
        compiler_params=pltpu.CompilerParams(
            dimension_semantics=("arbitrary",),      # recurrence, keep serial
            vmem_limit_bytes=vmem_limit,
        ),
        cost_estimate=pl.CostEstimate(
            flops=int(flops),
            transcendentals=int(transcendentals),
            bytes_accessed=int(bytes_accessed)),
    )(x2d, w_in, b, whh_f, whh_b)


# ----------------------------------------------------------------------------
# Parameter construction: PyTorch-style init, laid out for the kernel.
# Gate axis padded only as a whole to Gp = round_up(4H, 128); padded weight
# columns / bias lanes are zero and are never read by the kernel.
# ----------------------------------------------------------------------------
def _build_layer(key, layer_in, H, Gp, k):
    G = 4 * H
    w_in = jnp.zeros((layer_in, 2 * Gp), jnp.float32)
    b = jnp.zeros((1, 2 * Gp), jnp.float32)
    whh = []
    for d in range(2):                       # 0 = forward, 1 = backward
        key, k1, k2, k3, k4 = jax.random.split(key, 5)
        w_ih = jax.random.uniform(k1, (G, layer_in), jnp.float32, -k, k)
        w_hh = jax.random.uniform(k2, (G, H), jnp.float32, -k, k)
        b_ih = jax.random.uniform(k3, (G,), jnp.float32, -k, k)
        b_hh = jax.random.uniform(k4, (G,), jnp.float32, -k, k)
        w_in = w_in.at[:, d * Gp:d * Gp + G].set(w_ih.T)
        b = b.at[0, d * Gp:d * Gp + G].set(b_ih + b_hh)
        whh.append(jnp.zeros((H, Gp), jnp.float32).at[:, 0:G].set(w_hh.T))
    return key, {"w_in": w_in, "b": b, "whh_f": whh[0], "whh_b": whh[1]}


def init_params(key, vocab_sizes, embed_dims, hidden_size, n_layers):
    H = hidden_size
    Gp = _round_up(4 * H, _LANE)
    D = sum(embed_dims)

    params = {"embeddings": [], "lstm": [], "H": H, "Gp": Gp, "D": D}
    for vs, ed in zip(vocab_sizes, embed_dims):
        key, sub = jax.random.split(key)
        # nn.Embedding default init: N(0, 1)
        params["embeddings"].append(jax.random.normal(sub, (vs, ed), jnp.float32))

    k = 1.0 / math.sqrt(H)
    for layer in range(n_layers):
        layer_in = D if layer == 0 else 2 * H
        key, p = _build_layer(key, layer_in, H, Gp, k)
        params["lstm"].append(p)
    return params


# ----------------------------------------------------------------------------
# Forward pass (mirrors BiLSTMEncoder.forward, eval mode, equal lengths).
# ----------------------------------------------------------------------------
def bilstm_encoder_forward(params, *input_ids):
    """input_ids: one (B, T) int32 array per embedding table."""
    assert len(input_ids) == len(params["embeddings"])
    B, T = input_ids[0].shape
    lengths = jnp.full((B,), T, dtype=jnp.int32)

    H, D = params["H"], params["D"]
    Bp = _round_up(max(B, _SUBLANE), _SUBLANE)

    # Embedding lookup + feature concat (plain-JAX glue; gather not kernelized).
    xs = [jnp.take(tbl, ids.reshape(-1), axis=0)
          for tbl, ids in zip(params["embeddings"], input_ids)]
    # reduce_embeddings is None; dropouts identity in eval mode.
    seq = jnp.concatenate(xs, axis=-1).reshape(B, T, D)        # (B, T, D)

    # time-major, batch padded to a sublane multiple, flattened to 2-D.
    x = jnp.transpose(seq, (1, 0, 2)).astype(jnp.float32)      # (T, B, D)
    x = jnp.pad(x, ((0, 0), (0, Bp - B), (0, 0)))              # (T, Bp, D)
    x2d = x.reshape(T * Bp, D)

    for layer in params["lstm"]:
        out = _bilstm_layer(x2d, T, Bp, H, layer["w_in"], layer["b"],
                            layer["whh_f"], layer["whh_b"])    # (2, T*Bp, H)
        # next-layer input = [fwd | bwd] features (PyTorch bidirectional order)
        x2d = jnp.concatenate([out[0], out[1]], axis=-1)       # (T*Bp, 2H)

    hs = x2d.reshape(T, Bp, 2 * H)[:, :B, :]                   # strip batch pad
    hs = jnp.transpose(hs, (1, 0, 2))                          # (B, T, 2H)
    return hs, lengths


if __name__ == "__main__":
    # Small configuration: two embedding tables of dim 16 -> lstm_in_size = 32,
    # lstm_hidden_size = 32, bidirectional -> output feature size 64.
    VOCAB_SIZES = (100, 50)
    EMBED_DIMS = (16, 16)
    HIDDEN = 32
    N_LAYERS = 2
    B, T = 2, 8

    key = jax.random.PRNGKey(0)
    key, pk, ik1, ik2 = jax.random.split(key, 4)
    params = init_params(pk, VOCAB_SIZES, EMBED_DIMS, HIDDEN, N_LAYERS)

    word_ids = jax.random.randint(ik1, (B, T), 0, VOCAB_SIZES[0], dtype=jnp.int32)
    tag_ids = jax.random.randint(ik2, (B, T), 0, VOCAB_SIZES[1], dtype=jnp.int32)

    # TODO(synk): unequal-length (pack_sequence) branch of the reference module
    # is not implemented; this covers the equal-length fast path only.
    fwd = jax.jit(functools.partial(bilstm_encoder_forward, params))
    hs, lengths = fwd(word_ids, tag_ids)
    jax.block_until_ready(hs)
    jax.block_until_ready(lengths)

    assert hs.shape == (B, T, 2 * HIDDEN), hs.shape
    assert lengths.shape == (B,), lengths.shape
    assert bool(jnp.all(jnp.isfinite(hs)))
    print("KERNEL_OK")
</pallas_src>

<mosaic_0001>
module attributes {stable_mosaic.version = 11 : i64} {
  func.func @_bilstm_layer_kernel(%arg0: i32, %arg1: memref<64x32xf32, #tpu.memory_space<vmem>>, %arg2: memref<32x256xf32, #tpu.memory_space<vmem>>, %arg3: memref<1x256xf32, #tpu.memory_space<vmem>>, %arg4: memref<32x128xf32, #tpu.memory_space<vmem>>, %arg5: memref<32x128xf32, #tpu.memory_space<vmem>>, %arg6: memref<2x64x32xf32, #tpu.memory_space<vmem>>, %arg7: memref<64x256xf32, #tpu.memory_space<vmem>>) attributes {dimension_semantics = [#tpu.dimension_semantics<arbitrary>], iteration_bounds = array<i64: 1>, scalar_prefetch = 0 : i64, scratch_operands = 1 : i64, tpu.core_type = #tpu.core_type<tc>, window_params = [{pipeline_mode = #tpu.pipeline_mode<synchronous>, transform_indices = @transform_0, window_bounds = array<i64: 64, 32>}, {pipeline_mode = #tpu.pipeline_mode<synchronous>, transform_indices = @transform_1, window_bounds = array<i64: 32, 256>}, {pipeline_mode = #tpu.pipeline_mode<synchronous>, transform_indices = @transform_2, window_bounds = array<i64: 1, 256>}, {pipeline_mode = #tpu.pipeline_mode<synchronous>, transform_indices = @transform_3, window_bounds = array<i64: 32, 128>}, {pipeline_mode = #tpu.pipeline_mode<synchronous>, transform_indices = @transform_4, window_bounds = array<i64: 32, 128>}, {pipeline_mode = #tpu.pipeline_mode<synchronous>, transform_indices = @transform_5, window_bounds = array<i64: 2, 64, 32>}]} {
    %c0 = arith.constant 0 : index
    %c0_0 = arith.constant 0 : index
    %0 = vector.load %arg1[%c0, %c0_0] : memref<64x32xf32, #tpu.memory_space<vmem>>, vector<64x32xf32>
    %c0_1 = arith.constant 0 : index
    %c0_2 = arith.constant 0 : index
    %1 = vector.load %arg2[%c0_1, %c0_2] : memref<32x256xf32, #tpu.memory_space<vmem>>, vector<32x256xf32>
    %cst = arith.constant dense<0.000000e+00> : vector<64x256xf32>
    %2 = tpu.matmul %0, %1, %cst {dimension_numbers = #tpu.dot_dimension_numbers<[1], [0], [0], [1], [0, 0, 1, 1], [], []>} : vector<64x32xf32>, vector<32x256xf32>, vector<64x256xf32> -> vector<64x256xf32>
    %c0_3 = arith.constant 0 : index
    %c0_4 = arith.constant 0 : index
    %3 = vector.load %arg3[%c0_3, %c0_4] : memref<1x256xf32, #tpu.memory_space<vmem>>, vector<1x256xf32>
    %4 = vector.broadcast %3 : vector<1x256xf32> to vector<64x256xf32>
    %5 = arith.addf %2, %4 : vector<64x256xf32>
    %c0_5 = arith.constant 0 : index
    %c0_6 = arith.constant 0 : index
    %6 = vector.load %arg7[%c0_5, %c0_6] : memref<64x256xf32, #tpu.memory_space<vmem>>, vector<64x256xf32>
    tpu.vector_store %arg7[%c0_5, %c0_6], %5 {strides = array<i32>} : memref<64x256xf32, #tpu.memory_space<vmem>>, vector<64x256xf32>,
    %c0_7 = arith.constant 0 : index
    %c0_8 = arith.constant 0 : index
    %7 = vector.load %arg4[%c0_7, %c0_8] : memref<32x128xf32, #tpu.memory_space<vmem>>, vector<32x128xf32>
    %c0_9 = arith.constant 0 : index
    %c0_10 = arith.constant 0 : index
    %8 = vector.load %arg5[%c0_9, %c0_10] : memref<32x128xf32, #tpu.memory_space<vmem>>, vector<32x128xf32>
    %cst_11 = arith.constant 0.000000e+00 : f32
    %9 = vector.broadcast %cst_11 : f32 to vector<8x32xf32>
    %c0_i32 = arith.constant 0 : i32
    %c8_i32 = arith.constant 8 : i32
    %10 = arith.muli %c0_i32, %c8_i32 : i32
    %11 = tpu.assume_multiple %10, 8 : i32
    %12 = arith.index_cast %11 : i32 to index
    %c0_12 = arith.constant 0 : index
    %13 = vector.load %arg7[%12, %c0_12] : memref<64x256xf32, #tpu.memory_space<vmem>>, vector<8x128xf32>
    %cst_13 = arith.constant dense<0.000000e+00> : vector<8x128xf32>
    %14 = tpu.matmul %9, %7, %cst_13 {dimension_numbers = #tpu.dot_dimension_numbers<[1], [0], [0], [1], [0, 0, 1, 1], [], []>} : vector<8x32xf32>, vector<32x128xf32>, vector<8x128xf32> -> vector<8x128xf32>
    %15 = arith.addf %13, %14 : vector<8x128xf32>
    %16 = vector.extract_strided_slice %15 {offsets = [0, 0], sizes = [8, 32], strides = [1, 1]} : vector<8x128xf32> to vector<8x32xf32>
    %cst_14 = arith.constant 5.000000e-01 : f32
    %17 = vector.broadcast %cst_14 : f32 to vector<8x32xf32>
    %18 = arith.mulf %17, %16 : vector<8x32xf32>
    %19 = math.tanh %18 : vector<8x32xf32>
    %cst_15 = arith.constant 5.000000e-01 : f32
    %20 = vector.broadcast %cst_15 : f32 to vector<8x32xf32>
    %21 = arith.mulf %20, %19 : vector<8x32xf32>
    %cst_16 = arith.constant 5.000000e-01 : f32
    %22 = vector.broadcast %cst_16 : f32 to vector<8x32xf32>
    %23 = arith.addf %21, %22 : vector<8x32xf32>
    %24 = vector.extract_strided_slice %15 {offsets = [0, 32], sizes = [8, 32], strides = [1, 1]} : vector<8x128xf32> to vector<8x32xf32>
    %cst_17 = arith.constant 5.000000e-01 : f32
    %25 = vector.broadcast %cst_17 : f32 to vector<8x32xf32>
    %26 = arith.mulf %25, %24 : vector<8x32xf32>
    %27 = math.tanh %26 : vector<8x32xf32>
    %cst_18 = arith.constant 5.000000e-01 : f32
    %28 = vector.broadcast %cst_18 : f32 to vector<8x32xf32>
    %29 = arith.mulf %28, %27 : vector<8x32xf32>
    %cst_19 = arith.constant 5.000000e-01 : f32
    %30 = vector.broadcast %cst_19 : f32 to vector<8x32xf32>
    %31 = arith.addf %29, %30 : vector<8x32xf32>
    %32 = vector.extract_strided_slice %15 {offsets = [0, 64], sizes = [8, 32], strides = [1, 1]} : vector<8x128xf32> to vector<8x32xf32>
    %33 = math.tanh %32 : vector<8x32xf32>
    %34 = vector.extract_strided_slice %15 {offsets = [0, 96], sizes = [8, 32], strides = [1, 1]} : vector<8x128xf32> to vector<8x32xf32>
    %cst_20 = arith.constant 5.000000e-01 : f32
    %35 = vector.broadcast %cst_20 : f32 to vector<8x32xf32>
    %36 = arith.mulf %35, %34 : vector<8x32xf32>
    %37 = math.tanh %36 : vector<8x32xf32>
    %cst_21 = arith.constant 5.000000e-01 : f32
    %38 = vector.broadcast %cst_21 : f32 to vector<8x32xf32>
    %39 = arith.mulf %38, %37 : vector<8x32xf32>
    %cst_22 = arith.constant 5.000000e-01 : f32
    %40 = vector.broadcast %cst_22 : f32 to vector<8x32xf32>
    %41 = arith.addf %39, %40 : vector<8x32xf32>
    %42 = arith.mulf %31, %9 : vector<8x32xf32>
    %43 = arith.mulf %23, %33 : vector<8x32xf32>
    %44 = arith.addf %42, %43 : vector<8x32xf32>
    %45 = math.tanh %44 : vector<8x32xf32>
    %46 = arith.mulf %41, %45 : vector<8x32xf32>
    %c0_23 = arith.constant 0 : index
    %47 = arith.index_cast %11 : i32 to index
    %c0_24 = arith.constant 0 : index
    %48 = vector.load %arg6[%c0_23, %47, %c0_24] : memref<2x64x32xf32, #tpu.memory_space<vmem>>, vector<1x8x32xf32>
    %49 = vector.shape_cast %48 : vector<1x8x32xf32> to vector<8x32xf32>
    %50 = vector.shape_cast %46 : vector<8x32xf32> to vector<1x8x32xf32>
    tpu.vector_store %arg6[%c0_23, %47, %c0_24], %50 {strides = array<i32>} : memref<2x64x32xf32, #tpu.memory_space<vmem>>, vector<1x8x32xf32>,
    %c7_i32 = arith.constant 7 : i32
    %51 = arith.subi %c7_i32, %c0_i32 : i32
    %c8_i32_25 = arith.constant 8 : i32
    %52 = arith.muli %51, %c8_i32_25 : i32
    %53 = tpu.assume_multiple %52, 8 : i32
    %54 = arith.index_cast %53 : i32 to index
    %c128 = arith.constant 128 : index
    %55 = vector.load %arg7[%54, %c128] : memref<64x256xf32, #tpu.memory_space<vmem>>, vector<8x128xf32>
    %cst_26 = arith.constant dense<0.000000e+00> : vector<8x128xf32>
    %56 = tpu.matmul %9, %8, %cst_26 {dimension_numbers = #tpu.dot_dimension_numbers<[1], [0], [0], [1], [0, 0, 1, 1], [], []>} : vector<8x32xf32>, vector<32x128xf32>, vector<8x128xf32> -> vector<8x128xf32>
    %57 = arith.addf %55, %56 : vector<8x128xf32>
    %58 = vector.extract_strided_slice %57 {offsets = [0, 0], sizes = [8, 32], strides = [1, 1]} : vector<8x128xf32> to vector<8x32xf32>
    %cst_27 = arith.constant 5.000000e-01 : f32
    %59 = vector.broadcast %cst_27 : f32 to vector<8x32xf32>
    %60 = arith.mulf %59, %58 : vector<8x32xf32>
    %61 = math.tanh %60 : vector<8x32xf32>
    %cst_28 = arith.constant 5.000000e-01 : f32
    %62 = vector.broadcast %cst_28 : f32 to vector<8x32xf32>
    %63 = arith.mulf %62, %61 : vector<8x32xf32>
    %cst_29 = arith.constant 5.000000e-01 : f32
    %64 = vector.broadcast %cst_29 : f32 to vector<8x32xf32>
    %65 = arith.addf %63, %64 : vector<8x32xf32>
    %66 = vector.extract_strided_slice %57 {offsets = [0, 32], sizes = [8, 32], strides = [1, 1]} : vector<8x128xf32> to vector<8x32xf32>
    %cst_30 = arith.constant 5.000000e-01 : f32
    %67 = vector.broadcast %cst_30 : f32 to vector<8x32xf32>
    %68 = arith.mulf %67, %66 : vector<8x32xf32>
    %69 = math.tanh %68 : vector<8x32xf32>
    %cst_31 = arith.constant 5.000000e-01 : f32
    %70 = vector.broadcast %cst_31 : f32 to vector<8x32xf32>
    %71 = arith.mulf %70, %69 : vector<8x32xf32>
    %cst_32 = arith.constant 5.000000e-01 : f32
    %72 = vector.broadcast %cst_32 : f32 to vector<8x32xf32>
    %73 = arith.addf %71, %72 : vector<8x32xf32>
    %74 = vector.extract_strided_slice %57 {offsets = [0, 64], sizes = [8, 32], strides = [1, 1]} : vector<8x128xf32> to vector<8x32xf32>
    %75 = math.tanh %74 : vector<8x32xf32>
    %76 = vector.extract_strided_slice %57 {offsets = [0, 96], sizes = [8, 32], strides = [1, 1]} : vector<8x128xf32> to vector<8x32xf32>
    %cst_33 = arith.constant 5.000000e-01 : f32
    %77 = vector.broadcast %cst_33 : f32 to vector<8x32xf32>
    %78 = arith.mulf %77, %76 : vector<8x32xf32>
    %79 = math.tanh %78 : vector<8x32xf32>
    %cst_34 = arith.constant 5.000000e-01 : f32
    %80 = vector.broadcast %cst_34 : f32 to vector<8x32xf32>
    %81 = arith.mulf %80, %79 : vector<8x32xf32>
    %cst_35 = arith.constant 5.000000e-01 : f32
    %82 = vector.broadcast %cst_35 : f32 to vector<8x32xf32>
    %83 = arith.addf %81, %82 : vector<8x32xf32>
    %84 = arith.mulf %73, %9 : vector<8x32xf32>
    %85 = arith.mulf %65, %75 : vector<8x32xf32>
    %86 = arith.addf %84, %85 : vector<8x32xf32>
    %87 = math.tanh %86 : vector<8x32xf32>
    %88 = arith.mulf %83, %87 : vector<8x32xf32>
    %c1 = arith.constant 1 : index
    %89 = arith.index_cast %53 : i32 to index
    %c0_36 = arith.constant 0 : index
    %90 = vector.load %arg6[%c1, %89, %c0_36] : memref<2x64x32xf32, #tpu.memory_space<vmem>>, vector<1x8x32xf32>
    %91 = vector.shape_cast %90 : vector<1x8x32xf32> to vector<8x32xf32>
    %92 = vector.shape_cast %88 : vector<8x32xf32> to vector<1x8x32xf32>
    tpu.vector_store %arg6[%c1, %89, %c0_36], %92 {strides = array<i32>} : memref<2x64x32xf32, #tpu.memory_space<vmem>>, vector<1x8x32xf32>,
    %c1_i32 = arith.constant 1 : i32
    %c8_i32_37 = arith.constant 8 : i32
    %93 = arith.muli %c1_i32, %c8_i32_37 : i32
    %94 = tpu.assume_multiple %93, 8 : i32
    %95 = arith.index_cast %94 : i32 to index
    %c0_38 = arith.constant 0 : index
    %96 = vector.load %arg7[%95, %c0_38] : memref<64x256xf32, #tpu.memory_space<vmem>>, vector<8x128xf32>
    %cst_39 = arith.constant dense<0.000000e+00> : vector<8x128xf32>
    %97 = tpu.matmul %46, %7, %cst_39 {dimension_numbers = #tpu.dot_dimension_numbers<[1], [0], [0], [1], [0, 0, 1, 1], [], []>} : vector<8x32xf32>, vector<32x128xf32>, vector<8x128xf32> -> vector<8x128xf32>
    %98 = arith.addf %96, %97 : vector<8x128xf32>
    %99 = vector.extract_strided_slice %98 {offsets = [0, 0], sizes = [8, 32], strides = [1, 1]} : vector<8x128xf32> to vector<8x32xf32>
    %cst_40 = arith.constant 5.000000e-01 : f32
    %100 = vector.broadcast %cst_40 : f32 to vector<8x32xf32>
    %101 = arith.mulf %100, %99 : vector<8x32xf32>
    %102 = math.tanh %101 : vector<8x32xf32>
    %cst_41 = arith.constant 5.000000e-01 : f32
    %103 = vector.broadcast %cst_41 : f32 to vector<8x32xf32>
    %104 = arith.mulf %103, %102 : vector<8x32xf32>
    %cst_42 = arith.constant 5.000000e-01 : f32
    %105 = vector.broadcast %cst_42 : f32 to vector<8x32xf32>
    %106 = arith.addf %104, %105 : vector<8x32xf32>
    %107 = vector.extract_strided_slice %98 {offsets = [0, 32], sizes = [8, 32], strides = [1, 1]} : vector<8x128xf32> to vector<8x32xf32>
    %cst_43 = arith.constant 5.000000e-01 : f32
    %108 = vector.broadcast %cst_43 : f32 to vector<8x32xf32>
    %109 = arith.mulf %108, %107 : vector<8x32xf32>
    %110 = math.tanh %109 : vector<8x32xf32>
    %cst_44 = arith.constant 5.000000e-01 : f32
    %111 = vector.broadcast %cst_44 : f32 to vector<8x32xf32>
    %112 = arith.mulf %111, %110 : vector<8x32xf32>
    %cst_45 = arith.constant 5.000000e-01 : f32
    %113 = vector.broadcast %cst_45 : f32 to vector<8x32xf32>
    %114 = arith.addf %112, %113 : vector<8x32xf32>
    %115 = vector.extract_strided_slice %98 {offsets = [0, 64], sizes = [8, 32], strides = [1, 1]} : vector<8x128xf32> to vector<8x32xf32>
    %116 = math.tanh %115 : vector<8x32xf32>
    %117 = vector.extract_strided_slice %98 {offsets = [0, 96], sizes = [8, 32], strides = [1, 1]} : vector<8x128xf32> to vector<8x32xf32>
    %cst_46 = arith.constant 5.000000e-01 : f32
    %118 = vector.broadcast %cst_46 : f32 to vector<8x32xf32>
    %119 = arith.mulf %118, %117 : vector<8x32xf32>
    %120 = math.tanh %119 : vector<8x32xf32>
    %cst_47 = arith.constant 5.000000e-01 : f32
    %121 = vector.broadcast %cst_47 : f32 to vector<8x32xf32>
    %122 = arith.mulf %121, %120 : vector<8x32xf32>
    %cst_48 = arith.constant 5.000000e-01 : f32
    %123 = vector.broadcast %cst_48 : f32 to vector<8x32xf32>
    %124 = arith.addf %122, %123 : vector<8x32xf32>
    %125 = arith.mulf %114, %44 : vector<8x32xf32>
    %126 = arith.mulf %106, %116 : vector<8x32xf32>
    %127 = arith.addf %125, %126 : vector<8x32xf32>
    %128 = math.tanh %127 : vector<8x32xf32>
    %129 = arith.mulf %124, %128 : vector<8x32xf32>
    %c0_49 = arith.constant 0 : index
    %130 = arith.index_cast %94 : i32 to index
    %c0_50 = arith.constant 0 : index
    %131 = vector.load %arg6[%c0_49, %130, %c0_50] : memref<2x64x32xf32, #tpu.memory_space<vmem>>, vector<1x8x32xf32>
    %132 = vector.shape_cast %131 : vector<1x8x32xf32> to vector<8x32xf32>
    %133 = vector.shape_cast %129 : vector<8x32xf32> to vector<1x8x32xf32>
    tpu.vector_store %arg6[%c0_49, %130, %c0_50], %133 {strides = array<i32>} : memref<2x64x32xf32, #tpu.memory_space<vmem>>, vector<1x8x32xf32>,
    %c7_i32_51 = arith.constant 7 : i32
    %134 = arith.subi %c7_i32_51, %c1_i32 : i32
    %c8_i32_52 = arith.constant 8 : i32
    %135 = arith.muli %134, %c8_i32_52 : i32
    %136 = tpu.assume_multiple %135, 8 : i32
    %137 = arith.index_cast %136 : i32 to index
    %c128_53 = arith.constant 128 : index
    %138 = vector.load %arg7[%137, %c128_53] : memref<64x256xf32, #tpu.memory_space<vmem>>, vector<8x128xf32>
    %cst_54 = arith.constant dense<0.000000e+00> : vector<8x128xf32>
    %139 = tpu.matmul %88, %8, %cst_54 {dimension_numbers = #tpu.dot_dimension_numbers<[1], [0], [0], [1], [0, 0, 1, 1], [], []>} : vector<8x32xf32>, vector<32x128xf32>, vector<8x128xf32> -> vector<8x128xf32>
    %140 = arith.addf %138, %139 : vector<8x128xf32>
    %141 = vector.extract_strided_slice %140 {offsets = [0, 0], sizes = [8, 32], strides = [1, 1]} : vector<8x128xf32> to vector<8x32xf32>
    %cst_55 = arith.constant 5.000000e-01 : f32
    %142 = vector.broadcast %cst_55 : f32 to vector<8x32xf32>
    %143 = arith.mulf %142, %141 : vector<8x32xf32>
    %144 = math.tanh %143 : vector<8x32xf32>
    %cst_56 = arith.constant 5.000000e-01 : f32
    %145 = vector.broadcast %cst_56 : f32 to vector<8x32xf32>
    %146 = arith.mulf %145, %144 : vector<8x32xf32>
    %cst_57 = arith.constant 5.000000e-01 : f32
    %147 = vector.broadcast %cst_57 : f32 to vector<8x32xf32>
    %148 = arith.addf %146, %147 : vector<8x32xf32>
    %149 = vector.extract_strided_slice %140 {offsets = [0, 32], sizes = [8, 32], strides = [1, 1]} : vector<8x128xf32> to vector<8x32xf32>
    %cst_58 = arith.constant 5.000000e-01 : f32
    %150 = vector.broadcast %cst_58 : f32 to vector<8x32xf32>
    %151 = arith.mulf %150, %149 : vector<8x32xf32>
    %152 = math.tanh %151 : vector<8x32xf32>
    %cst_59 = arith.constant 5.000000e-01 : f32
    %153 = vector.broadcast %cst_59 : f32 to vector<8x32xf32>
    %154 = arith.mulf %153, %152 : vector<8x32xf32>
    %cst_60 = arith.constant 5.000000e-01 : f32
    %155 = vector.broadcast %cst_60 : f32 to vector<8x32xf32>
    %156 = arith.addf %154, %155 : vector<8x32xf32>
    %157 = vector.extract_strided_slice %140 {offsets = [0, 64], sizes = [8, 32], strides = [1, 1]} : vector<8x128xf32> to vector<8x32xf32>
    %158 = math.tanh %157 : vector<8x32xf32>
    %159 = vector.extract_strided_slice %140 {offsets = [0, 96], sizes = [8, 32], strides = [1, 1]} : vector<8x128xf32> to vector<8x32xf32>
    %cst_61 = arith.constant 5.000000e-01 : f32
    %160 = vector.broadcast %cst_61 : f32 to vector<8x32xf32>
    %161 = arith.mulf %160, %159 : vector<8x32xf32>
    %162 = math.tanh %161 : vector<8x32xf32>
    %cst_62 = arith.constant 5.000000e-01 : f32
    %163 = vector.broadcast %cst_62 : f32 to vector<8x32xf32>
    %164 = arith.mulf %163, %162 : vector<8x32xf32>
    %cst_63 = arith.constant 5.000000e-01 : f32
    %165 = vector.broadcast %cst_63 : f32 to vector<8x32xf32>
    %166 = arith.addf %164, %165 : vector<8x32xf32>
    %167 = arith.mulf %156, %86 : vector<8x32xf32>
    %168 = arith.mulf %148, %158 : vector<8x32xf32>
    %169 = arith.addf %167, %168 : vector<8x32xf32>
    %170 = math.tanh %169 : vector<8x32xf32>
    %171 = arith.mulf %166, %170 : vector<8x32xf32>
    %c1_64 = arith.constant 1 : index
    %172 = arith.index_cast %136 : i32 to index
    %c0_65 = arith.constant 0 : index
    %173 = vector.load %arg6[%c1_64, %172, %c0_65] : memref<2x64x32xf32, #tpu.memory_space<vmem>>, vector<1x8x32xf32>
    %174 = vector.shape_cast %173 : vector<1x8x32xf32> to vector<8x32xf32>
    %175 = vector.shape_cast %171 : vector<8x32xf32> to vector<1x8x32xf32>
    tpu.vector_store %arg6[%c1_64, %172, %c0_65], %175 {strides = array<i32>} : memref<2x64x32xf32, #tpu.memory_space<vmem>>, vector<1x8x32xf32>,
    %c2_i32 = arith.constant 2 : i32
    %c8_i32_66 = arith.constant 8 : i32
    %176 = arith.muli %c2_i32, %c8_i32_66 : i32
    %177 = tpu.assume_multiple %176, 8 : i32
    %178 = arith.index_cast %177 : i32 to index
    %c0_67 = arith.constant 0 : index
    %179 = vector.load %arg7[%178, %c0_67] : memref<64x256xf32, #tpu.memory_space<vmem>>, vector<8x128xf32>
    %cst_68 = arith.constant dense<0.000000e+00> : vector<8x128xf32>
    %180 = tpu.matmul %129, %7, %cst_68 {dimension_numbers = #tpu.dot_dimension_numbers<[1], [0], [0], [1], [0, 0, 1, 1], [], []>} : vector<8x32xf32>, vector<32x128xf32>, vector<8x128xf32> -> vector<8x128xf32>
    %181 = arith.addf %179, %180 : vector<8x128xf32>
    %182 = vector.extract_strided_slice %181 {offsets = [0, 0], sizes = [8, 32], strides = [1, 1]} : vector<8x128xf32> to vector<8x32xf32>
    %cst_69 = arith.constant 5.000000e-01 : f32
    %183 = vector.broadcast %cst_69 : f32 to vector<8x32xf32>
    %184 = arith.mulf %183, %182 : vector<8x32xf32>
    %185 = math.tanh %184 : vector<8x32xf32>
    %cst_70 = arith.constant 5.000000e-01 : f32
    %186 = vector.broadcast %cst_70 : f32 to vector<8x32xf32>
    %187 = arith.mulf %186, %185 : vector<8x32xf32>
    %cst_71 = arith.constant 5.000000e-01 : f32
    %188 = vector.broadcast %cst_71 : f32 to vector<8x32xf32>
    %189 = arith.addf %187, %188 : vector<8x32xf32>
    %190 = vector.extract_strided_slice %181 {offsets = [0, 32], sizes = [8, 32], strides = [1, 1]} : vector<8x128xf32> to vector<8x32xf32>
    %cst_72 = arith.constant 5.000000e-01 : f32
    %191 = vector.broadcast %cst_72 : f32 to vector<8x32xf32>
    %192 = arith.mulf %191, %190 : vector<8x32xf32>
    %193 = math.tanh %192 : vector<8x32xf32>
    %cst_73 = arith.constant 5.000000e-01 : f32
    %194 = vector.broadcast %cst_73 : f32 to vector<8x32xf32>
    %195 = arith.mulf %194, %193 : vector<8x32xf32>
    %cst_74 = arith.constant 5.000000e-01 : f32
    %196 = vector.broadcast %cst_74 : f32 to vector<8x32xf32>
    %197 = arith.addf %195, %196 : vector<8x32xf32>
    %198 = vector.extract_strided_slice %181 {offsets = [0, 64], sizes = [8, 32], strides = [1, 1]} : vector<8x128xf32> to vector<8x32xf32>
    %199 = math.tanh %198 : vector<8x32xf32>
    %200 = vector.extract_strided_slice %181 {offsets = [0, 96], sizes = [8, 32], strides = [1, 1]} : vector<8x128xf32> to vector<8x32xf32>
    %cst_75 = arith.constant 5.000000e-01 : f32
    %201 = vector.broadcast %cst_75 : f32 to vector<8x32xf32>
    %202 = arith.mulf %201, %200 : vector<8x32xf32>
    %203 = math.tanh %202 : vector<8x32xf32>
    %cst_76 = arith.constant 5.000000e-01 : f32
    %204 = vector.broadcast %cst_76 : f32 to vector<8x32xf32>
    %205 = arith.mulf %204, %203 : vector<8x32xf32>
    %cst_77 = arith.constant 5.000000e-01 : f32
    %206 = vector.broadcast %cst_77 : f32 to vector<8x32xf32>
    %207 = arith.addf %205, %206 : vector<8x32xf32>
    %208 = arith.mulf %197, %127 : vector<8x32xf32>
    %209 = arith.mulf %189, %199 : vector<8x32xf32>
    %210 = arith.addf %208, %209 : vector<8x32xf32>
    %211 = math.tanh %210 : vector<8x32xf32>
    %212 = arith.mulf %207, %211 : vector<8x32xf32>
    %c0_78 = arith.constant 0 : index
    %213 = arith.index_cast %177 : i32 to index
    %c0_79 = arith.constant 0 : index
    %214 = vector.load %arg6[%c0_78, %213, %c0_79] : memref<2x64x32xf32, #tpu.memory_space<vmem>>, vector<1x8x32xf32>
    %215 = vector.shape_cast %214 : vector<1x8x32xf32> to vector<8x32xf32>
    %216 = vector.shape_cast %212 : vector<8x32xf32> to vector<1x8x32xf32>
    tpu.vector_store %arg6[%c0_78, %213, %c0_79], %216 {strides = array<i32>} : memref<2x64x32xf32, #tpu.memory_space<vmem>>, vector<1x8x32xf32>,
    %c7_i32_80 = arith.constant 7 : i32
    %217 = arith.subi %c7_i32_80, %c2_i32 : i32
    %c8_i32_81 = arith.constant 8 : i32
    %218 = arith.muli %217, %c8_i32_81 : i32
    %219 = tpu.assume_multiple %218, 8 : i32
    %220 = arith.index_cast %219 : i32 to index
    %c128_82 = arith.constant 128 : index
    %221 = vector.load %arg7[%220, %c128_82] : memref<64x256xf32, #tpu.memory_space<vmem>>, vector<8x128xf32>
    %cst_83 = arith.constant dense<0.000000e+00> : vector<8x128xf32>
    %222 = tpu.matmul %171, %8, %cst_83 {dimension_numbers = #tpu.dot_dimension_numbers<[1], [0], [0], [1], [0, 0, 1, 1], [], []>} : vector<8x32xf32>, vector<32x128xf32>, vector<8x128xf32> -> vector<8x128xf32>
    %223 = arith.addf %221, %222 : vector<8x128xf32>
    %224 = vector.extract_strided_slice %223 {offsets = [0, 0], sizes = [8, 32], strides = [1, 1]} : vector<8x128xf32> to vector<8x32xf32>
    %cst_84 = arith.constant 5.000000e-01 : f32
    %225 = vector.broadcast %cst_84 : f32 to vector<8x32xf32>
    %226 = arith.mulf %225, %224 : vector<8x32xf32>
    %227 = math.tanh %226 : vector<8x32xf32>
    %cst_85 = arith.constant 5.000000e-01 : f32
    %228 = vector.broadcast %cst_85 : f32 to vector<8x32xf32>
    %229 = arith.mulf %228, %227 : vector<8x32xf32>
    %cst_86 = arith.constant 5.000000e-01 : f32
    %230 = vector.broadcast %cst_86 : f32 to vector<8x32xf32>
    %231 = arith.addf %229, %230 : vector<8x32xf32>
    %232 = vector.extract_strided_slice %223 {offsets = [0, 32], sizes = [8, 32], strides = [1, 1]} : vector<8x128xf32> to vector<8x32xf32>
    %cst_87 = arith.constant 5.000000e-01 : f32
    %233 = vector.broadcast %cst_87 : f32 to vector<8x32xf32>
    %234 = arith.mulf %233, %232 : vector<8x32xf32>
    %235 = math.tanh %234 : vector<8x32xf32>
    %cst_88 = arith.constant 5.000000e-01 : f32
    %236 = vector.broadcast %cst_88 : f32 to vector<8x32xf32>
    %237 = arith.mulf %236, %235 : vector<8x32xf32>
    %cst_89 = arith.constant 5.000000e-01 : f32
    %238 = vector.broadcast %cst_89 : f32 to vector<8x32xf32>
    %239 = arith.addf %237, %238 : vector<8x32xf32>
    %240 = vector.extract_strided_slice %223 {offsets = [0, 64], sizes = [8, 32], strides = [1, 1]} : vector<8x128xf32> to vector<8x32xf32>
    %241 = math.tanh %240 : vector<8x32xf32>
    %242 = vector.extract_strided_slice %223 {offsets = [0, 96], sizes = [8, 32], strides = [1, 1]} : vector<8x128xf32> to vector<8x32xf32>
    %cst_90 = arith.constant 5.000000e-01 : f32
    %243 = vector.broadcast %cst_90 : f32 to vector<8x32xf32>
    %244 = arith.mulf %243, %242 : vector<8x32xf32>
    %245 = math.tanh %244 : vector<8x32xf32>
    %cst_91 = arith.constant 5.000000e-01 : f32
    %246 = vector.broadcast %cst_91 : f32 to vector<8x32xf32>
    %247 = arith.mulf %246, %245 : vector<8x32xf32>
    %cst_92 = arith.constant 5.000000e-01 : f32
    %248 = vector.broadcast %cst_92 : f32 to vector<8x32xf32>
    %249 = arith.addf %247, %248 : vector<8x32xf32>
    %250 = arith.mulf %239, %169 : vector<8x32xf32>
    %251 = arith.mulf %231, %241 : vector<8x32xf32>
    %252 = arith.addf %250, %251 : vector<8x32xf32>
    %253 = math.tanh %252 : vector<8x32xf32>
    %254 = arith.mulf %249, %253 : vector<8x32xf32>
    %c1_93 = arith.constant 1 : index
    %255 = arith.index_cast %219 : i32 to index
    %c0_94 = arith.constant 0 : index
    %256 = vector.load %arg6[%c1_93, %255, %c0_94] : memref<2x64x32xf32, #tpu.memory_space<vmem>>, vector<1x8x32xf32>
    %257 = vector.shape_cast %256 : vector<1x8x32xf32> to vector<8x32xf32>
    %258 = vector.shape_cast %254 : vector<8x32xf32> to vector<1x8x32xf32>
    tpu.vector_store %arg6[%c1_93, %255, %c0_94], %258 {strides = array<i32>} : memref<2x64x32xf32, #tpu.memory_space<vmem>>, vector<1x8x32xf32>,
    %c3_i32 = arith.constant 3 : i32
    %c8_i32_95 = arith.constant 8 : i32
    %259 = arith.muli %c3_i32, %c8_i32_95 : i32
    %260 = tpu.assume_multiple %259, 8 : i32
    %261 = arith.index_cast %260 : i32 to index
    %c0_96 = arith.constant 0 : index
    %262 = vector.load %arg7[%261, %c0_96] : memref<64x256xf32, #tpu.memory_space<vmem>>, vector<8x128xf32>
    %cst_97 = arith.constant dense<0.000000e+00> : vector<8x128xf32>
    %263 = tpu.matmul %212, %7, %cst_97 {dimension_numbers = #tpu.dot_dimension_numbers<[1], [0], [0], [1], [0, 0, 1, 1], [], []>} : vector<8x32xf32>, vector<32x128xf32>, vector<8x128xf32> -> vector<8x128xf32>
    %264 = arith.addf %262, %263 : vector<8x128xf32>
    %265 = vector.extract_strided_slice %264 {offsets = [0, 0], sizes = [8, 32], strides = [1, 1]} : vector<8x128xf32> to vector<8x32xf32>
    %cst_98 = arith.constant 5.000000e-01 : f32
    %266 = vector.broadcast %cst_98 : f32 to vector<8x32xf32>
    %267 = arith.mulf %266, %265 : vector<8x32xf32>
    %268 = math.tanh %267 : vector<8x32xf32>
    %cst_99 = arith.constant 5.000000e-01 : f32
    %269 = vector.broadcast %cst_99 : f32 to vector<8x32xf32>
    %270 = arith.mulf %269, %268 : vector<8x32xf32>
    %cst_100 = arith.constant 5.000000e-01 : f32
    %271 = vector.broadcast %cst_100 : f32 to vector<8x32xf32>
    %272 = arith.addf %270, %271 : vector<8x32xf32>
    %273 = vector.extract_strided_slice %264 {offsets = [0, 32], sizes = [8, 32], strides = [1, 1]} : vector<8x128xf32> to vector<8x32xf32>
    %cst_101 = arith.constant 5.000000e-01 : f32
    %274 = vector.broadcast %cst_101 : f32 to vector<8x32xf32>
    %275 = arith.mulf %274, %273 : vector<8x32xf32>
    %276 = math.tanh %275 : vector<8x32xf32>
    %cst_102 = arith.constant 5.000000e-01 : f32
    %277 = vector.broadcast %cst_102 : f32 to vector<8x32xf32>
    %278 = arith.mulf %277, %276 : vector<8x32xf32>
    %cst_103 = arith.constant 5.000000e-01 : f32
    %279 = vector.broadcast %cst_103 : f32 to vector<8x32xf32>
    %280 = arith.addf %278, %279 : vector<8x32xf32>
    %281 = vector.extract_strided_slice %264 {offsets = [0, 64], sizes = [8, 32], strides = [1, 1]} : vector<8x128xf32> to vector<8x32xf32>
    %282 = math.tanh %281 : vector<8x32xf32>
    %283 = vector.extract_strided_slice %264 {offsets = [0, 96], sizes = [8, 32], strides = [1, 1]} : vector<8x128xf32> to vector<8x32xf32>
    %cst_104 = arith.constant 5.000000e-01 : f32
    %284 = vector.broadcast %cst_104 : f32 to vector<8x32xf32>
    %285 = arith.mulf %284, %283 : vector<8x32xf32>
    %286 = math.tanh %285 : vector<8x32xf32>
    %cst_105 = arith.constant 5.000000e-01 : f32
    %287 = vector.broadcast %cst_105 : f32 to vector<8x32xf32>
    %288 = arith.mulf %287, %286 : vector<8x32xf32>
    %cst_106 = arith.constant 5.000000e-01 : f32
    %289 = vector.broadcast %cst_106 : f32 to vector<8x32xf32>
    %290 = arith.addf %288, %289 : vector<8x32xf32>
    %291 = arith.mulf %280, %210 : vector<8x32xf32>
    %292 = arith.mulf %272, %282 : vector<8x32xf32>
    %293 = arith.addf %291, %292 : vector<8x32xf32>
    %294 = math.tanh %293 : vector<8x32xf32>
    %295 = arith.mulf %290, %294 : vector<8x32xf32>
    %c0_107 = arith.constant 0 : index
    %296 = arith.index_cast %260 : i32 to index
    %c0_108 = arith.constant 0 : index
    %297 = vector.load %arg6[%c0_107, %296, %c0_108] : memref<2x64x32xf32, #tpu.memory_space<vmem>>, vector<1x8x32xf32>
    %298 = vector.shape_cast %297 : vector<1x8x32xf32> to vector<8x32xf32>
    %299 = vector.shape_cast %295 : vector<8x32xf32> to vector<1x8x32xf32>
    tpu.vector_store %arg6[%c0_107, %296, %c0_108], %299 {strides = array<i32>} : memref<2x64x32xf32, #tpu.memory_space<vmem>>, vector<1x8x32xf32>,
    %c7_i32_109 = arith.constant 7 : i32
    %300 = arith.subi %c7_i32_109, %c3_i32 : i32
    %c8_i32_110 = arith.constant 8 : i32
    %301 = arith.muli %300, %c8_i32_110 : i32
    %302 = tpu.assume_multiple %301, 8 : i32
    %303 = arith.index_cast %302 : i32 to index
    %c128_111 = arith.constant 128 : index
    %304 = vector.load %arg7[%303, %c128_111] : memref<64x256xf32, #tpu.memory_space<vmem>>, vector<8x128xf32>
    %cst_112 = arith.constant dense<0.000000e+00> : vector<8x128xf32>
    %305 = tpu.matmul %254, %8, %cst_112 {dimension_numbers = #tpu.dot_dimension_numbers<[1], [0], [0], [1], [0, 0, 1, 1], [], []>} : vector<8x32xf32>, vector<32x128xf32>, vector<8x128xf32> -> vector<8x128xf32>
    %306 = arith.addf %304, %305 : vector<8x128xf32>
    %307 = vector.extract_strided_slice %306 {offsets = [0, 0], sizes = [8, 32], strides = [1, 1]} : vector<8x128xf32> to vector<8x32xf32>
    %cst_113 = arith.constant 5.000000e-01 : f32
    %308 = vector.broadcast %cst_113 : f32 to vector<8x32xf32>
    %309 = arith.mulf %308, %307 : vector<8x32xf32>
    %310 = math.tanh %309 : vector<8x32xf32>
    %cst_114 = arith.constant 5.000000e-01 : f32
    %311 = vector.broadcast %cst_114 : f32 to vector<8x32xf32>
    %312 = arith.mulf %311, %310 : vector<8x32xf32>
    %cst_115 = arith.constant 5.000000e-01 : f32
    %313 = vector.broadcast %cst_115 : f32 to vector<8x32xf32>
    %314 = arith.addf %312, %313 : vector<8x32xf32>
    %315 = vector.extract_strided_slice %306 {offsets = [0, 32], sizes = [8, 32], strides = [1, 1]} : vector<8x128xf32> to vector<8x32xf32>
    %cst_116 = arith.constant 5.000000e-01 : f32
    %316 = vector.broadcast %cst_116 : f32 to vector<8x32xf32>
    %317 = arith.mulf %316, %315 : vector<8x32xf32>
    %318 = math.tanh %317 : vector<8x32xf32>
    %cst_117 = arith.constant 5.000000e-01 : f32
    %319 = vector.broadcast %cst_117 : f32 to vector<8x32xf32>
    %320 = arith.mulf %319, %318 : vector<8x32xf32>
    %cst_118 = arith.constant 5.000000e-01 : f32
    %321 = vector.broadcast %cst_118 : f32 to vector<8x32xf32>
    %322 = arith.addf %320, %321 : vector<8x32xf32>
    %323 = vector.extract_strided_slice %306 {offsets = [0, 64], sizes = [8, 32], strides = [1, 1]} : vector<8x128xf32> to vector<8x32xf32>
    %324 = math.tanh %323 : vector<8x32xf32>
    %325 = vector.extract_strided_slice %306 {offsets = [0, 96], sizes = [8, 32], strides = [1, 1]} : vector<8x128xf32> to vector<8x32xf32>
    %cst_119 = arith.constant 5.000000e-01 : f32
    %326 = vector.broadcast %cst_119 : f32 to vector<8x32xf32>
    %327 = arith.mulf %326, %325 : vector<8x32xf32>
    %328 = math.tanh %327 : vector<8x32xf32>
    %cst_120 = arith.constant 5.000000e-01 : f32
    %329 = vector.broadcast %cst_120 : f32 to vector<8x32xf32>
    %330 = arith.mulf %329, %328 : vector<8x32xf32>
    %cst_121 = arith.constant 5.000000e-01 : f32
    %331 = vector.broadcast %cst_121 : f32 to vector<8x32xf32>
    %332 = arith.addf %330, %331 : vector<8x32xf32>
    %333 = arith.mulf %322, %252 : vector<8x32xf32>
    %334 = arith.mulf %314, %324 : vector<8x32xf32>
    %335 = arith.addf %333, %334 : vector<8x32xf32>
    %336 = math.tanh %335 : vector<8x32xf32>
    %337 = arith.mulf %332, %336 : vector<8x32xf32>
    %c1_122 = arith.constant 1 : index
    %338 = arith.index_cast %302 : i32 to index
    %c0_123 = arith.constant 0 : index
    %339 = vector.load %arg6[%c1_122, %338, %c0_123] : memref<2x64x32xf32, #tpu.memory_space<vmem>>, vector<1x8x32xf32>
    %340 = vector.shape_cast %339 : vector<1x8x32xf32> to vector<8x32xf32>
    %341 = vector.shape_cast %337 : vector<8x32xf32> to vector<1x8x32xf32>
    tpu.vector_store %arg6[%c1_122, %338, %c0_123], %341 {strides = array<i32>} : memref<2x64x32xf32, #tpu.memory_space<vmem>>, vector<1x8x32xf32>,
    %c4_i32 = arith.constant 4 : i32
    %c8_i32_124 = arith.constant 8 : i32
    %342 = arith.muli %c4_i32, %c8_i32_124 : i32
    %343 = tpu.assume_multiple %342, 8 : i32
    %344 = arith.index_cast %343 : i32 to index
    %c0_125 = arith.constant 0 : index
    %345 = vector.load %arg7[%344, %c0_125] : memref<64x256xf32, #tpu.memory_space<vmem>>, vector<8x128xf32>
    %cst_126 = arith.constant dense<0.000000e+00> : vector<8x128xf32>
    %346 = tpu.matmul %295, %7, %cst_126 {dimension_numbers = #tpu.dot_dimension_numbers<[1], [0], [0], [1], [0, 0, 1, 1], [], []>} : vector<8x32xf32>, vector<32x128xf32>, vector<8x128xf32> -> vector<8x128xf32>
    %347 = arith.addf %345, %346 : vector<8x128xf32>
    %348 = vector.extract_strided_slice %347 {offsets = [0, 0], sizes = [8, 32], strides = [1, 1]} : vector<8x128xf32> to vector<8x32xf32>
    %cst_127 = arith.constant 5.000000e-01 : f32
    %349 = vector.broadcast %cst_127 : f32 to vector<8x32xf32>
    %350 = arith.mulf %349, %348 : vector<8x32xf32>
    %351 = math.tanh %350 : vector<8x32xf32>
    %cst_128 = arith.constant 5.000000e-01 : f32
    %352 = vector.broadcast %cst_128 : f32 to vector<8x32xf32>
    %353 = arith.mulf %352, %351 : vector<8x32xf32>
    %cst_129 = arith.constant 5.000000e-01 : f32
    %354 = vector.broadcast %cst_129 : f32 to vector<8x32xf32>
    %355 = arith.addf %353, %354 : vector<8x32xf32>
    %356 = vector.extract_strided_slice %347 {offsets = [0, 32], sizes = [8, 32], strides = [1, 1]} : vector<8x128xf32> to vector<8x32xf32>
    %cst_130 = arith.constant 5.000000e-01 : f32
    %357 = vector.broadcast %cst_130 : f32 to vector<8x32xf32>
    %358 = arith.mulf %357, %356 : vector<8x32xf32>
    %359 = math.tanh %358 : vector<8x32xf32>
    %cst_131 = arith.constant 5.000000e-01 : f32
    %360 = vector.broadcast %cst_131 : f32 to vector<8x32xf32>
    %361 = arith.mulf %360, %359 : vector<8x32xf32>
    %cst_132 = arith.constant 5.000000e-01 : f32
    %362 = vector.broadcast %cst_132 : f32 to vector<8x32xf32>
    %363 = arith.addf %361, %362 : vector<8x32xf32>
    %364 = vector.extract_strided_slice %347 {offsets = [0, 64], sizes = [8, 32], strides = [1, 1]} : vector<8x128xf32> to vector<8x32xf32>
    %365 = math.tanh %364 : vector<8x32xf32>
    %366 = vector.extract_strided_slice %347 {offsets = [0, 96], sizes = [8, 32], strides = [1, 1]} : vector<8x128xf32> to vector<8x32xf32>
    %cst_133 = arith.constant 5.000000e-01 : f32
    %367 = vector.broadcast %cst_133 : f32 to vector<8x32xf32>
    %368 = arith.mulf %367, %366 : vector<8x32xf32>
    %369 = math.tanh %368 : vector<8x32xf32>
    %cst_134 = arith.constant 5.000000e-01 : f32
    %370 = vector.broadcast %cst_134 : f32 to vector<8x32xf32>
    %371 = arith.mulf %370, %369 : vector<8x32xf32>
    %cst_135 = arith.constant 5.000000e-01 : f32
    %372 = vector.broadcast %cst_135 : f32 to vector<8x32xf32>
    %373 = arith.addf %371, %372 : vector<8x32xf32>
    %374 = arith.mulf %363, %293 : vector<8x32xf32>
    %375 = arith.mulf %355, %365 : vector<8x32xf32>
    %376 = arith.addf %374, %375 : vector<8x32xf32>
    %377 = math.tanh %376 : vector<8x32xf32>
    %378 = arith.mulf %373, %377 : vector<8x32xf32>
    %c0_136 = arith.constant 0 : index
    %379 = arith.index_cast %343 : i32 to index
    %c0_137 = arith.constant 0 : index
    %380 = vector.load %arg6[%c0_136, %379, %c0_137] : memref<2x64x32xf32, #tpu.memory_space<vmem>>, vector<1x8x32xf32>
    %381 = vector.shape_cast %380 : vector<1x8x32xf32> to vector<8x32xf32>
    %382 = vector.shape_cast %378 : vector<8x32xf32> to vector<1x8x32xf32>
    tpu.vector_store %arg6[%c0_136, %379, %c0_137], %382 {strides = array<i32>} : memref<2x64x32xf32, #tpu.memory_space<vmem>>, vector<1x8x32xf32>,
    %c7_i32_138 = arith.constant 7 : i32
    %383 = arith.subi %c7_i32_138, %c4_i32 : i32
    %c8_i32_139 = arith.constant 8 : i32
    %384 = arith.muli %383, %c8_i32_139 : i32
    %385 = tpu.assume_multiple %384, 8 : i32
    %386 = arith.index_cast %385 : i32 to index
    %c128_140 = arith.constant 128 : index
    %387 = vector.load %arg7[%386, %c128_140] : memref<64x256xf32, #tpu.memory_space<vmem>>, vector<8x128xf32>
    %cst_141 = arith.constant dense<0.000000e+00> : vector<8x128xf32>
    %388 = tpu.matmul %337, %8, %cst_141 {dimension_numbers = #tpu.dot_dimension_numbers<[1], [0], [0], [1], [0, 0, 1, 1], [], []>} : vector<8x32xf32>, vector<32x128xf32>, vector<8x128xf32> -> vector<8x128xf32>
    %389 = arith.addf %387, %388 : vector<8x128xf32>
    %390 = vector.extract_strided_slice %389 {offsets = [0, 0], sizes = [8, 32], strides = [1, 1]} : vector<8x128xf32> to vector<8x32xf32>
    %cst_142 = arith.constant 5.000000e-01 : f32
    %391 = vector.broadcast %cst_142 : f32 to vector<8x32xf32>
    %392 = arith.mulf %391, %390 : vector<8x32xf32>
    %393 = math.tanh %392 : vector<8x32xf32>
    %cst_143 = arith.constant 5.000000e-01 : f32
    %394 = vector.broadcast %cst_143 : f32 to vector<8x32xf32>
    %395 = arith.mulf %394, %393 : vector<8x32xf32>
    %cst_144 = arith.constant 5.000000e-01 : f32
    %396 = vector.broadcast %cst_144 : f32 to vector<8x32xf32>
    %397 = arith.addf %395, %396 : vector<8x32xf32>
    %398 = vector.extract_strided_slice %389 {offsets = [0, 32], sizes = [8, 32], strides = [1, 1]} : vector<8x128xf32> to vector<8x32xf32>
    %cst_145 = arith.constant 5.000000e-01 : f32
    %399 = vector.broadcast %cst_145 : f32 to vector<8x32xf32>
    %400 = arith.mulf %399, %398 : vector<8x32xf32>
    %401 = math.tanh %400 : vector<8x32xf32>
    %cst_146 = arith.constant 5.000000e-01 : f32
    %402 = vector.broadcast %cst_146 : f32 to vector<8x32xf32>
    %403 = arith.mulf %402, %401 : vector<8x32xf32>
    %cst_147 = arith.constant 5.000000e-01 : f32
    %404 = vector.broadcast %cst_147 : f32 to vector<8x32xf32>
    %405 = arith.addf %403, %404 : vector<8x32xf32>
    %406 = vector.extract_strided_slice %389 {offsets = [0, 64], sizes = [8, 32], strides = [1, 1]} : vector<8x128xf32> to vector<8x32xf32>
    %407 = math.tanh %406 : vector<8x32xf32>
    %408 = vector.extract_strided_slice %389 {offsets = [0, 96], sizes = [8, 32], strides = [1, 1]} : vector<8x128xf32> to vector<8x32xf32>
    %cst_148 = arith.constant 5.000000e-01 : f32
    %409 = vector.broadcast %cst_148 : f32 to vector<8x32xf32>
    %410 = arith.mulf %409, %408 : vector<8x32xf32>
    %411 = math.tanh %410 : vector<8x32xf32>
    %cst_149 = arith.constant 5.000000e-01 : f32
    %412 = vector.broadcast %cst_149 : f32 to vector<8x32xf32>
    %413 = arith.mulf %412, %411 : vector<8x32xf32>
    %cst_150 = arith.constant 5.000000e-01 : f32
    %414 = vector.broadcast %cst_150 : f32 to vector<8x32xf32>
    %415 = arith.addf %413, %414 : vector<8x32xf32>
    %416 = arith.mulf %405, %335 : vector<8x32xf32>
    %417 = arith.mulf %397, %407 : vector<8x32xf32>
    %418 = arith.addf %416, %417 : vector<8x32xf32>
    %419 = math.tanh %418 : vector<8x32xf32>
    %420 = arith.mulf %415, %419 : vector<8x32xf32>
    %c1_151 = arith.constant 1 : index
    %421 = arith.index_cast %385 : i32 to index
    %c0_152 = arith.constant 0 : index
    %422 = vector.load %arg6[%c1_151, %421, %c0_152] : memref<2x64x32xf32, #tpu.memory_space<vmem>>, vector<1x8x32xf32>
    %423 = vector.shape_cast %422 : vector<1x8x32xf32> to vector<8x32xf32>
    %424 = vector.shape_cast %420 : vector<8x32xf32> to vector<1x8x32xf32>
    tpu.vector_store %arg6[%c1_151, %421, %c0_152], %424 {strides = array<i32>} : memref<2x64x32xf32, #tpu.memory_space<vmem>>, vector<1x8x32xf32>,
    %c5_i32 = arith.constant 5 : i32
    %c8_i32_153 = arith.constant 8 : i32
    %425 = arith.muli %c5_i32, %c8_i32_153 : i32
    %426 = tpu.assume_multiple %425, 8 : i32
    %427 = arith.index_cast %426 : i32 to index
    %c0_154 = arith.constant 0 : index
    %428 = vector.load %arg7[%427, %c0_154] : memref<64x256xf32, #tpu.memory_space<vmem>>, vector<8x128xf32>
    %cst_155 = arith.constant dense<0.000000e+00> : vector<8x128xf32>
    %429 = tpu.matmul %378, %7, %cst_155 {dimension_numbers = #tpu.dot_dimension_numbers<[1], [0], [0], [1], [0, 0, 1, 1], [], []>} : vector<8x32xf32>, vector<32x128xf32>, vector<8x128xf32> -> vector<8x128xf32>
    %430 = arith.addf %428, %429 : vector<8x128xf32>
    %431 = vector.extract_strided_slice %430 {offsets = [0, 0], sizes = [8, 32], strides = [1, 1]} : vector<8x128xf32> to vector<8x32xf32>
    %cst_156 = arith.constant 5.000000e-01 : f32
    %432 = vector.broadcast %cst_156 : f32 to vector<8x32xf32>
    %433 = arith.mulf %432, %431 : vector<8x32xf32>
    %434 = math.tanh %433 : vector<8x32xf32>
    %cst_157 = arith.constant 5.000000e-01 : f32
    %435 = vector.broadcast %cst_157 : f32 to vector<8x32xf32>
    %436 = arith.mulf %435, %434 : vector<8x32xf32>
    %cst_158 = arith.constant 5.000000e-01 : f32
    %437 = vector.broadcast %cst_158 : f32 to vector<8x32xf32>
    %438 = arith.addf %436, %437 : vector<8x32xf32>
    %439 = vector.extract_strided_slice %430 {offsets = [0, 32], sizes = [8, 32], strides = [1, 1]} : vector<8x128xf32> to vector<8x32xf32>
    %cst_159 = arith.constant 5.000000e-01 : f32
    %440 = vector.broadcast %cst_159 : f32 to vector<8x32xf32>
    %441 = arith.mulf %440, %439 : vector<8x32xf32>
    %442 = math.tanh %441 : vector<8x32xf32>
    %cst_160 = arith.constant 5.000000e-01 : f32
    %443 = vector.broadcast %cst_160 : f32 to vector<8x32xf32>
    %444 = arith.mulf %443, %442 : vector<8x32xf32>
    %cst_161 = arith.constant 5.000000e-01 : f32
    %445 = vector.broadcast %cst_161 : f32 to vector<8x32xf32>
    %446 = arith.addf %444, %445 : vector<8x32xf32>
    %447 = vector.extract_strided_slice %430 {offsets = [0, 64], sizes = [8, 32], strides = [1, 1]} : vector<8x128xf32> to vector<8x32xf32>
    %448 = math.tanh %447 : vector<8x32xf32>
    %449 = vector.extract_strided_slice %430 {offsets = [0, 96], sizes = [8, 32], strides = [1, 1]} : vector<8x128xf32> to vector<8x32xf32>
    %cst_162 = arith.constant 5.000000e-01 : f32
    %450 = vector.broadcast %cst_162 : f32 to vector<8x32xf32>
    %451 = arith.mulf %450, %449 : vector<8x32xf32>
    %452 = math.tanh %451 : vector<8x32xf32>
    %cst_163 = arith.constant 5.000000e-01 : f32
    %453 = vector.broadcast %cst_163 : f32 to vector<8x32xf32>
    %454 = arith.mulf %453, %452 : vector<8x32xf32>
    %cst_164 = arith.constant 5.000000e-01 : f32
    %455 = vector.broadcast %cst_164 : f32 to vector<8x32xf32>
    %456 = arith.addf %454, %455 : vector<8x32xf32>
    %457 = arith.mulf %446, %376 : vector<8x32xf32>
    %458 = arith.mulf %438, %448 : vector<8x32xf32>
    %459 = arith.addf %457, %458 : vector<8x32xf32>
    %460 = math.tanh %459 : vector<8x32xf32>
    %461 = arith.mulf %456, %460 : vector<8x32xf32>
    %c0_165 = arith.constant 0 : index
    %462 = arith.index_cast %426 : i32 to index
    %c0_166 = arith.constant 0 : index
    %463 = vector.load %arg6[%c0_165, %462, %c0_166] : memref<2x64x32xf32, #tpu.memory_space<vmem>>, vector<1x8x32xf32>
    %464 = vector.shape_cast %463 : vector<1x8x32xf32> to vector<8x32xf32>
    %465 = vector.shape_cast %461 : vector<8x32xf32> to vector<1x8x32xf32>
    tpu.vector_store %arg6[%c0_165, %462, %c0_166], %465 {strides = array<i32>} : memref<2x64x32xf32, #tpu.memory_space<vmem>>, vector<1x8x32xf32>,
    %c7_i32_167 = arith.constant 7 : i32
    %466 = arith.subi %c7_i32_167, %c5_i32 : i32
    %c8_i32_168 = arith.constant 8 : i32
    %467 = arith.muli %466, %c8_i32_168 : i32
    %468 = tpu.assume_multiple %467, 8 : i32
    %469 = arith.index_cast %468 : i32 to index
    %c128_169 = arith.constant 128 : index
    %470 = vector.load %arg7[%469, %c128_169] : memref<64x256xf32, #tpu.memory_space<vmem>>, vector<8x128xf32>
    %cst_170 = arith.constant dense<0.000000e+00> : vector<8x128xf32>
    %471 = tpu.matmul %420, %8, %cst_170 {dimension_numbers = #tpu.dot_dimension_numbers<[1], [0], [0], [1], [0, 0, 1, 1], [], []>} : vector<8x32xf32>, vector<32x128xf32>, vector<8x128xf32> -> vector<8x128xf32>
    %472 = arith.addf %470, %471 : vector<8x128xf32>
    %473 = vector.extract_strided_slice %472 {offsets = [0, 0], sizes = [8, 32], strides = [1, 1]} : vector<8x128xf32> to vector<8x32xf32>
    %cst_171 = arith.constant 5.000000e-01 : f32
    %474 = vector.broadcast %cst_171 : f32 to vector<8x32xf32>
    %475 = arith.mulf %474, %473 : vector<8x32xf32>
    %476 = math.tanh %475 : vector<8x32xf32>
    %cst_172 = arith.constant 5.000000e-01 : f32
    %477 = vector.broadcast %cst_172 : f32 to vector<8x32xf32>
    %478 = arith.mulf %477, %476 : vector<8x32xf32>
    %cst_173 = arith.constant 5.000000e-01 : f32
    %479 = vector.broadcast %cst_173 : f32 to vector<8x32xf32>
    %480 = arith.addf %478, %479 : vector<8x32xf32>
    %481 = vector.extract_strided_slice %472 {offsets = [0, 32], sizes = [8, 32], strides = [1, 1]} : vector<8x128xf32> to vector<8x32xf32>
    %cst_174 = arith.constant 5.000000e-01 : f32
    %482 = vector.broadcast %cst_174 : f32 to vector<8x32xf32>
    %483 = arith.mulf %482, %481 : vector<8x32xf32>
    %484 = math.tanh %483 : vector<8x32xf32>
    %cst_175 = arith.constant 5.000000e-01 : f32
    %485 = vector.broadcast %cst_175 : f32 to vector<8x32xf32>
    %486 = arith.mulf %485, %484 : vector<8x32xf32>
    %cst_176 = arith.constant 5.000000e-01 : f32
    %487 = vector.broadcast %cst_176 : f32 to vector<8x32xf32>
    %488 = arith.addf %486, %487 : vector<8x32xf32>
    %489 = vector.extract_strided_slice %472 {offsets = [0, 64], sizes = [8, 32], strides = [1, 1]} : vector<8x128xf32> to vector<8x32xf32>
    %490 = math.tanh %489 : vector<8x32xf32>
    %491 = vector.extract_strided_slice %472 {offsets = [0, 96], sizes = [8, 32], strides = [1, 1]} : vector<8x128xf32> to vector<8x32xf32>
    %cst_177 = arith.constant 5.000000e-01 : f32
    %492 = vector.broadcast %cst_177 : f32 to vector<8x32xf32>
    %493 = arith.mulf %492, %491 : vector<8x32xf32>
    %494 = math.tanh %493 : vector<8x32xf32>
    %cst_178 = arith.constant 5.000000e-01 : f32
    %495 = vector.broadcast %cst_178 : f32 to vector<8x32xf32>
    %496 = arith.mulf %495, %494 : vector<8x32xf32>
    %cst_179 = arith.constant 5.000000e-01 : f32
    %497 = vector.broadcast %cst_179 : f32 to vector<8x32xf32>
    %498 = arith.addf %496, %497 : vector<8x32xf32>
    %499 = arith.mulf %488, %418 : vector<8x32xf32>
    %500 = arith.mulf %480, %490 : vector<8x32xf32>
    %501 = arith.addf %499, %500 : vector<8x32xf32>
    %502 = math.tanh %501 : vector<8x32xf32>
    %503 = arith.mulf %498, %502 : vector<8x32xf32>
    %c1_180 = arith.constant 1 : index
    %504 = arith.index_cast %468 : i32 to index
    %c0_181 = arith.constant 0 : index
    %505 = vector.load %arg6[%c1_180, %504, %c0_181] : memref<2x64x32xf32, #tpu.memory_space<vmem>>, vector<1x8x32xf32>
    %506 = vector.shape_cast %505 : vector<1x8x32xf32> to vector<8x32xf32>
    %507 = vector.shape_cast %503 : vector<8x32xf32> to vector<1x8x32xf32>
    tpu.vector_store %arg6[%c1_180, %504, %c0_181], %507 {strides = array<i32>} : memref<2x64x32xf32, #tpu.memory_space<vmem>>, vector<1x8x32xf32>,
    %c6_i32 = arith.constant 6 : i32
    %c8_i32_182 = arith.constant 8 : i32
    %508 = arith.muli %c6_i32, %c8_i32_182 : i32
    %509 = tpu.assume_multiple %508, 8 : i32
    %510 = arith.index_cast %509 : i32 to index
    %c0_183 = arith.constant 0 : index
    %511 = vector.load %arg7[%510, %c0_183] : memref<64x256xf32, #tpu.memory_space<vmem>>, vector<8x128xf32>
    %cst_184 = arith.constant dense<0.000000e+00> : vector<8x128xf32>
    %512 = tpu.matmul %461, %7, %cst_184 {dimension_numbers = #tpu.dot_dimension_numbers<[1], [0], [0], [1], [0, 0, 1, 1], [], []>} : vector<8x32xf32>, vector<32x128xf32>, vector<8x128xf32> -> vector<8x128xf32>
    %513 = arith.addf %511, %512 : vector<8x128xf32>
    %514 = vector.extract_strided_slice %513 {offsets = [0, 0], sizes = [8, 32], strides = [1, 1]} : vector<8x128xf32> to vector<8x32xf32>
    %cst_185 = arith.constant 5.000000e-01 : f32
    %515 = vector.broadcast %cst_185 : f32 to vector<8x32xf32>
    %516 = arith.mulf %515, %514 : vector<8x32xf32>
    %517 = math.tanh %516 : vector<8x32xf32>
    %cst_186 = arith.constant 5.000000e-01 : f32
    %518 = vector.broadcast %cst_186 : f32 to vector<8x32xf32>
    %519 = arith.mulf %518, %517 : vector<8x32xf32>
    %cst_187 = arith.constant 5.000000e-01 : f32
    %520 = vector.broadcast %cst_187 : f32 to vector<8x32xf32>
    %521 = arith.addf %519, %520 : vector<8x32xf32>
    %522 = vector.extract_strided_slice %513 {offsets = [0, 32], sizes = [8, 32], strides = [1, 1]} : vector<8x128xf32> to vector<8x32xf32>
    %cst_188 = arith.constant 5.000000e-01 : f32
    %523 = vector.broadcast %cst_188 : f32 to vector<8x32xf32>
    %524 = arith.mulf %523, %522 : vector<8x32xf32>
    %525 = math.tanh %524 : vector<8x32xf32>
    %cst_189 = arith.constant 5.000000e-01 : f32
    %526 = vector.broadcast %cst_189 : f32 to vector<8x32xf32>
    %527 = arith.mulf %526, %525 : vector<8x32xf32>
    %cst_190 = arith.constant 5.000000e-01 : f32
    %528 = vector.broadcast %cst_190 : f32 to vector<8x32xf32>
    %529 = arith.addf %527, %528 : vector<8x32xf32>
    %530 = vector.extract_strided_slice %513 {offsets = [0, 64], sizes = [8, 32], strides = [1, 1]} : vector<8x128xf32> to vector<8x32xf32>
    %531 = math.tanh %530 : vector<8x32xf32>
    %532 = vector.extract_strided_slice %513 {offsets = [0, 96], sizes = [8, 32], strides = [1, 1]} : vector<8x128xf32> to vector<8x32xf32>
    %cst_191 = arith.constant 5.000000e-01 : f32
    %533 = vector.broadcast %cst_191 : f32 to vector<8x32xf32>
    %534 = arith.mulf %533, %532 : vector<8x32xf32>
    %535 = math.tanh %534 : vector<8x32xf32>
    %cst_192 = arith.constant 5.000000e-01 : f32
    %536 = vector.broadcast %cst_192 : f32 to vector<8x32xf32>
    %537 = arith.mulf %536, %535 : vector<8x32xf32>
    %cst_193 = arith.constant 5.000000e-01 : f32
    %538 = vector.broadcast %cst_193 : f32 to vector<8x32xf32>
    %539 = arith.addf %537, %538 : vector<8x32xf32>
    %540 = arith.mulf %529, %459 : vector<8x32xf32>
    %541 = arith.mulf %521, %531 : vector<8x32xf32>
    %542 = arith.addf %540, %541 : vector<8x32xf32>
    %543 = math.tanh %542 : vector<8x32xf32>
    %544 = arith.mulf %539, %543 : vector<8x32xf32>
    %c0_194 = arith.constant 0 : index
    %545 = arith.index_cast %509 : i32 to index
    %c0_195 = arith.constant 0 : index
    %546 = vector.load %arg6[%c0_194, %545, %c0_195] : memref<2x64x32xf32, #tpu.memory_space<vmem>>, vector<1x8x32xf32>
    %547 = vector.shape_cast %546 : vector<1x8x32xf32> to vector<8x32xf32>
    %548 = vector.shape_cast %544 : vector<8x32xf32> to vector<1x8x32xf32>
    tpu.vector_store %arg6[%c0_194, %545, %c0_195], %548 {strides = array<i32>} : memref<2x64x32xf32, #tpu.memory_space<vmem>>, vector<1x8x32xf32>,
    %c7_i32_196 = arith.constant 7 : i32
    %549 = arith.subi %c7_i32_196, %c6_i32 : i32
    %c8_i32_197 = arith.constant 8 : i32
    %550 = arith.muli %549, %c8_i32_197 : i32
    %551 = tpu.assume_multiple %550, 8 : i32
    %552 = arith.index_cast %551 : i32 to index
    %c128_198 = arith.constant 128 : index
    %553 = vector.load %arg7[%552, %c128_198] : memref<64x256xf32, #tpu.memory_space<vmem>>, vector<8x128xf32>
    %cst_199 = arith.constant dense<0.000000e+00> : vector<8x128xf32>
    %554 = tpu.matmul %503, %8, %cst_199 {dimension_numbers = #tpu.dot_dimension_numbers<[1], [0], [0], [1], [0, 0, 1, 1], [], []>} : vector<8x32xf32>, vector<32x128xf32>, vector<8x128xf32> -> vector<8x128xf32>
    %555 = arith.addf %553, %554 : vector<8x128xf32>
    %556 = vector.extract_strided_slice %555 {offsets = [0, 0], sizes = [8, 32], strides = [1, 1]} : vector<8x128xf32> to vector<8x32xf32>
    %cst_200 = arith.constant 5.000000e-01 : f32
    %557 = vector.broadcast %cst_200 : f32 to vector<8x32xf32>
    %558 = arith.mulf %557, %556 : vector<8x32xf32>
    %559 = math.tanh %558 : vector<8x32xf32>
    %cst_201 = arith.constant 5.000000e-01 : f32
    %560 = vector.broadcast %cst_201 : f32 to vector<8x32xf32>
    %561 = arith.mulf %560, %559 : vector<8x32xf32>
    %cst_202 = arith.constant 5.000000e-01 : f32
    %562 = vector.broadcast %cst_202 : f32 to vector<8x32xf32>
    %563 = arith.addf %561, %562 : vector<8x32xf32>
    %564 = vector.extract_strided_slice %555 {offsets = [0, 32], sizes = [8, 32], strides = [1, 1]} : vector<8x128xf32> to vector<8x32xf32>
    %cst_203 = arith.constant 5.000000e-01 : f32
    %565 = vector.broadcast %cst_203 : f32 to vector<8x32xf32>
    %566 = arith.mulf %565, %564 : vector<8x32xf32>
    %567 = math.tanh %566 : vector<8x32xf32>
    %cst_204 = arith.constant 5.000000e-01 : f32
    %568 = vector.broadcast %cst_204 : f32 to vector<8x32xf32>
    %569 = arith.mulf %568, %567 : vector<8x32xf32>
    %cst_205 = arith.constant 5.000000e-01 : f32
    %570 = vector.broadcast %cst_205 : f32 to vector<8x32xf32>
    %571 = arith.addf %569, %570 : vector<8x32xf32>
    %572 = vector.extract_strided_slice %555 {offsets = [0, 64], sizes = [8, 32], strides = [1, 1]} : vector<8x128xf32> to vector<8x32xf32>
    %573 = math.tanh %572 : vector<8x32xf32>
    %574 = vector.extract_strided_slice %555 {offsets = [0, 96], sizes = [8, 32], strides = [1, 1]} : vector<8x128xf32> to vector<8x32xf32>
    %cst_206 = arith.constant 5.000000e-01 : f32
    %575 = vector.broadcast %cst_206 : f32 to vector<8x32xf32>
    %576 = arith.mulf %575, %574 : vector<8x32xf32>
    %577 = math.tanh %576 : vector<8x32xf32>
    %cst_207 = arith.constant 5.000000e-01 : f32
    %578 = vector.broadcast %cst_207 : f32 to vector<8x32xf32>
    %579 = arith.mulf %578, %577 : vector<8x32xf32>
    %cst_208 = arith.constant 5.000000e-01 : f32
    %580 = vector.broadcast %cst_208 : f32 to vector<8x32xf32>
    %581 = arith.addf %579, %580 : vector<8x32xf32>
    %582 = arith.mulf %571, %501 : vector<8x32xf32>
    %583 = arith.mulf %563, %573 : vector<8x32xf32>
    %584 = arith.addf %582, %583 : vector<8x32xf32>
    %585 = math.tanh %584 : vector<8x32xf32>
    %586 = arith.mulf %581, %585 : vector<8x32xf32>
    %c1_209 = arith.constant 1 : index
    %587 = arith.index_cast %551 : i32 to index
    %c0_210 = arith.constant 0 : index
    %588 = vector.load %arg6[%c1_209, %587, %c0_210] : memref<2x64x32xf32, #tpu.memory_space<vmem>>, vector<1x8x32xf32>
    %589 = vector.shape_cast %588 : vector<1x8x32xf32> to vector<8x32xf32>
    %590 = vector.shape_cast %586 : vector<8x32xf32> to vector<1x8x32xf32>
    tpu.vector_store %arg6[%c1_209, %587, %c0_210], %590 {strides = array<i32>} : memref<2x64x32xf32, #tpu.memory_space<vmem>>, vector<1x8x32xf32>,
    %c7_i32_211 = arith.constant 7 : i32
    %c8_i32_212 = arith.constant 8 : i32
    %591 = arith.muli %c7_i32_211, %c8_i32_212 : i32
    %592 = tpu.assume_multiple %591, 8 : i32
    %593 = arith.index_cast %592 : i32 to index
    %c0_213 = arith.constant 0 : index
    %594 = vector.load %arg7[%593, %c0_213] : memref<64x256xf32, #tpu.memory_space<vmem>>, vector<8x128xf32>
    %cst_214 = arith.constant dense<0.000000e+00> : vector<8x128xf32>
    %595 = tpu.matmul %544, %7, %cst_214 {dimension_numbers = #tpu.dot_dimension_numbers<[1], [0], [0], [1], [0, 0, 1, 1], [], []>} : vector<8x32xf32>, vector<32x128xf32>, vector<8x128xf32> -> vector<8x128xf32>
    %596 = arith.addf %594, %595 : vector<8x128xf32>
    %597 = vector.extract_strided_slice %596 {offsets = [0, 0], sizes = [8, 32], strides = [1, 1]} : vector<8x128xf32> to vector<8x32xf32>
    %cst_215 = arith.constant 5.000000e-01 : f32
    %598 = vector.broadcast %cst_215 : f32 to vector<8x32xf32>
    %599 = arith.mulf %598, %597 : vector<8x32xf32>
    %600 = math.tanh %599 : vector<8x32xf32>
    %cst_216 = arith.constant 5.000000e-01 : f32
    %601 = vector.broadcast %cst_216 : f32 to vector<8x32xf32>
    %602 = arith.mulf %601, %600 : vector<8x32xf32>
    %cst_217 = arith.constant 5.000000e-01 : f32
    %603 = vector.broadcast %cst_217 : f32 to vector<8x32xf32>
    %604 = arith.addf %602, %603 : vector<8x32xf32>
    %605 = vector.extract_strided_slice %596 {offsets = [0, 32], sizes = [8, 32], strides = [1, 1]} : vector<8x128xf32> to vector<8x32xf32>
    %cst_218 = arith.constant 5.000000e-01 : f32
    %606 = vector.broadcast %cst_218 : f32 to vector<8x32xf32>
    %607 = arith.mulf %606, %605 : vector<8x32xf32>
    %608 = math.tanh %607 : vector<8x32xf32>
    %cst_219 = arith.constant 5.000000e-01 : f32
    %609 = vector.broadcast %cst_219 : f32 to vector<8x32xf32>
    %610 = arith.mulf %609, %608 : vector<8x32xf32>
    %cst_220 = arith.constant 5.000000e-01 : f32
    %611 = vector.broadcast %cst_220 : f32 to vector<8x32xf32>
    %612 = arith.addf %610, %611 : vector<8x32xf32>
    %613 = vector.extract_strided_slice %596 {offsets = [0, 64], sizes = [8, 32], strides = [1, 1]} : vector<8x128xf32> to vector<8x32xf32>
    %614 = math.tanh %613 : vector<8x32xf32>
    %615 = vector.extract_strided_slice %596 {offsets = [0, 96], sizes = [8, 32], strides = [1, 1]} : vector<8x128xf32> to vector<8x32xf32>
    %cst_221 = arith.constant 5.000000e-01 : f32
    %616 = vector.broadcast %cst_221 : f32 to vector<8x32xf32>
    %617 = arith.mulf %616, %615 : vector<8x32xf32>
    %618 = math.tanh %617 : vector<8x32xf32>
    %cst_222 = arith.constant 5.000000e-01 : f32
    %619 = vector.broadcast %cst_222 : f32 to vector<8x32xf32>
    %620 = arith.mulf %619, %618 : vector<8x32xf32>
    %cst_223 = arith.constant 5.000000e-01 : f32
    %621 = vector.broadcast %cst_223 : f32 to vector<8x32xf32>
    %622 = arith.addf %620, %621 : vector<8x32xf32>
    %623 = arith.mulf %612, %542 : vector<8x32xf32>
    %624 = arith.mulf %604, %614 : vector<8x32xf32>
    %625 = arith.addf %623, %624 : vector<8x32xf32>
    %626 = math.tanh %625 : vector<8x32xf32>
    %627 = arith.mulf %622, %626 : vector<8x32xf32>
    %c0_224 = arith.constant 0 : index
    %628 = arith.index_cast %592 : i32 to index
    %c0_225 = arith.constant 0 : index
    %629 = vector.load %arg6[%c0_224, %628, %c0_225] : memref<2x64x32xf32, #tpu.memory_space<vmem>>, vector<1x8x32xf32>
    %630 = vector.shape_cast %629 : vector<1x8x32xf32> to vector<8x32xf32>
    %631 = vector.shape_cast %627 : vector<8x32xf32> to vector<1x8x32xf32>
    tpu.vector_store %arg6[%c0_224, %628, %c0_225], %631 {strides = array<i32>} : memref<2x64x32xf32, #tpu.memory_space<vmem>>, vector<1x8x32xf32>,
    %c7_i32_226 = arith.constant 7 : i32
    %632 = arith.subi %c7_i32_226, %c7_i32_211 : i32
    %c8_i32_227 = arith.constant 8 : i32
    %633 = arith.muli %632, %c8_i32_227 : i32
    %634 = tpu.assume_multiple %633, 8 : i32
    %635 = arith.index_cast %634 : i32 to index
    %c128_228 = arith.constant 128 : index
    %636 = vector.load %arg7[%635, %c128_228] : memref<64x256xf32, #tpu.memory_space<vmem>>, vector<8x128xf32>
    %cst_229 = arith.constant dense<0.000000e+00> : vector<8x128xf32>
    %637 = tpu.matmul %586, %8, %cst_229 {dimension_numbers = #tpu.dot_dimension_numbers<[1], [0], [0], [1], [0, 0, 1, 1], [], []>} : vector<8x32xf32>, vector<32x128xf32>, vector<8x128xf32> -> vector<8x128xf32>
    %638 = arith.addf %636, %637 : vector<8x128xf32>
    %639 = vector.extract_strided_slice %638 {offsets = [0, 0], sizes = [8, 32], strides = [1, 1]} : vector<8x128xf32> to vector<8x32xf32>
    %cst_230 = arith.constant 5.000000e-01 : f32
    %640 = vector.broadcast %cst_230 : f32 to vector<8x32xf32>
    %641 = arith.mulf %640, %639 : vector<8x32xf32>
    %642 = math.tanh %641 : vector<8x32xf32>
    %cst_231 = arith.constant 5.000000e-01 : f32
    %643 = vector.broadcast %cst_231 : f32 to vector<8x32xf32>
    %644 = arith.mulf %643, %642 : vector<8x32xf32>
    %cst_232 = arith.constant 5.000000e-01 : f32
    %645 = vector.broadcast %cst_232 : f32 to vector<8x32xf32>
    %646 = arith.addf %644, %645 : vector<8x32xf32>
    %647 = vector.extract_strided_slice %638 {offsets = [0, 32], sizes = [8, 32], strides = [1, 1]} : vector<8x128xf32> to vector<8x32xf32>
    %cst_233 = arith.constant 5.000000e-01 : f32
    %648 = vector.broadcast %cst_233 : f32 to vector<8x32xf32>
    %649 = arith.mulf %648, %647 : vector<8x32xf32>
    %650 = math.tanh %649 : vector<8x32xf32>
    %cst_234 = arith.constant 5.000000e-01 : f32
    %651 = vector.broadcast %cst_234 : f32 to vector<8x32xf32>
    %652 = arith.mulf %651, %650 : vector<8x32xf32>
    %cst_235 = arith.constant 5.000000e-01 : f32
    %653 = vector.broadcast %cst_235 : f32 to vector<8x32xf32>
    %654 = arith.addf %652, %653 : vector<8x32xf32>
    %655 = vector.extract_strided_slice %638 {offsets = [0, 64], sizes = [8, 32], strides = [1, 1]} : vector<8x128xf32> to vector<8x32xf32>
    %656 = math.tanh %655 : vector<8x32xf32>
    %657 = vector.extract_strided_slice %638 {offsets = [0, 96], sizes = [8, 32], strides = [1, 1]} : vector<8x128xf32> to vector<8x32xf32>
    %cst_236 = arith.constant 5.000000e-01 : f32
    %658 = vector.broadcast %cst_236 : f32 to vector<8x32xf32>
    %659 = arith.mulf %658, %657 : vector<8x32xf32>
    %660 = math.tanh %659 : vector<8x32xf32>
    %cst_237 = arith.constant 5.000000e-01 : f32
    %661 = vector.broadcast %cst_237 : f32 to vector<8x32xf32>
    %662 = arith.mulf %661, %660 : vector<8x32xf32>
    %cst_238 = arith.constant 5.000000e-01 : f32
    %663 = vector.broadcast %cst_238 : f32 to vector<8x32xf32>
    %664 = arith.addf %662, %663 : vector<8x32xf32>
    %665 = arith.mulf %654, %584 : vector<8x32xf32>
    %666 = arith.mulf %646, %656 : vector<8x32xf32>
    %667 = arith.addf %665, %666 : vector<8x32xf32>
    %668 = math.tanh %667 : vector<8x32xf32>
    %669 = arith.mulf %664, %668 : vector<8x32xf32>
    %c1_239 = arith.constant 1 : index
    %670 = arith.index_cast %634 : i32 to index
    %c0_240 = arith.constant 0 : index
    %671 = vector.load %arg6[%c1_239, %670, %c0_240] : memref<2x64x32xf32, #tpu.memory_space<vmem>>, vector<1x8x32xf32>
    %672 = vector.shape_cast %671 : vector<1x8x32xf32> to vector<8x32xf32>
    %673 = vector.shape_cast %669 : vector<8x32xf32> to vector<1x8x32xf32>
    tpu.vector_store %arg6[%c1_239, %670, %c0_240], %673 {strides = array<i32>} : memref<2x64x32xf32, #tpu.memory_space<vmem>>, vector<1x8x32xf32>,
    %c8_i32_241 = arith.constant 8 : i32
    return
  }
  func.func @transform_0(%arg0: i32) -> (i32, i32) {
    %c0_i32 = arith.constant 0 : i32
    %c0_i32_0 = arith.constant 0 : i32
    %c0_i32_1 = arith.constant 0 : i32
    return %c0_i32, %c0_i32_0 : i32, i32
  }
  func.func @transform_1(%arg0: i32) -> (i32, i32) {
    %c0_i32 = arith.constant 0 : i32
    %c0_i32_0 = arith.constant 0 : i32
    %c0_i32_1 = arith.constant 0 : i32
    return %c0_i32, %c0_i32_0 : i32, i32
  }
  func.func @transform_2(%arg0: i32) -> (i32, i32) {
    %c0_i32 = arith.constant 0 : i32
    %c0_i32_0 = arith.constant 0 : i32
    %c0_i32_1 = arith.constant 0 : i32
    return %c0_i32, %c0_i32_0 : i32, i32
  }
  func.func @transform_3(%arg0: i32) -> (i32, i32) {
    %c0_i32 = arith.constant 0 : i32
    %c0_i32_0 = arith.constant 0 : i32
    %c0_i32_1 = arith.constant 0 : i32
    return %c0_i32, %c0_i32_0 : i32, i32
  }
  func.func @transform_4(%arg0: i32) -> (i32, i32) {
    %c0_i32 = arith.constant 0 : i32
    %c0_i32_0 = arith.constant 0 : i32
    %c0_i32_1 = arith.constant 0 : i32
    return %c0_i32, %c0_i32_0 : i32, i32
  }
  func.func @transform_5(%arg0: i32) -> (i32, i32, i32) {
    %c0_i32 = arith.constant 0 : i32
    %c0_i32_0 = arith.constant 0 : i32
    %c0_i32_1 = arith.constant 0 : i32
    %c0_i32_2 = arith.constant 0 : i32
    return %c0_i32, %c0_i32_0, %c0_i32_1 : i32, i32, i32
  }
}

module attributes {stable_mosaic.version = 11 : i64} {
  func.func @_bilstm_layer_kernel(%arg0: i32, %arg1: memref<64x64xf32, #tpu.memory_space<vmem>>, %arg2: memref<64x256xf32, #tpu.memory_space<vmem>>, %arg3: memref<1x256xf32, #tpu.memory_space<vmem>>, %arg4: memref<32x128xf32, #tpu.memory_space<vmem>>, %arg5: memref<32x128xf32, #tpu.memory_space<vmem>>, %arg6: memref<2x64x32xf32, #tpu.memory_space<vmem>>, %arg7: memref<64x256xf32, #tpu.memory_space<vmem>>) attributes {dimension_semantics = [#tpu.dimension_semantics<arbitrary>], iteration_bounds = array<i64: 1>, scalar_prefetch = 0 : i64, scratch_operands = 1 : i64, tpu.core_type = #tpu.core_type<tc>, window_params = [{pipeline_mode = #tpu.pipeline_mode<synchronous>, transform_indices = @transform_0, window_bounds = array<i64: 64, 64>}, {pipeline_mode = #tpu.pipeline_mode<synchronous>, transform_indices = @transform_1, window_bounds = array<i64: 64, 256>}, {pipeline_mode = #tpu.pipeline_mode<synchronous>, transform_indices = @transform_2, window_bounds = array<i64: 1, 256>}, {pipeline_mode = #tpu.pipeline_mode<synchronous>, transform_indices = @transform_3, window_bounds = array<i64: 32, 128>}, {pipeline_mode = #tpu.pipeline_mode<synchronous>, transform_indices = @transform_4, window_bounds = array<i64: 32, 128>}, {pipeline_mode = #tpu.pipeline_mode<synchronous>, transform_indices = @transform_5, window_bounds = array<i64: 2, 64, 32>}]} {
    %c0 = arith.constant 0 : index
    %c0_0 = arith.constant 0 : index
    %0 = vector.load %arg1[%c0, %c0_0] : memref<64x64xf32, #tpu.memory_space<vmem>>, vector<64x64xf32>
    %c0_1 = arith.constant 0 : index
    %c0_2 = arith.constant 0 : index
    %1 = vector.load %arg2[%c0_1, %c0_2] : memref<64x256xf32, #tpu.memory_space<vmem>>, vector<64x256xf32>
    %cst = arith.constant dense<0.000000e+00> : vector<64x256xf32>
    %2 = tpu.matmul %0, %1, %cst {dimension_numbers = #tpu.dot_dimension_numbers<[1], [0], [0], [1], [0, 0, 1, 1], [], []>} : vector<64x64xf32>, vector<64x256xf32>, vector<64x256xf32> -> vector<64x256xf32>
    %c0_3 = arith.constant 0 : index
    %c0_4 = arith.constant 0 : index
    %3 = vector.load %arg3[%c0_3, %c0_4] : memref<1x256xf32, #tpu.memory_space<vmem>>, vector<1x256xf32>
    %4 = vector.broadcast %3 : vector<1x256xf32> to vector<64x256xf32>
    %5 = arith.addf %2, %4 : vector<64x256xf32>
    %c0_5 = arith.constant 0 : index
    %c0_6 = arith.constant 0 : index
    %6 = vector.load %arg7[%c0_5, %c0_6] : memref<64x256xf32, #tpu.memory_space<vmem>>, vector<64x256xf32>
    tpu.vector_store %arg7[%c0_5, %c0_6], %5 {strides = array<i32>} : memref<64x256xf32, #tpu.memory_space<vmem>>, vector<64x256xf32>,
    %c0_7 = arith.constant 0 : index
    %c0_8 = arith.constant 0 : index
    %7 = vector.load %arg4[%c0_7, %c0_8] : memref<32x128xf32, #tpu.memory_space<vmem>>, vector<32x128xf32>
    %c0_9 = arith.constant 0 : index
    %c0_10 = arith.constant 0 : index
    %8 = vector.load %arg5[%c0_9, %c0_10] : memref<32x128xf32, #tpu.memory_space<vmem>>, vector<32x128xf32>
    %cst_11 = arith.constant 0.000000e+00 : f32
    %9 = vector.broadcast %cst_11 : f32 to vector<8x32xf32>
    %c0_i32 = arith.constant 0 : i32
    %c8_i32 = arith.constant 8 : i32
    %10 = arith.muli %c0_i32, %c8_i32 : i32
    %11 = tpu.assume_multiple %10, 8 : i32
    %12 = arith.index_cast %11 : i32 to index
    %c0_12 = arith.constant 0 : index
    %13 = vector.load %arg7[%12, %c0_12] : memref<64x256xf32, #tpu.memory_space<vmem>>, vector<8x128xf32>
    %cst_13 = arith.constant dense<0.000000e+00> : vector<8x128xf32>
    %14 = tpu.matmul %9, %7, %cst_13 {dimension_numbers = #tpu.dot_dimension_numbers<[1], [0], [0], [1], [0, 0, 1, 1], [], []>} : vector<8x32xf32>, vector<32x128xf32>, vector<8x128xf32> -> vector<8x128xf32>
    %15 = arith.addf %13, %14 : vector<8x128xf32>
    %16 = vector.extract_strided_slice %15 {offsets = [0, 0], sizes = [8, 32], strides = [1, 1]} : vector<8x128xf32> to vector<8x32xf32>
    %cst_14 = arith.constant 5.000000e-01 : f32
    %17 = vector.broadcast %cst_14 : f32 to vector<8x32xf32>
    %18 = arith.mulf %17, %16 : vector<8x32xf32>
    %19 = math.tanh %18 : vector<8x32xf32>
    %cst_15 = arith.constant 5.000000e-01 : f32
    %20 = vector.broadcast %cst_15 : f32 to vector<8x32xf32>
    %21 = arith.mulf %20, %19 : vector<8x32xf32>
    %cst_16 = arith.constant 5.000000e-01 : f32
    %22 = vector.broadcast %cst_16 : f32 to vector<8x32xf32>
    %23 = arith.addf %21, %22 : vector<8x32xf32>
    %24 = vector.extract_strided_slice %15 {offsets = [0, 32], sizes = [8, 32], strides = [1, 1]} : vector<8x128xf32> to vector<8x32xf32>
    %cst_17 = arith.constant 5.000000e-01 : f32
    %25 = vector.broadcast %cst_17 : f32 to vector<8x32xf32>
    %26 = arith.mulf %25, %24 : vector<8x32xf32>
    %27 = math.tanh %26 : vector<8x32xf32>
    %cst_18 = arith.constant 5.000000e-01 : f32
    %28 = vector.broadcast %cst_18 : f32 to vector<8x32xf32>
    %29 = arith.mulf %28, %27 : vector<8x32xf32>
    %cst_19 = arith.constant 5.000000e-01 : f32
    %30 = vector.broadcast %cst_19 : f32 to vector<8x32xf32>
    %31 = arith.addf %29, %30 : vector<8x32xf32>
    %32 = vector.extract_strided_slice %15 {offsets = [0, 64], sizes = [8, 32], strides = [1, 1]} : vector<8x128xf32> to vector<8x32xf32>
    %33 = math.tanh %32 : vector<8x32xf32>
    %34 = vector.extract_strided_slice %15 {offsets = [0, 96], sizes = [8, 32], strides = [1, 1]} : vector<8x128xf32> to vector<8x32xf32>
    %cst_20 = arith.constant 5.000000e-01 : f32
    %35 = vector.broadcast %cst_20 : f32 to vector<8x32xf32>
    %36 = arith.mulf %35, %34 : vector<8x32xf32>
    %37 = math.tanh %36 : vector<8x32xf32>
    %cst_21 = arith.constant 5.000000e-01 : f32
    %38 = vector.broadcast %cst_21 : f32 to vector<8x32xf32>
    %39 = arith.mulf %38, %37 : vector<8x32xf32>
    %cst_22 = arith.constant 5.000000e-01 : f32
    %40 = vector.broadcast %cst_22 : f32 to vector<8x32xf32>
    %41 = arith.addf %39, %40 : vector<8x32xf32>
    %42 = arith.mulf %31, %9 : vector<8x32xf32>
    %43 = arith.mulf %23, %33 : vector<8x32xf32>
    %44 = arith.addf %42, %43 : vector<8x32xf32>
    %45 = math.tanh %44 : vector<8x32xf32>
    %46 = arith.mulf %41, %45 : vector<8x32xf32>
    %c0_23 = arith.constant 0 : index
    %47 = arith.index_cast %11 : i32 to index
    %c0_24 = arith.constant 0 : index
    %48 = vector.load %arg6[%c0_23, %47, %c0_24] : memref<2x64x32xf32, #tpu.memory_space<vmem>>, vector<1x8x32xf32>
    %49 = vector.shape_cast %48 : vector<1x8x32xf32> to vector<8x32xf32>
    %50 = vector.shape_cast %46 : vector<8x32xf32> to vector<1x8x32xf32>
    tpu.vector_store %arg6[%c0_23, %47, %c0_24], %50 {strides = array<i32>} : memref<2x64x32xf32, #tpu.memory_space<vmem>>, vector<1x8x32xf32>,
    %c7_i32 = arith.constant 7 : i32
    %51 = arith.subi %c7_i32, %c0_i32 : i32
    %c8_i32_25 = arith.constant 8 : i32
    %52 = arith.muli %51, %c8_i32_25 : i32
    %53 = tpu.assume_multiple %52, 8 : i32
    %54 = arith.index_cast %53 : i32 to index
    %c128 = arith.constant 128 : index
    %55 = vector.load %arg7[%54, %c128] : memref<64x256xf32, #tpu.memory_space<vmem>>, vector<8x128xf32>
    %cst_26 = arith.constant dense<0.000000e+00> : vector<8x128xf32>
    %56 = tpu.matmul %9, %8, %cst_26 {dimension_numbers = #tpu.dot_dimension_numbers<[1], [0], [0], [1], [0, 0, 1, 1], [], []>} : vector<8x32xf32>, vector<32x128xf32>, vector<8x128xf32> -> vector<8x128xf32>
    %57 = arith.addf %55, %56 : vector<8x128xf32>
    %58 = vector.extract_strided_slice %57 {offsets = [0, 0], sizes = [8, 32], strides = [1, 1]} : vector<8x128xf32> to vector<8x32xf32>
    %cst_27 = arith.constant 5.000000e-01 : f32
    %59 = vector.broadcast %cst_27 : f32 to vector<8x32xf32>
    %60 = arith.mulf %59, %58 : vector<8x32xf32>
    %61 = math.tanh %60 : vector<8x32xf32>
    %cst_28 = arith.constant 5.000000e-01 : f32
    %62 = vector.broadcast %cst_28 : f32 to vector<8x32xf32>
    %63 = arith.mulf %62, %61 : vector<8x32xf32>
    %cst_29 = arith.constant 5.000000e-01 : f32
    %64 = vector.broadcast %cst_29 : f32 to vector<8x32xf32>
    %65 = arith.addf %63, %64 : vector<8x32xf32>
    %66 = vector.extract_strided_slice %57 {offsets = [0, 32], sizes = [8, 32], strides = [1, 1]} : vector<8x128xf32> to vector<8x32xf32>
    %cst_30 = arith.constant 5.000000e-01 : f32
    %67 = vector.broadcast %cst_30 : f32 to vector<8x32xf32>
    %68 = arith.mulf %67, %66 : vector<8x32xf32>
    %69 = math.tanh %68 : vector<8x32xf32>
    %cst_31 = arith.constant 5.000000e-01 : f32
    %70 = vector.broadcast %cst_31 : f32 to vector<8x32xf32>
    %71 = arith.mulf %70, %69 : vector<8x32xf32>
    %cst_32 = arith.constant 5.000000e-01 : f32
    %72 = vector.broadcast %cst_32 : f32 to vector<8x32xf32>
    %73 = arith.addf %71, %72 : vector<8x32xf32>
    %74 = vector.extract_strided_slice %57 {offsets = [0, 64], sizes = [8, 32], strides = [1, 1]} : vector<8x128xf32> to vector<8x32xf32>
    %75 = math.tanh %74 : vector<8x32xf32>
    %76 = vector.extract_strided_slice %57 {offsets = [0, 96], sizes = [8, 32], strides = [1, 1]} : vector<8x128xf32> to vector<8x32xf32>
    %cst_33 = arith.constant 5.000000e-01 : f32
    %77 = vector.broadcast %cst_33 : f32 to vector<8x32xf32>
    %78 = arith.mulf %77, %76 : vector<8x32xf32>
    %79 = math.tanh %78 : vector<8x32xf32>
    %cst_34 = arith.constant 5.000000e-01 : f32
    %80 = vector.broadcast %cst_34 : f32 to vector<8x32xf32>
    %81 = arith.mulf %80, %79 : vector<8x32xf32>
    %cst_35 = arith.constant 5.000000e-01 : f32
    %82 = vector.broadcast %cst_35 : f32 to vector<8x32xf32>
    %83 = arith.addf %81, %82 : vector<8x32xf32>
    %84 = arith.mulf %73, %9 : vector<8x32xf32>
    %85 = arith.mulf %65, %75 : vector<8x32xf32>
    %86 = arith.addf %84, %85 : vector<8x32xf32>
    %87 = math.tanh %86 : vector<8x32xf32>
    %88 = arith.mulf %83, %87 : vector<8x32xf32>
    %c1 = arith.constant 1 : index
    %89 = arith.index_cast %53 : i32 to index
    %c0_36 = arith.constant 0 : index
    %90 = vector.load %arg6[%c1, %89, %c0_36] : memref<2x64x32xf32, #tpu.memory_space<vmem>>, vector<1x8x32xf32>
    %91 = vector.shape_cast %90 : vector<1x8x32xf32> to vector<8x32xf32>
    %92 = vector.shape_cast %88 : vector<8x32xf32> to vector<1x8x32xf32>
    tpu.vector_store %arg6[%c1, %89, %c0_36], %92 {strides = array<i32>} : memref<2x64x32xf32, #tpu.memory_space<vmem>>, vector<1x8x32xf32>,
    %c1_i32 = arith.constant 1 : i32
    %c8_i32_37 = arith.constant 8 : i32
    %93 = arith.muli %c1_i32, %c8_i32_37 : i32
    %94 = tpu.assume_multiple %93, 8 : i32
    %95 = arith.index_cast %94 : i32 to index
    %c0_38 = arith.constant 0 : index
    %96 = vector.load %arg7[%95, %c0_38] : memref<64x256xf32, #tpu.memory_space<vmem>>, vector<8x128xf32>
    %cst_39 = arith.constant dense<0.000000e+00> : vector<8x128xf32>
    %97 = tpu.matmul %46, %7, %cst_39 {dimension_numbers = #tpu.dot_dimension_numbers<[1], [0], [0], [1], [0, 0, 1, 1], [], []>} : vector<8x32xf32>, vector<32x128xf32>, vector<8x128xf32> -> vector<8x128xf32>
    %98 = arith.addf %96, %97 : vector<8x128xf32>
    %99 = vector.extract_strided_slice %98 {offsets = [0, 0], sizes = [8, 32], strides = [1, 1]} : vector<8x128xf32> to vector<8x32xf32>
    %cst_40 = arith.constant 5.000000e-01 : f32
    %100 = vector.broadcast %cst_40 : f32 to vector<8x32xf32>
    %101 = arith.mulf %100, %99 : vector<8x32xf32>
    %102 = math.tanh %101 : vector<8x32xf32>
    %cst_41 = arith.constant 5.000000e-01 : f32
    %103 = vector.broadcast %cst_41 : f32 to vector<8x32xf32>
    %104 = arith.mulf %103, %102 : vector<8x32xf32>
    %cst_42 = arith.constant 5.000000e-01 : f32
    %105 = vector.broadcast %cst_42 : f32 to vector<8x32xf32>
    %106 = arith.addf %104, %105 : vector<8x32xf32>
    %107 = vector.extract_strided_slice %98 {offsets = [0, 32], sizes = [8, 32], strides = [1, 1]} : vector<8x128xf32> to vector<8x32xf32>
    %cst_43 = arith.constant 5.000000e-01 : f32
    %108 = vector.broadcast %cst_43 : f32 to vector<8x32xf32>
    %109 = arith.mulf %108, %107 : vector<8x32xf32>
    %110 = math.tanh %109 : vector<8x32xf32>
    %cst_44 = arith.constant 5.000000e-01 : f32
    %111 = vector.broadcast %cst_44 : f32 to vector<8x32xf32>
    %112 = arith.mulf %111, %110 : vector<8x32xf32>
    %cst_45 = arith.constant 5.000000e-01 : f32
    %113 = vector.broadcast %cst_45 : f32 to vector<8x32xf32>
    %114 = arith.addf %112, %113 : vector<8x32xf32>
    %115 = vector.extract_strided_slice %98 {offsets = [0, 64], sizes = [8, 32], strides = [1, 1]} : vector<8x128xf32> to vector<8x32xf32>
    %116 = math.tanh %115 : vector<8x32xf32>
    %117 = vector.extract_strided_slice %98 {offsets = [0, 96], sizes = [8, 32], strides = [1, 1]} : vector<8x128xf32> to vector<8x32xf32>
    %cst_46 = arith.constant 5.000000e-01 : f32
    %118 = vector.broadcast %cst_46 : f32 to vector<8x32xf32>
    %119 = arith.mulf %118, %117 : vector<8x32xf32>
    %120 = math.tanh %119 : vector<8x32xf32>
    %cst_47 = arith.constant 5.000000e-01 : f32
    %121 = vector.broadcast %cst_47 : f32 to vector<8x32xf32>
    %122 = arith.mulf %121, %120 : vector<8x32xf32>
    %cst_48 = arith.constant 5.000000e-01 : f32
    %123 = vector.broadcast %cst_48 : f32 to vector<8x32xf32>
    %124 = arith.addf %122, %123 : vector<8x32xf32>
    %125 = arith.mulf %114, %44 : vector<8x32xf32>
    %126 = arith.mulf %106, %116 : vector<8x32xf32>
    %127 = arith.addf %125, %126 : vector<8x32xf32>
    %128 = math.tanh %127 : vector<8x32xf32>
    %129 = arith.mulf %124, %128 : vector<8x32xf32>
    %c0_49 = arith.constant 0 : index
    %130 = arith.index_cast %94 : i32 to index
    %c0_50 = arith.constant 0 : index
    %131 = vector.load %arg6[%c0_49, %130, %c0_50] : memref<2x64x32xf32, #tpu.memory_space<vmem>>, vector<1x8x32xf32>
    %132 = vector.shape_cast %131 : vector<1x8x32xf32> to vector<8x32xf32>
    %133 = vector.shape_cast %129 : vector<8x32xf32> to vector<1x8x32xf32>
    tpu.vector_store %arg6[%c0_49, %130, %c0_50], %133 {strides = array<i32>} : memref<2x64x32xf32, #tpu.memory_space<vmem>>, vector<1x8x32xf32>,
    %c7_i32_51 = arith.constant 7 : i32
    %134 = arith.subi %c7_i32_51, %c1_i32 : i32
    %c8_i32_52 = arith.constant 8 : i32
    %135 = arith.muli %134, %c8_i32_52 : i32
    %136 = tpu.assume_multiple %135, 8 : i32
    %137 = arith.index_cast %136 : i32 to index
    %c128_53 = arith.constant 128 : index
    %138 = vector.load %arg7[%137, %c128_53] : memref<64x256xf32, #tpu.memory_space<vmem>>, vector<8x128xf32>
    %cst_54 = arith.constant dense<0.000000e+00> : vector<8x128xf32>
    %139 = tpu.matmul %88, %8, %cst_54 {dimension_numbers = #tpu.dot_dimension_numbers<[1], [0], [0], [1], [0, 0, 1, 1], [], []>} : vector<8x32xf32>, vector<32x128xf32>, vector<8x128xf32> -> vector<8x128xf32>
    %140 = arith.addf %138, %139 : vector<8x128xf32>
    %141 = vector.extract_strided_slice %140 {offsets = [0, 0], sizes = [8, 32], strides = [1, 1]} : vector<8x128xf32> to vector<8x32xf32>
    %cst_55 = arith.constant 5.000000e-01 : f32
    %142 = vector.broadcast %cst_55 : f32 to vector<8x32xf32>
    %143 = arith.mulf %142, %141 : vector<8x32xf32>
    %144 = math.tanh %143 : vector<8x32xf32>
    %cst_56 = arith.constant 5.000000e-01 : f32
    %145 = vector.broadcast %cst_56 : f32 to vector<8x32xf32>
    %146 = arith.mulf %145, %144 : vector<8x32xf32>
    %cst_57 = arith.constant 5.000000e-01 : f32
    %147 = vector.broadcast %cst_57 : f32 to vector<8x32xf32>
    %148 = arith.addf %146, %147 : vector<8x32xf32>
    %149 = vector.extract_strided_slice %140 {offsets = [0, 32], sizes = [8, 32], strides = [1, 1]} : vector<8x128xf32> to vector<8x32xf32>
    %cst_58 = arith.constant 5.000000e-01 : f32
    %150 = vector.broadcast %cst_58 : f32 to vector<8x32xf32>
    %151 = arith.mulf %150, %149 : vector<8x32xf32>
    %152 = math.tanh %151 : vector<8x32xf32>
    %cst_59 = arith.constant 5.000000e-01 : f32
    %153 = vector.broadcast %cst_59 : f32 to vector<8x32xf32>
    %154 = arith.mulf %153, %152 : vector<8x32xf32>
    %cst_60 = arith.constant 5.000000e-01 : f32
    %155 = vector.broadcast %cst_60 : f32 to vector<8x32xf32>
    %156 = arith.addf %154, %155 : vector<8x32xf32>
    %157 = vector.extract_strided_slice %140 {offsets = [0, 64], sizes = [8, 32], strides = [1, 1]} : vector<8x128xf32> to vector<8x32xf32>
    %158 = math.tanh %157 : vector<8x32xf32>
    %159 = vector.extract_strided_slice %140 {offsets = [0, 96], sizes = [8, 32], strides = [1, 1]} : vector<8x128xf32> to vector<8x32xf32>
    %cst_61 = arith.constant 5.000000e-01 : f32
    %160 = vector.broadcast %cst_61 : f32 to vector<8x32xf32>
    %161 = arith.mulf %160, %159 : vector<8x32xf32>
    %162 = math.tanh %161 : vector<8x32xf32>
    %cst_62 = arith.constant 5.000000e-01 : f32
    %163 = vector.broadcast %cst_62 : f32 to vector<8x32xf32>
    %164 = arith.mulf %163, %162 : vector<8x32xf32>
    %cst_63 = arith.constant 5.000000e-01 : f32
    %165 = vector.broadcast %cst_63 : f32 to vector<8x32xf32>
    %166 = arith.addf %164, %165 : vector<8x32xf32>
    %167 = arith.mulf %156, %86 : vector<8x32xf32>
    %168 = arith.mulf %148, %158 : vector<8x32xf32>
    %169 = arith.addf %167, %168 : vector<8x32xf32>
    %170 = math.tanh %169 : vector<8x32xf32>
    %171 = arith.mulf %166, %170 : vector<8x32xf32>
    %c1_64 = arith.constant 1 : index
    %172 = arith.index_cast %136 : i32 to index
    %c0_65 = arith.constant 0 : index
    %173 = vector.load %arg6[%c1_64, %172, %c0_65] : memref<2x64x32xf32, #tpu.memory_space<vmem>>, vector<1x8x32xf32>
    %174 = vector.shape_cast %173 : vector<1x8x32xf32> to vector<8x32xf32>
    %175 = vector.shape_cast %171 : vector<8x32xf32> to vector<1x8x32xf32>
    tpu.vector_store %arg6[%c1_64, %172, %c0_65], %175 {strides = array<i32>} : memref<2x64x32xf32, #tpu.memory_space<vmem>>, vector<1x8x32xf32>,
    %c2_i32 = arith.constant 2 : i32
    %c8_i32_66 = arith.constant 8 : i32
    %176 = arith.muli %c2_i32, %c8_i32_66 : i32
    %177 = tpu.assume_multiple %176, 8 : i32
    %178 = arith.index_cast %177 : i32 to index
    %c0_67 = arith.constant 0 : index
    %179 = vector.load %arg7[%178, %c0_67] : memref<64x256xf32, #tpu.memory_space<vmem>>, vector<8x128xf32>
    %cst_68 = arith.constant dense<0.000000e+00> : vector<8x128xf32>
    %180 = tpu.matmul %129, %7, %cst_68 {dimension_numbers = #tpu.dot_dimension_numbers<[1], [0], [0], [1], [0, 0, 1, 1], [], []>} : vector<8x32xf32>, vector<32x128xf32>, vector<8x128xf32> -> vector<8x128xf32>
    %181 = arith.addf %179, %180 : vector<8x128xf32>
    %182 = vector.extract_strided_slice %181 {offsets = [0, 0], sizes = [8, 32], strides = [1, 1]} : vector<8x128xf32> to vector<8x32xf32>
    %cst_69 = arith.constant 5.000000e-01 : f32
    %183 = vector.broadcast %cst_69 : f32 to vector<8x32xf32>
    %184 = arith.mulf %183, %182 : vector<8x32xf32>
    %185 = math.tanh %184 : vector<8x32xf32>
    %cst_70 = arith.constant 5.000000e-01 : f32
    %186 = vector.broadcast %cst_70 : f32 to vector<8x32xf32>
    %187 = arith.mulf %186, %185 : vector<8x32xf32>
    %cst_71 = arith.constant 5.000000e-01 : f32
    %188 = vector.broadcast %cst_71 : f32 to vector<8x32xf32>
    %189 = arith.addf %187, %188 : vector<8x32xf32>
    %190 = vector.extract_strided_slice %181 {offsets = [0, 32], sizes = [8, 32], strides = [1, 1]} : vector<8x128xf32> to vector<8x32xf32>
    %cst_72 = arith.constant 5.000000e-01 : f32
    %191 = vector.broadcast %cst_72 : f32 to vector<8x32xf32>
    %192 = arith.mulf %191, %190 : vector<8x32xf32>
    %193 = math.tanh %192 : vector<8x32xf32>
    %cst_73 = arith.constant 5.000000e-01 : f32
    %194 = vector.broadcast %cst_73 : f32 to vector<8x32xf32>
    %195 = arith.mulf %194, %193 : vector<8x32xf32>
    %cst_74 = arith.constant 5.000000e-01 : f32
    %196 = vector.broadcast %cst_74 : f32 to vector<8x32xf32>
    %197 = arith.addf %195, %196 : vector<8x32xf32>
    %198 = vector.extract_strided_slice %181 {offsets = [0, 64], sizes = [8, 32], strides = [1, 1]} : vector<8x128xf32> to vector<8x32xf32>
    %199 = math.tanh %198 : vector<8x32xf32>
    %200 = vector.extract_strided_slice %181 {offsets = [0, 96], sizes = [8, 32], strides = [1, 1]} : vector<8x128xf32> to vector<8x32xf32>
    %cst_75 = arith.constant 5.000000e-01 : f32
    %201 = vector.broadcast %cst_75 : f32 to vector<8x32xf32>
    %202 = arith.mulf %201, %200 : vector<8x32xf32>
    %203 = math.tanh %202 : vector<8x32xf32>
    %cst_76 = arith.constant 5.000000e-01 : f32
    %204 = vector.broadcast %cst_76 : f32 to vector<8x32xf32>
    %205 = arith.mulf %204, %203 : vector<8x32xf32>
    %cst_77 = arith.constant 5.000000e-01 : f32
    %206 = vector.broadcast %cst_77 : f32 to vector<8x32xf32>
    %207 = arith.addf %205, %206 : vector<8x32xf32>
    %208 = arith.mulf %197, %127 : vector<8x32xf32>
    %209 = arith.mulf %189, %199 : vector<8x32xf32>
    %210 = arith.addf %208, %209 : vector<8x32xf32>
    %211 = math.tanh %210 : vector<8x32xf32>
    %212 = arith.mulf %207, %211 : vector<8x32xf32>
    %c0_78 = arith.constant 0 : index
    %213 = arith.index_cast %177 : i32 to index
    %c0_79 = arith.constant 0 : index
    %214 = vector.load %arg6[%c0_78, %213, %c0_79] : memref<2x64x32xf32, #tpu.memory_space<vmem>>, vector<1x8x32xf32>
    %215 = vector.shape_cast %214 : vector<1x8x32xf32> to vector<8x32xf32>
    %216 = vector.shape_cast %212 : vector<8x32xf32> to vector<1x8x32xf32>
    tpu.vector_store %arg6[%c0_78, %213, %c0_79], %216 {strides = array<i32>} : memref<2x64x32xf32, #tpu.memory_space<vmem>>, vector<1x8x32xf32>,
    %c7_i32_80 = arith.constant 7 : i32
    %217 = arith.subi %c7_i32_80, %c2_i32 : i32
    %c8_i32_81 = arith.constant 8 : i32
    %218 = arith.muli %217, %c8_i32_81 : i32
    %219 = tpu.assume_multiple %218, 8 : i32
    %220 = arith.index_cast %219 : i32 to index
    %c128_82 = arith.constant 128 : index
    %221 = vector.load %arg7[%220, %c128_82] : memref<64x256xf32, #tpu.memory_space<vmem>>, vector<8x128xf32>
    %cst_83 = arith.constant dense<0.000000e+00> : vector<8x128xf32>
    %222 = tpu.matmul %171, %8, %cst_83 {dimension_numbers = #tpu.dot_dimension_numbers<[1], [0], [0], [1], [0, 0, 1, 1], [], []>} : vector<8x32xf32>, vector<32x128xf32>, vector<8x128xf32> -> vector<8x128xf32>
    %223 = arith.addf %221, %222 : vector<8x128xf32>
    %224 = vector.extract_strided_slice %223 {offsets = [0, 0], sizes = [8, 32], strides = [1, 1]} : vector<8x128xf32> to vector<8x32xf32>
    %cst_84 = arith.constant 5.000000e-01 : f32
    %225 = vector.broadcast %cst_84 : f32 to vector<8x32xf32>
    %226 = arith.mulf %225, %224 : vector<8x32xf32>
    %227 = math.tanh %226 : vector<8x32xf32>
    %cst_85 = arith.constant 5.000000e-01 : f32
    %228 = vector.broadcast %cst_85 : f32 to vector<8x32xf32>
    %229 = arith.mulf %228, %227 : vector<8x32xf32>
    %cst_86 = arith.constant 5.000000e-01 : f32
    %230 = vector.broadcast %cst_86 : f32 to vector<8x32xf32>
    %231 = arith.addf %229, %230 : vector<8x32xf32>
    %232 = vector.extract_strided_slice %223 {offsets = [0, 32], sizes = [8, 32], strides = [1, 1]} : vector<8x128xf32> to vector<8x32xf32>
    %cst_87 = arith.constant 5.000000e-01 : f32
    %233 = vector.broadcast %cst_87 : f32 to vector<8x32xf32>
    %234 = arith.mulf %233, %232 : vector<8x32xf32>
    %235 = math.tanh %234 : vector<8x32xf32>
    %cst_88 = arith.constant 5.000000e-01 : f32
    %236 = vector.broadcast %cst_88 : f32 to vector<8x32xf32>
    %237 = arith.mulf %236, %235 : vector<8x32xf32>
    %cst_89 = arith.constant 5.000000e-01 : f32
    %238 = vector.broadcast %cst_89 : f32 to vector<8x32xf32>
    %239 = arith.addf %237, %238 : vector<8x32xf32>
    %240 = vector.extract_strided_slice %223 {offsets = [0, 64], sizes = [8, 32], strides = [1, 1]} : vector<8x128xf32> to vector<8x32xf32>
    %241 = math.tanh %240 : vector<8x32xf32>
    %242 = vector.extract_strided_slice %223 {offsets = [0, 96], sizes = [8, 32], strides = [1, 1]} : vector<8x128xf32> to vector<8x32xf32>
    %cst_90 = arith.constant 5.000000e-01 : f32
    %243 = vector.broadcast %cst_90 : f32 to vector<8x32xf32>
    %244 = arith.mulf %243, %242 : vector<8x32xf32>
    %245 = math.tanh %244 : vector<8x32xf32>
    %cst_91 = arith.constant 5.000000e-01 : f32
    %246 = vector.broadcast %cst_91 : f32 to vector<8x32xf32>
    %247 = arith.mulf %246, %245 : vector<8x32xf32>
    %cst_92 = arith.constant 5.000000e-01 : f32
    %248 = vector.broadcast %cst_92 : f32 to vector<8x32xf32>
    %249 = arith.addf %247, %248 : vector<8x32xf32>
    %250 = arith.mulf %239, %169 : vector<8x32xf32>
    %251 = arith.mulf %231, %241 : vector<8x32xf32>
    %252 = arith.addf %250, %251 : vector<8x32xf32>
    %253 = math.tanh %252 : vector<8x32xf32>
    %254 = arith.mulf %249, %253 : vector<8x32xf32>
    %c1_93 = arith.constant 1 : index
    %255 = arith.index_cast %219 : i32 to index
    %c0_94 = arith.constant 0 : index
    %256 = vector.load %arg6[%c1_93, %255, %c0_94] : memref<2x64x32xf32, #tpu.memory_space<vmem>>, vector<1x8x32xf32>
    %257 = vector.shape_cast %256 : vector<1x8x32xf32> to vector<8x32xf32>
    %258 = vector.shape_cast %254 : vector<8x32xf32> to vector<1x8x32xf32>
    tpu.vector_store %arg6[%c1_93, %255, %c0_94], %258 {strides = array<i32>} : memref<2x64x32xf32, #tpu.memory_space<vmem>>, vector<1x8x32xf32>,
    %c3_i32 = arith.constant 3 : i32
    %c8_i32_95 = arith.constant 8 : i32
    %259 = arith.muli %c3_i32, %c8_i32_95 : i32
    %260 = tpu.assume_multiple %259, 8 : i32
    %261 = arith.index_cast %260 : i32 to index
    %c0_96 = arith.constant 0 : index
    %262 = vector.load %arg7[%261, %c0_96] : memref<64x256xf32, #tpu.memory_space<vmem>>, vector<8x128xf32>
    %cst_97 = arith.constant dense<0.000000e+00> : vector<8x128xf32>
    %263 = tpu.matmul %212, %7, %cst_97 {dimension_numbers = #tpu.dot_dimension_numbers<[1], [0], [0], [1], [0, 0, 1, 1], [], []>} : vector<8x32xf32>, vector<32x128xf32>, vector<8x128xf32> -> vector<8x128xf32>
    %264 = arith.addf %262, %263 : vector<8x128xf32>
    %265 = vector.extract_strided_slice %264 {offsets = [0, 0], sizes = [8, 32], strides = [1, 1]} : vector<8x128xf32> to vector<8x32xf32>
    %cst_98 = arith.constant 5.000000e-01 : f32
    %266 = vector.broadcast %cst_98 : f32 to vector<8x32xf32>
    %267 = arith.mulf %266, %265 : vector<8x32xf32>
    %268 = math.tanh %267 : vector<8x32xf32>
    %cst_99 = arith.constant 5.000000e-01 : f32
    %269 = vector.broadcast %cst_99 : f32 to vector<8x32xf32>
    %270 = arith.mulf %269, %268 : vector<8x32xf32>
    %cst_100 = arith.constant 5.000000e-01 : f32
    %271 = vector.broadcast %cst_100 : f32 to vector<8x32xf32>
    %272 = arith.addf %270, %271 : vector<8x32xf32>
    %273 = vector.extract_strided_slice %264 {offsets = [0, 32], sizes = [8, 32], strides = [1, 1]} : vector<8x128xf32> to vector<8x32xf32>
    %cst_101 = arith.constant 5.000000e-01 : f32
    %274 = vector.broadcast %cst_101 : f32 to vector<8x32xf32>
    %275 = arith.mulf %274, %273 : vector<8x32xf32>
    %276 = math.tanh %275 : vector<8x32xf32>
    %cst_102 = arith.constant 5.000000e-01 : f32
    %277 = vector.broadcast %cst_102 : f32 to vector<8x32xf32>
    %278 = arith.mulf %277, %276 : vector<8x32xf32>
    %cst_103 = arith.constant 5.000000e-01 : f32
    %279 = vector.broadcast %cst_103 : f32 to vector<8x32xf32>
    %280 = arith.addf %278, %279 : vector<8x32xf32>
    %281 = vector.extract_strided_slice %264 {offsets = [0, 64], sizes = [8, 32], strides = [1, 1]} : vector<8x128xf32> to vector<8x32xf32>
    %282 = math.tanh %281 : vector<8x32xf32>
    %283 = vector.extract_strided_slice %264 {offsets = [0, 96], sizes = [8, 32], strides = [1, 1]} : vector<8x128xf32> to vector<8x32xf32>
    %cst_104 = arith.constant 5.000000e-01 : f32
    %284 = vector.broadcast %cst_104 : f32 to vector<8x32xf32>
    %285 = arith.mulf %284, %283 : vector<8x32xf32>
    %286 = math.tanh %285 : vector<8x32xf32>
    %cst_105 = arith.constant 5.000000e-01 : f32
    %287 = vector.broadcast %cst_105 : f32 to vector<8x32xf32>
    %288 = arith.mulf %287, %286 : vector<8x32xf32>
    %cst_106 = arith.constant 5.000000e-01 : f32
    %289 = vector.broadcast %cst_106 : f32 to vector<8x32xf32>
    %290 = arith.addf %288, %289 : vector<8x32xf32>
    %291 = arith.mulf %280, %210 : vector<8x32xf32>
    %292 = arith.mulf %272, %282 : vector<8x32xf32>
    %293 = arith.addf %291, %292 : vector<8x32xf32>
    %294 = math.tanh %293 : vector<8x32xf32>
    %295 = arith.mulf %290, %294 : vector<8x32xf32>
    %c0_107 = arith.constant 0 : index
    %296 = arith.index_cast %260 : i32 to index
    %c0_108 = arith.constant 0 : index
    %297 = vector.load %arg6[%c0_107, %296, %c0_108] : memref<2x64x32xf32, #tpu.memory_space<vmem>>, vector<1x8x32xf32>
    %298 = vector.shape_cast %297 : vector<1x8x32xf32> to vector<8x32xf32>
    %299 = vector.shape_cast %295 : vector<8x32xf32> to vector<1x8x32xf32>
    tpu.vector_store %arg6[%c0_107, %296, %c0_108], %299 {strides = array<i32>} : memref<2x64x32xf32, #tpu.memory_space<vmem>>, vector<1x8x32xf32>,
    %c7_i32_109 = arith.constant 7 : i32
    %300 = arith.subi %c7_i32_109, %c3_i32 : i32
    %c8_i32_110 = arith.constant 8 : i32
    %301 = arith.muli %300, %c8_i32_110 : i32
    %302 = tpu.assume_multiple %301, 8 : i32
    %303 = arith.index_cast %302 : i32 to index
    %c128_111 = arith.constant 128 : index
    %304 = vector.load %arg7[%303, %c128_111] : memref<64x256xf32, #tpu.memory_space<vmem>>, vector<8x128xf32>
    %cst_112 = arith.constant dense<0.000000e+00> : vector<8x128xf32>
    %305 = tpu.matmul %254, %8, %cst_112 {dimension_numbers = #tpu.dot_dimension_numbers<[1], [0], [0], [1], [0, 0, 1, 1], [], []>} : vector<8x32xf32>, vector<32x128xf32>, vector<8x128xf32> -> vector<8x128xf32>
    %306 = arith.addf %304, %305 : vector<8x128xf32>
    %307 = vector.extract_strided_slice %306 {offsets = [0, 0], sizes = [8, 32], strides = [1, 1]} : vector<8x128xf32> to vector<8x32xf32>
    %cst_113 = arith.constant 5.000000e-01 : f32
    %308 = vector.broadcast %cst_113 : f32 to vector<8x32xf32>
    %309 = arith.mulf %308, %307 : vector<8x32xf32>
    %310 = math.tanh %309 : vector<8x32xf32>
    %cst_114 = arith.constant 5.000000e-01 : f32
    %311 = vector.broadcast %cst_114 : f32 to vector<8x32xf32>
    %312 = arith.mulf %311, %310 : vector<8x32xf32>
    %cst_115 = arith.constant 5.000000e-01 : f32
    %313 = vector.broadcast %cst_115 : f32 to vector<8x32xf32>
    %314 = arith.addf %312, %313 : vector<8x32xf32>
    %315 = vector.extract_strided_slice %306 {offsets = [0, 32], sizes = [8, 32], strides = [1, 1]} : vector<8x128xf32> to vector<8x32xf32>
    %cst_116 = arith.constant 5.000000e-01 : f32
    %316 = vector.broadcast %cst_116 : f32 to vector<8x32xf32>
    %317 = arith.mulf %316, %315 : vector<8x32xf32>
    %318 = math.tanh %317 : vector<8x32xf32>
    %cst_117 = arith.constant 5.000000e-01 : f32
    %319 = vector.broadcast %cst_117 : f32 to vector<8x32xf32>
    %320 = arith.mulf %319, %318 : vector<8x32xf32>
    %cst_118 = arith.constant 5.000000e-01 : f32
    %321 = vector.broadcast %cst_118 : f32 to vector<8x32xf32>
    %322 = arith.addf %320, %321 : vector<8x32xf32>
    %323 = vector.extract_strided_slice %306 {offsets = [0, 64], sizes = [8, 32], strides = [1, 1]} : vector<8x128xf32> to vector<8x32xf32>
    %324 = math.tanh %323 : vector<8x32xf32>
    %325 = vector.extract_strided_slice %306 {offsets = [0, 96], sizes = [8, 32], strides = [1, 1]} : vector<8x128xf32> to vector<8x32xf32>
    %cst_119 = arith.constant 5.000000e-01 : f32
    %326 = vector.broadcast %cst_119 : f32 to vector<8x32xf32>
    %327 = arith.mulf %326, %325 : vector<8x32xf32>
    %328 = math.tanh %327 : vector<8x32xf32>
    %cst_120 = arith.constant 5.000000e-01 : f32
    %329 = vector.broadcast %cst_120 : f32 to vector<8x32xf32>
    %330 = arith.mulf %329, %328 : vector<8x32xf32>
    %cst_121 = arith.constant 5.000000e-01 : f32
    %331 = vector.broadcast %cst_121 : f32 to vector<8x32xf32>
    %332 = arith.addf %330, %331 : vector<8x32xf32>
    %333 = arith.mulf %322, %252 : vector<8x32xf32>
    %334 = arith.mulf %314, %324 : vector<8x32xf32>
    %335 = arith.addf %333, %334 : vector<8x32xf32>
    %336 = math.tanh %335 : vector<8x32xf32>
    %337 = arith.mulf %332, %336 : vector<8x32xf32>
    %c1_122 = arith.constant 1 : index
    %338 = arith.index_cast %302 : i32 to index
    %c0_123 = arith.constant 0 : index
    %339 = vector.load %arg6[%c1_122, %338, %c0_123] : memref<2x64x32xf32, #tpu.memory_space<vmem>>, vector<1x8x32xf32>
    %340 = vector.shape_cast %339 : vector<1x8x32xf32> to vector<8x32xf32>
    %341 = vector.shape_cast %337 : vector<8x32xf32> to vector<1x8x32xf32>
    tpu.vector_store %arg6[%c1_122, %338, %c0_123], %341 {strides = array<i32>} : memref<2x64x32xf32, #tpu.memory_space<vmem>>, vector<1x8x32xf32>,
    %c4_i32 = arith.constant 4 : i32
    %c8_i32_124 = arith.constant 8 : i32
    %342 = arith.muli %c4_i32, %c8_i32_124 : i32
    %343 = tpu.assume_multiple %342, 8 : i32
    %344 = arith.index_cast %343 : i32 to index
    %c0_125 = arith.constant 0 : index
    %345 = vector.load %arg7[%344, %c0_125] : memref<64x256xf32, #tpu.memory_space<vmem>>, vector<8x128xf32>
    %cst_126 = arith.constant dense<0.000000e+00> : vector<8x128xf32>
    %346 = tpu.matmul %295, %7, %cst_126 {dimension_numbers = #tpu.dot_dimension_numbers<[1], [0], [0], [1], [0, 0, 1, 1], [], []>} : vector<8x32xf32>, vector<32x128xf32>, vector<8x128xf32> -> vector<8x128xf32>
    %347 = arith.addf %345, %346 : vector<8x128xf32>
    %348 = vector.extract_strided_slice %347 {offsets = [0, 0], sizes = [8, 32], strides = [1, 1]} : vector<8x128xf32> to vector<8x32xf32>
    %cst_127 = arith.constant 5.000000e-01 : f32
    %349 = vector.broadcast %cst_127 : f32 to vector<8x32xf32>
    %350 = arith.mulf %349, %348 : vector<8x32xf32>
    %351 = math.tanh %350 : vector<8x32xf32>
    %cst_128 = arith.constant 5.000000e-01 : f32
    %352 = vector.broadcast %cst_128 : f32 to vector<8x32xf32>
    %353 = arith.mulf %352, %351 : vector<8x32xf32>
    %cst_129 = arith.constant 5.000000e-01 : f32
    %354 = vector.broadcast %cst_129 : f32 to vector<8x32xf32>
    %355 = arith.addf %353, %354 : vector<8x32xf32>
    %356 = vector.extract_strided_slice %347 {offsets = [0, 32], sizes = [8, 32], strides = [1, 1]} : vector<8x128xf32> to vector<8x32xf32>
    %cst_130 = arith.constant 5.000000e-01 : f32
    %357 = vector.broadcast %cst_130 : f32 to vector<8x32xf32>
    %358 = arith.mulf %357, %356 : vector<8x32xf32>
    %359 = math.tanh %358 : vector<8x32xf32>
    %cst_131 = arith.constant 5.000000e-01 : f32
    %360 = vector.broadcast %cst_131 : f32 to vector<8x32xf32>
    %361 = arith.mulf %360, %359 : vector<8x32xf32>
    %cst_132 = arith.constant 5.000000e-01 : f32
    %362 = vector.broadcast %cst_132 : f32 to vector<8x32xf32>
    %363 = arith.addf %361, %362 : vector<8x32xf32>
    %364 = vector.extract_strided_slice %347 {offsets = [0, 64], sizes = [8, 32], strides = [1, 1]} : vector<8x128xf32> to vector<8x32xf32>
    %365 = math.tanh %364 : vector<8x32xf32>
    %366 = vector.extract_strided_slice %347 {offsets = [0, 96], sizes = [8, 32], strides = [1, 1]} : vector<8x128xf32> to vector<8x32xf32>
    %cst_133 = arith.constant 5.000000e-01 : f32
    %367 = vector.broadcast %cst_133 : f32 to vector<8x32xf32>
    %368 = arith.mulf %367, %366 : vector<8x32xf32>
    %369 = math.tanh %368 : vector<8x32xf32>
    %cst_134 = arith.constant 5.000000e-01 : f32
    %370 = vector.broadcast %cst_134 : f32 to vector<8x32xf32>
    %371 = arith.mulf %370, %369 : vector<8x32xf32>
    %cst_135 = arith.constant 5.000000e-01 : f32
    %372 = vector.broadcast %cst_135 : f32 to vector<8x32xf32>
    %373 = arith.addf %371, %372 : vector<8x32xf32>
    %374 = arith.mulf %363, %293 : vector<8x32xf32>
    %375 = arith.mulf %355, %365 : vector<8x32xf32>
    %376 = arith.addf %374, %375 : vector<8x32xf32>
    %377 = math.tanh %376 : vector<8x32xf32>
    %378 = arith.mulf %373, %377 : vector<8x32xf32>
    %c0_136 = arith.constant 0 : index
    %379 = arith.index_cast %343 : i32 to index
    %c0_137 = arith.constant 0 : index
    %380 = vector.load %arg6[%c0_136, %379, %c0_137] : memref<2x64x32xf32, #tpu.memory_space<vmem>>, vector<1x8x32xf32>
    %381 = vector.shape_cast %380 : vector<1x8x32xf32> to vector<8x32xf32>
    %382 = vector.shape_cast %378 : vector<8x32xf32> to vector<1x8x32xf32>
    tpu.vector_store %arg6[%c0_136, %379, %c0_137], %382 {strides = array<i32>} : memref<2x64x32xf32, #tpu.memory_space<vmem>>, vector<1x8x32xf32>,
    %c7_i32_138 = arith.constant 7 : i32
    %383 = arith.subi %c7_i32_138, %c4_i32 : i32
    %c8_i32_139 = arith.constant 8 : i32
    %384 = arith.muli %383, %c8_i32_139 : i32
    %385 = tpu.assume_multiple %384, 8 : i32
    %386 = arith.index_cast %385 : i32 to index
    %c128_140 = arith.constant 128 : index
    %387 = vector.load %arg7[%386, %c128_140] : memref<64x256xf32, #tpu.memory_space<vmem>>, vector<8x128xf32>
    %cst_141 = arith.constant dense<0.000000e+00> : vector<8x128xf32>
    %388 = tpu.matmul %337, %8, %cst_141 {dimension_numbers = #tpu.dot_dimension_numbers<[1], [0], [0], [1], [0, 0, 1, 1], [], []>} : vector<8x32xf32>, vector<32x128xf32>, vector<8x128xf32> -> vector<8x128xf32>
    %389 = arith.addf %387, %388 : vector<8x128xf32>
    %390 = vector.extract_strided_slice %389 {offsets = [0, 0], sizes = [8, 32], strides = [1, 1]} : vector<8x128xf32> to vector<8x32xf32>
    %cst_142 = arith.constant 5.000000e-01 : f32
    %391 = vector.broadcast %cst_142 : f32 to vector<8x32xf32>
    %392 = arith.mulf %391, %390 : vector<8x32xf32>
    %393 = math.tanh %392 : vector<8x32xf32>
    %cst_143 = arith.constant 5.000000e-01 : f32
    %394 = vector.broadcast %cst_143 : f32 to vector<8x32xf32>
    %395 = arith.mulf %394, %393 : vector<8x32xf32>
    %cst_144 = arith.constant 5.000000e-01 : f32
    %396 = vector.broadcast %cst_144 : f32 to vector<8x32xf32>
    %397 = arith.addf %395, %396 : vector<8x32xf32>
    %398 = vector.extract_strided_slice %389 {offsets = [0, 32], sizes = [8, 32], strides = [1, 1]} : vector<8x128xf32> to vector<8x32xf32>
    %cst_145 = arith.constant 5.000000e-01 : f32
    %399 = vector.broadcast %cst_145 : f32 to vector<8x32xf32>
    %400 = arith.mulf %399, %398 : vector<8x32xf32>
    %401 = math.tanh %400 : vector<8x32xf32>
    %cst_146 = arith.constant 5.000000e-01 : f32
    %402 = vector.broadcast %cst_146 : f32 to vector<8x32xf32>
    %403 = arith.mulf %402, %401 : vector<8x32xf32>
    %cst_147 = arith.constant 5.000000e-01 : f32
    %404 = vector.broadcast %cst_147 : f32 to vector<8x32xf32>
    %405 = arith.addf %403, %404 : vector<8x32xf32>
    %406 = vector.extract_strided_slice %389 {offsets = [0, 64], sizes = [8, 32], strides = [1, 1]} : vector<8x128xf32> to vector<8x32xf32>
    %407 = math.tanh %406 : vector<8x32xf32>
    %408 = vector.extract_strided_slice %389 {offsets = [0, 96], sizes = [8, 32], strides = [1, 1]} : vector<8x128xf32> to vector<8x32xf32>
    %cst_148 = arith.constant 5.000000e-01 : f32
    %409 = vector.broadcast %cst_148 : f32 to vector<8x32xf32>
    %410 = arith.mulf %409, %408 : vector<8x32xf32>
    %411 = math.tanh %410 : vector<8x32xf32>
    %cst_149 = arith.constant 5.000000e-01 : f32
    %412 = vector.broadcast %cst_149 : f32 to vector<8x32xf32>
    %413 = arith.mulf %412, %411 : vector<8x32xf32>
    %cst_150 = arith.constant 5.000000e-01 : f32
    %414 = vector.broadcast %cst_150 : f32 to vector<8x32xf32>
    %415 = arith.addf %413, %414 : vector<8x32xf32>
    %416 = arith.mulf %405, %335 : vector<8x32xf32>
    %417 = arith.mulf %397, %407 : vector<8x32xf32>
    %418 = arith.addf %416, %417 : vector<8x32xf32>
    %419 = math.tanh %418 : vector<8x32xf32>
    %420 = arith.mulf %415, %419 : vector<8x32xf32>
    %c1_151 = arith.constant 1 : index
    %421 = arith.index_cast %385 : i32 to index
    %c0_152 = arith.constant 0 : index
    %422 = vector.load %arg6[%c1_151, %421, %c0_152] : memref<2x64x32xf32, #tpu.memory_space<vmem>>, vector<1x8x32xf32>
    %423 = vector.shape_cast %422 : vector<1x8x32xf32> to vector<8x32xf32>
    %424 = vector.shape_cast %420 : vector<8x32xf32> to vector<1x8x32xf32>
    tpu.vector_store %arg6[%c1_151, %421, %c0_152], %424 {strides = array<i32>} : memref<2x64x32xf32, #tpu.memory_space<vmem>>, vector<1x8x32xf32>,
    %c5_i32 = arith.constant 5 : i32
    %c8_i32_153 = arith.constant 8 : i32
    %425 = arith.muli %c5_i32, %c8_i32_153 : i32
    %426 = tpu.assume_multiple %425, 8 : i32
    %427 = arith.index_cast %426 : i32 to index
    %c0_154 = arith.constant 0 : index
    %428 = vector.load %arg7[%427, %c0_154] : memref<64x256xf32, #tpu.memory_space<vmem>>, vector<8x128xf32>
    %cst_155 = arith.constant dense<0.000000e+00> : vector<8x128xf32>
    %429 = tpu.matmul %378, %7, %cst_155 {dimension_numbers = #tpu.dot_dimension_numbers<[1], [0], [0], [1], [0, 0, 1, 1], [], []>} : vector<8x32xf32>, vector<32x128xf32>, vector<8x128xf32> -> vector<8x128xf32>
    %430 = arith.addf %428, %429 : vector<8x128xf32>
    %431 = vector.extract_strided_slice %430 {offsets = [0, 0], sizes = [8, 32], strides = [1, 1]} : vector<8x128xf32> to vector<8x32xf32>
    %cst_156 = arith.constant 5.000000e-01 : f32
    %432 = vector.broadcast %cst_156 : f32 to vector<8x32xf32>
    %433 = arith.mulf %432, %431 : vector<8x32xf32>
    %434 = math.tanh %433 : vector<8x32xf32>
    %cst_157 = arith.constant 5.000000e-01 : f32
    %435 = vector.broadcast %cst_157 : f32 to vector<8x32xf32>
    %436 = arith.mulf %435, %434 : vector<8x32xf32>
    %cst_158 = arith.constant 5.000000e-01 : f32
    %437 = vector.broadcast %cst_158 : f32 to vector<8x32xf32>
    %438 = arith.addf %436, %437 : vector<8x32xf32>
    %439 = vector.extract_strided_slice %430 {offsets = [0, 32], sizes = [8, 32], strides = [1, 1]} : vector<8x128xf32> to vector<8x32xf32>
    %cst_159 = arith.constant 5.000000e-01 : f32
    %440 = vector.broadcast %cst_159 : f32 to vector<8x32xf32>
    %441 = arith.mulf %440, %439 : vector<8x32xf32>
    %442 = math.tanh %441 : vector<8x32xf32>
    %cst_160 = arith.constant 5.000000e-01 : f32
    %443 = vector.broadcast %cst_160 : f32 to vector<8x32xf32>
    %444 = arith.mulf %443, %442 : vector<8x32xf32>
    %cst_161 = arith.constant 5.000000e-01 : f32
    %445 = vector.broadcast %cst_161 : f32 to vector<8x32xf32>
    %446 = arith.addf %444, %445 : vector<8x32xf32>
    %447 = vector.extract_strided_slice %430 {offsets = [0, 64], sizes = [8, 32], strides = [1, 1]} : vector<8x128xf32> to vector<8x32xf32>
    %448 = math.tanh %447 : vector<8x32xf32>
    %449 = vector.extract_strided_slice %430 {offsets = [0, 96], sizes = [8, 32], strides = [1, 1]} : vector<8x128xf32> to vector<8x32xf32>
    %cst_162 = arith.constant 5.000000e-01 : f32
    %450 = vector.broadcast %cst_162 : f32 to vector<8x32xf32>
    %451 = arith.mulf %450, %449 : vector<8x32xf32>
    %452 = math.tanh %451 : vector<8x32xf32>
    %cst_163 = arith.constant 5.000000e-01 : f32
    %453 = vector.broadcast %cst_163 : f32 to vector<8x32xf32>
    %454 = arith.mulf %453, %452 : vector<8x32xf32>
    %cst_164 = arith.constant 5.000000e-01 : f32
    %455 = vector.broadcast %cst_164 : f32 to vector<8x32xf32>
    %456 = arith.addf %454, %455 : vector<8x32xf32>
    %457 = arith.mulf %446, %376 : vector<8x32xf32>
    %458 = arith.mulf %438, %448 : vector<8x32xf32>
    %459 = arith.addf %457, %458 : vector<8x32xf32>
    %460 = math.tanh %459 : vector<8x32xf32>
    %461 = arith.mulf %456, %460 : vector<8x32xf32>
    %c0_165 = arith.constant 0 : index
    %462 = arith.index_cast %426 : i32 to index
    %c0_166 = arith.constant 0 : index
    %463 = vector.load %arg6[%c0_165, %462, %c0_166] : memref<2x64x32xf32, #tpu.memory_space<vmem>>, vector<1x8x32xf32>
    %464 = vector.shape_cast %463 : vector<1x8x32xf32> to vector<8x32xf32>
    %465 = vector.shape_cast %461 : vector<8x32xf32> to vector<1x8x32xf32>
    tpu.vector_store %arg6[%c0_165, %462, %c0_166], %465 {strides = array<i32>} : memref<2x64x32xf32, #tpu.memory_space<vmem>>, vector<1x8x32xf32>,
    %c7_i32_167 = arith.constant 7 : i32
    %466 = arith.subi %c7_i32_167, %c5_i32 : i32
    %c8_i32_168 = arith.constant 8 : i32
    %467 = arith.muli %466, %c8_i32_168 : i32
    %468 = tpu.assume_multiple %467, 8 : i32
    %469 = arith.index_cast %468 : i32 to index
    %c128_169 = arith.constant 128 : index
    %470 = vector.load %arg7[%469, %c128_169] : memref<64x256xf32, #tpu.memory_space<vmem>>, vector<8x128xf32>
    %cst_170 = arith.constant dense<0.000000e+00> : vector<8x128xf32>
    %471 = tpu.matmul %420, %8, %cst_170 {dimension_numbers = #tpu.dot_dimension_numbers<[1], [0], [0], [1], [0, 0, 1, 1], [], []>} : vector<8x32xf32>, vector<32x128xf32>, vector<8x128xf32> -> vector<8x128xf32>
    %472 = arith.addf %470, %471 : vector<8x128xf32>
    %473 = vector.extract_strided_slice %472 {offsets = [0, 0], sizes = [8, 32], strides = [1, 1]} : vector<8x128xf32> to vector<8x32xf32>
    %cst_171 = arith.constant 5.000000e-01 : f32
    %474 = vector.broadcast %cst_171 : f32 to vector<8x32xf32>
    %475 = arith.mulf %474, %473 : vector<8x32xf32>
    %476 = math.tanh %475 : vector<8x32xf32>
    %cst_172 = arith.constant 5.000000e-01 : f32
    %477 = vector.broadcast %cst_172 : f32 to vector<8x32xf32>
    %478 = arith.mulf %477, %476 : vector<8x32xf32>
    %cst_173 = arith.constant 5.000000e-01 : f32
    %479 = vector.broadcast %cst_173 : f32 to vector<8x32xf32>
    %480 = arith.addf %478, %479 : vector<8x32xf32>
    %481 = vector.extract_strided_slice %472 {offsets = [0, 32], sizes = [8, 32], strides = [1, 1]} : vector<8x128xf32> to vector<8x32xf32>
    %cst_174 = arith.constant 5.000000e-01 : f32
    %482 = vector.broadcast %cst_174 : f32 to vector<8x32xf32>
    %483 = arith.mulf %482, %481 : vector<8x32xf32>
    %484 = math.tanh %483 : vector<8x32xf32>
    %cst_175 = arith.constant 5.000000e-01 : f32
    %485 = vector.broadcast %cst_175 : f32 to vector<8x32xf32>
    %486 = arith.mulf %485, %484 : vector<8x32xf32>
    %cst_176 = arith.constant 5.000000e-01 : f32
    %487 = vector.broadcast %cst_176 : f32 to vector<8x32xf32>
    %488 = arith.addf %486, %487 : vector<8x32xf32>
    %489 = vector.extract_strided_slice %472 {offsets = [0, 64], sizes = [8, 32], strides = [1, 1]} : vector<8x128xf32> to vector<8x32xf32>
    %490 = math.tanh %489 : vector<8x32xf32>
    %491 = vector.extract_strided_slice %472 {offsets = [0, 96], sizes = [8, 32], strides = [1, 1]} : vector<8x128xf32> to vector<8x32xf32>
    %cst_177 = arith.constant 5.000000e-01 : f32
    %492 = vector.broadcast %cst_177 : f32 to vector<8x32xf32>
    %493 = arith.mulf %492, %491 : vector<8x32xf32>
    %494 = math.tanh %493 : vector<8x32xf32>
    %cst_178 = arith.constant 5.000000e-01 : f32
    %495 = vector.broadcast %cst_178 : f32 to vector<8x32xf32>
    %496 = arith.mulf %495, %494 : vector<8x32xf32>
    %cst_179 = arith.constant 5.000000e-01 : f32
    %497 = vector.broadcast %cst_179 : f32 to vector<8x32xf32>
    %498 = arith.addf %496, %497 : vector<8x32xf32>
    %499 = arith.mulf %488, %418 : vector<8x32xf32>
    %500 = arith.mulf %480, %490 : vector<8x32xf32>
    %501 = arith.addf %499, %500 : vector<8x32xf32>
    %502 = math.tanh %501 : vector<8x32xf32>
    %503 = arith.mulf %498, %502 : vector<8x32xf32>
    %c1_180 = arith.constant 1 : index
    %504 = arith.index_cast %468 : i32 to index
    %c0_181 = arith.constant 0 : index
    %505 = vector.load %arg6[%c1_180, %504, %c0_181] : memref<2x64x32xf32, #tpu.memory_space<vmem>>, vector<1x8x32xf32>
    %506 = vector.shape_cast %505 : vector<1x8x32xf32> to vector<8x32xf32>
    %507 = vector.shape_cast %503 : vector<8x32xf32> to vector<1x8x32xf32>
    tpu.vector_store %arg6[%c1_180, %504, %c0_181], %507 {strides = array<i32>} : memref<2x64x32xf32, #tpu.memory_space<vmem>>, vector<1x8x32xf32>,
    %c6_i32 = arith.constant 6 : i32
    %c8_i32_182 = arith.constant 8 : i32
    %508 = arith.muli %c6_i32, %c8_i32_182 : i32
    %509 = tpu.assume_multiple %508, 8 : i32
    %510 = arith.index_cast %509 : i32 to index
    %c0_183 = arith.constant 0 : index
    %511 = vector.load %arg7[%510, %c0_183] : memref<64x256xf32, #tpu.memory_space<vmem>>, vector<8x128xf32>
    %cst_184 = arith.constant dense<0.000000e+00> : vector<8x128xf32>
    %512 = tpu.matmul %461, %7, %cst_184 {dimension_numbers = #tpu.dot_dimension_numbers<[1], [0], [0], [1], [0, 0, 1, 1], [], []>} : vector<8x32xf32>, vector<32x128xf32>, vector<8x128xf32> -> vector<8x128xf32>
    %513 = arith.addf %511, %512 : vector<8x128xf32>
    %514 = vector.extract_strided_slice %513 {offsets = [0, 0], sizes = [8, 32], strides = [1, 1]} : vector<8x128xf32> to vector<8x32xf32>
    %cst_185 = arith.constant 5.000000e-01 : f32
    %515 = vector.broadcast %cst_185 : f32 to vector<8x32xf32>
    %516 = arith.mulf %515, %514 : vector<8x32xf32>
    %517 = math.tanh %516 : vector<8x32xf32>
    %cst_186 = arith.constant 5.000000e-01 : f32
    %518 = vector.broadcast %cst_186 : f32 to vector<8x32xf32>
    %519 = arith.mulf %518, %517 : vector<8x32xf32>
    %cst_187 = arith.constant 5.000000e-01 : f32
    %520 = vector.broadcast %cst_187 : f32 to vector<8x32xf32>
    %521 = arith.addf %519, %520 : vector<8x32xf32>
    %522 = vector.extract_strided_slice %513 {offsets = [0, 32], sizes = [8, 32], strides = [1, 1]} : vector<8x128xf32> to vector<8x32xf32>
    %cst_188 = arith.constant 5.000000e-01 : f32
    %523 = vector.broadcast %cst_188 : f32 to vector<8x32xf32>
    %524 = arith.mulf %523, %522 : vector<8x32xf32>
    %525 = math.tanh %524 : vector<8x32xf32>
    %cst_189 = arith.constant 5.000000e-01 : f32
    %526 = vector.broadcast %cst_189 : f32 to vector<8x32xf32>
    %527 = arith.mulf %526, %525 : vector<8x32xf32>
    %cst_190 = arith.constant 5.000000e-01 : f32
    %528 = vector.broadcast %cst_190 : f32 to vector<8x32xf32>
    %529 = arith.addf %527, %528 : vector<8x32xf32>
    %530 = vector.extract_strided_slice %513 {offsets = [0, 64], sizes = [8, 32], strides = [1, 1]} : vector<8x128xf32> to vector<8x32xf32>
    %531 = math.tanh %530 : vector<8x32xf32>
    %532 = vector.extract_strided_slice %513 {offsets = [0, 96], sizes = [8, 32], strides = [1, 1]} : vector<8x128xf32> to vector<8x32xf32>
    %cst_191 = arith.constant 5.000000e-01 : f32
    %533 = vector.broadcast %cst_191 : f32 to vector<8x32xf32>
    %534 = arith.mulf %533, %532 : vector<8x32xf32>
    %535 = math.tanh %534 : vector<8x32xf32>
    %cst_192 = arith.constant 5.000000e-01 : f32
    %536 = vector.broadcast %cst_192 : f32 to vector<8x32xf32>
    %537 = arith.mulf %536, %535 : vector<8x32xf32>
    %cst_193 = arith.constant 5.000000e-01 : f32
    %538 = vector.broadcast %cst_193 : f32 to vector<8x32xf32>
    %539 = arith.addf %537, %538 : vector<8x32xf32>
    %540 = arith.mulf %529, %459 : vector<8x32xf32>
    %541 = arith.mulf %521, %531 : vector<8x32xf32>
    %542 = arith.addf %540, %541 : vector<8x32xf32>
    %543 = math.tanh %542 : vector<8x32xf32>
    %544 = arith.mulf %539, %543 : vector<8x32xf32>
    %c0_194 = arith.constant 0 : index
    %545 = arith.index_cast %509 : i32 to index
    %c0_195 = arith.constant 0 : index
    %546 = vector.load %arg6[%c0_194, %545, %c0_195] : memref<2x64x32xf32, #tpu.memory_space<vmem>>, vector<1x8x32xf32>
    %547 = vector.shape_cast %546 : vector<1x8x32xf32> to vector<8x32xf32>
    %548 = vector.shape_cast %544 : vector<8x32xf32> to vector<1x8x32xf32>
    tpu.vector_store %arg6[%c0_194, %545, %c0_195], %548 {strides = array<i32>} : memref<2x64x32xf32, #tpu.memory_space<vmem>>, vector<1x8x32xf32>,
    %c7_i32_196 = arith.constant 7 : i32
    %549 = arith.subi %c7_i32_196, %c6_i32 : i32
    %c8_i32_197 = arith.constant 8 : i32
    %550 = arith.muli %549, %c8_i32_197 : i32
    %551 = tpu.assume_multiple %550, 8 : i32
    %552 = arith.index_cast %551 : i32 to index
    %c128_198 = arith.constant 128 : index
    %553 = vector.load %arg7[%552, %c128_198] : memref<64x256xf32, #tpu.memory_space<vmem>>, vector<8x128xf32>
    %cst_199 = arith.constant dense<0.000000e+00> : vector<8x128xf32>
    %554 = tpu.matmul %503, %8, %cst_199 {dimension_numbers = #tpu.dot_dimension_numbers<[1], [0], [0], [1], [0, 0, 1, 1], [], []>} : vector<8x32xf32>, vector<32x128xf32>, vector<8x128xf32> -> vector<8x128xf32>
    %555 = arith.addf %553, %554 : vector<8x128xf32>
    %556 = vector.extract_strided_slice %555 {offsets = [0, 0], sizes = [8, 32], strides = [1, 1]} : vector<8x128xf32> to vector<8x32xf32>
    %cst_200 = arith.constant 5.000000e-01 : f32
    %557 = vector.broadcast %cst_200 : f32 to vector<8x32xf32>
    %558 = arith.mulf %557, %556 : vector<8x32xf32>
    %559 = math.tanh %558 : vector<8x32xf32>
    %cst_201 = arith.constant 5.000000e-01 : f32
    %560 = vector.broadcast %cst_201 : f32 to vector<8x32xf32>
    %561 = arith.mulf %560, %559 : vector<8x32xf32>
    %cst_202 = arith.constant 5.000000e-01 : f32
    %562 = vector.broadcast %cst_202 : f32 to vector<8x32xf32>
    %563 = arith.addf %561, %562 : vector<8x32xf32>
    %564 = vector.extract_strided_slice %555 {offsets = [0, 32], sizes = [8, 32], strides = [1, 1]} : vector<8x128xf32> to vector<8x32xf32>
    %cst_203 = arith.constant 5.000000e-01 : f32
    %565 = vector.broadcast %cst_203 : f32 to vector<8x32xf32>
    %566 = arith.mulf %565, %564 : vector<8x32xf32>
    %567 = math.tanh %566 : vector<8x32xf32>
    %cst_204 = arith.constant 5.000000e-01 : f32
    %568 = vector.broadcast %cst_204 : f32 to vector<8x32xf32>
    %569 = arith.mulf %568, %567 : vector<8x32xf32>
    %cst_205 = arith.constant 5.000000e-01 : f32
    %570 = vector.broadcast %cst_205 : f32 to vector<8x32xf32>
    %571 = arith.addf %569, %570 : vector<8x32xf32>
    %572 = vector.extract_strided_slice %555 {offsets = [0, 64], sizes = [8, 32], strides = [1, 1]} : vector<8x128xf32> to vector<8x32xf32>
    %573 = math.tanh %572 : vector<8x32xf32>
    %574 = vector.extract_strided_slice %555 {offsets = [0, 96], sizes = [8, 32], strides = [1, 1]} : vector<8x128xf32> to vector<8x32xf32>
    %cst_206 = arith.constant 5.000000e-01 : f32
    %575 = vector.broadcast %cst_206 : f32 to vector<8x32xf32>
    %576 = arith.mulf %575, %574 : vector<8x32xf32>
    %577 = math.tanh %576 : vector<8x32xf32>
    %cst_207 = arith.constant 5.000000e-01 : f32
    %578 = vector.broadcast %cst_207 : f32 to vector<8x32xf32>
    %579 = arith.mulf %578, %577 : vector<8x32xf32>
    %cst_208 = arith.constant 5.000000e-01 : f32
    %580 = vector.broadcast %cst_208 : f32 to vector<8x32xf32>
    %581 = arith.addf %579, %580 : vector<8x32xf32>
    %582 = arith.mulf %571, %501 : vector<8x32xf32>
    %583 = arith.mulf %563, %573 : vector<8x32xf32>
    %584 = arith.addf %582, %583 : vector<8x32xf32>
    %585 = math.tanh %584 : vector<8x32xf32>
    %586 = arith.mulf %581, %585 : vector<8x32xf32>
    %c1_209 = arith.constant 1 : index
    %587 = arith.index_cast %551 : i32 to index
    %c0_210 = arith.constant 0 : index
    %588 = vector.load %arg6[%c1_209, %587, %c0_210] : memref<2x64x32xf32, #tpu.memory_space<vmem>>, vector<1x8x32xf32>
    %589 = vector.shape_cast %588 : vector<1x8x32xf32> to vector<8x32xf32>
    %590 = vector.shape_cast %586 : vector<8x32xf32> to vector<1x8x32xf32>
    tpu.vector_store %arg6[%c1_209, %587, %c0_210], %590 {strides = array<i32>} : memref<2x64x32xf32, #tpu.memory_space<vmem>>, vector<1x8x32xf32>,
    %c7_i32_211 = arith.constant 7 : i32
    %c8_i32_212 = arith.constant 8 : i32
    %591 = arith.muli %c7_i32_211, %c8_i32_212 : i32
    %592 = tpu.assume_multiple %591, 8 : i32
    %593 = arith.index_cast %592 : i32 to index
    %c0_213 = arith.constant 0 : index
    %594 = vector.load %arg7[%593, %c0_213] : memref<64x256xf32, #tpu.memory_space<vmem>>, vector<8x128xf32>
    %cst_214 = arith.constant dense<0.000000e+00> : vector<8x128xf32>
    %595 = tpu.matmul %544, %7, %cst_214 {dimension_numbers = #tpu.dot_dimension_numbers<[1], [0], [0], [1], [0, 0, 1, 1], [], []>} : vector<8x32xf32>, vector<32x128xf32>, vector<8x128xf32> -> vector<8x128xf32>
    %596 = arith.addf %594, %595 : vector<8x128xf32>
    %597 = vector.extract_strided_slice %596 {offsets = [0, 0], sizes = [8, 32], strides = [1, 1]} : vector<8x128xf32> to vector<8x32xf32>
    %cst_215 = arith.constant 5.000000e-01 : f32
    %598 = vector.broadcast %cst_215 : f32 to vector<8x32xf32>
    %599 = arith.mulf %598, %597 : vector<8x32xf32>
    %600 = math.tanh %599 : vector<8x32xf32>
    %cst_216 = arith.constant 5.000000e-01 : f32
    %601 = vector.broadcast %cst_216 : f32 to vector<8x32xf32>
    %602 = arith.mulf %601, %600 : vector<8x32xf32>
    %cst_217 = arith.constant 5.000000e-01 : f32
    %603 = vector.broadcast %cst_217 : f32 to vector<8x32xf32>
    %604 = arith.addf %602, %603 : vector<8x32xf32>
    %605 = vector.extract_strided_slice %596 {offsets = [0, 32], sizes = [8, 32], strides = [1, 1]} : vector<8x128xf32> to vector<8x32xf32>
    %cst_218 = arith.constant 5.000000e-01 : f32
    %606 = vector.broadcast %cst_218 : f32 to vector<8x32xf32>
    %607 = arith.mulf %606, %605 : vector<8x32xf32>
    %608 = math.tanh %607 : vector<8x32xf32>
    %cst_219 = arith.constant 5.000000e-01 : f32
    %609 = vector.broadcast %cst_219 : f32 to vector<8x32xf32>
    %610 = arith.mulf %609, %608 : vector<8x32xf32>
    %cst_220 = arith.constant 5.000000e-01 : f32
    %611 = vector.broadcast %cst_220 : f32 to vector<8x32xf32>
    %612 = arith.addf %610, %611 : vector<8x32xf32>
    %613 = vector.extract_strided_slice %596 {offsets = [0, 64], sizes = [8, 32], strides = [1, 1]} : vector<8x128xf32> to vector<8x32xf32>
    %614 = math.tanh %613 : vector<8x32xf32>
    %615 = vector.extract_strided_slice %596 {offsets = [0, 96], sizes = [8, 32], strides = [1, 1]} : vector<8x128xf32> to vector<8x32xf32>
    %cst_221 = arith.constant 5.000000e-01 : f32
    %616 = vector.broadcast %cst_221 : f32 to vector<8x32xf32>
    %617 = arith.mulf %616, %615 : vector<8x32xf32>
    %618 = math.tanh %617 : vector<8x32xf32>
    %cst_222 = arith.constant 5.000000e-01 : f32
    %619 = vector.broadcast %cst_222 : f32 to vector<8x32xf32>
    %620 = arith.mulf %619, %618 : vector<8x32xf32>
    %cst_223 = arith.constant 5.000000e-01 : f32
    %621 = vector.broadcast %cst_223 : f32 to vector<8x32xf32>
    %622 = arith.addf %620, %621 : vector<8x32xf32>
    %623 = arith.mulf %612, %542 : vector<8x32xf32>
    %624 = arith.mulf %604, %614 : vector<8x32xf32>
    %625 = arith.addf %623, %624 : vector<8x32xf32>
    %626 = math.tanh %625 : vector<8x32xf32>
    %627 = arith.mulf %622, %626 : vector<8x32xf32>
    %c0_224 = arith.constant 0 : index
    %628 = arith.index_cast %592 : i32 to index
    %c0_225 = arith.constant 0 : index
    %629 = vector.load %arg6[%c0_224, %628, %c0_225] : memref<2x64x32xf32, #tpu.memory_space<vmem>>, vector<1x8x32xf32>
    %630 = vector.shape_cast %629 : vector<1x8x32xf32> to vector<8x32xf32>
    %631 = vector.shape_cast %627 : vector<8x32xf32> to vector<1x8x32xf32>
    tpu.vector_store %arg6[%c0_224, %628, %c0_225], %631 {strides = array<i32>} : memref<2x64x32xf32, #tpu.memory_space<vmem>>, vector<1x8x32xf32>,
    %c7_i32_226 = arith.constant 7 : i32
    %632 = arith.subi %c7_i32_226, %c7_i32_211 : i32
    %c8_i32_227 = arith.constant 8 : i32
    %633 = arith.muli %632, %c8_i32_227 : i32
    %634 = tpu.assume_multiple %633, 8 : i32
    %635 = arith.index_cast %634 : i32 to index
    %c128_228 = arith.constant 128 : index
    %636 = vector.load %arg7[%635, %c128_228] : memref<64x256xf32, #tpu.memory_space<vmem>>, vector<8x128xf32>
    %cst_229 = arith.constant dense<0.000000e+00> : vector<8x128xf32>
    %637 = tpu.matmul %586, %8, %cst_229 {dimension_numbers = #tpu.dot_dimension_numbers<[1], [0], [0], [1], [0, 0, 1, 1], [], []>} : vector<8x32xf32>, vector<32x128xf32>, vector<8x128xf32> -> vector<8x128xf32>
    %638 = arith.addf %636, %637 : vector<8x128xf32>
    %639 = vector.extract_strided_slice %638 {offsets = [0, 0], sizes = [8, 32], strides = [1, 1]} : vector<8x128xf32> to vector<8x32xf32>
    %cst_230 = arith.constant 5.000000e-01 : f32
    %640 = vector.broadcast %cst_230 : f32 to vector<8x32xf32>
    %641 = arith.mulf %640, %639 : vector<8x32xf32>
    %642 = math.tanh %641 : vector<8x32xf32>
    %cst_231 = arith.constant 5.000000e-01 : f32
    %643 = vector.broadcast %cst_231 : f32 to vector<8x32xf32>
    %644 = arith.mulf %643, %642 : vector<8x32xf32>
    %cst_232 = arith.constant 5.000000e-01 : f32
    %645 = vector.broadcast %cst_232 : f32 to vector<8x32xf32>
    %646 = arith.addf %644, %645 : vector<8x32xf32>
    %647 = vector.extract_strided_slice %638 {offsets = [0, 32], sizes = [8, 32], strides = [1, 1]} : vector<8x128xf32> to vector<8x32xf32>
    %cst_233 = arith.constant 5.000000e-01 : f32
    %648 = vector.broadcast %cst_233 : f32 to vector<8x32xf32>
    %649 = arith.mulf %648, %647 : vector<8x32xf32>
    %650 = math.tanh %649 : vector<8x32xf32>
    %cst_234 = arith.constant 5.000000e-01 : f32
    %651 = vector.broadcast %cst_234 : f32 to vector<8x32xf32>
    %652 = arith.mulf %651, %650 : vector<8x32xf32>
    %cst_235 = arith.constant 5.000000e-01 : f32
    %653 = vector.broadcast %cst_235 : f32 to vector<8x32xf32>
    %654 = arith.addf %652, %653 : vector<8x32xf32>
    %655 = vector.extract_strided_slice %638 {offsets = [0, 64], sizes = [8, 32], strides = [1, 1]} : vector<8x128xf32> to vector<8x32xf32>
    %656 = math.tanh %655 : vector<8x32xf32>
    %657 = vector.extract_strided_slice %638 {offsets = [0, 96], sizes = [8, 32], strides = [1, 1]} : vector<8x128xf32> to vector<8x32xf32>
    %cst_236 = arith.constant 5.000000e-01 : f32
    %658 = vector.broadcast %cst_236 : f32 to vector<8x32xf32>
    %659 = arith.mulf %658, %657 : vector<8x32xf32>
    %660 = math.tanh %659 : vector<8x32xf32>
    %cst_237 = arith.constant 5.000000e-01 : f32
    %661 = vector.broadcast %cst_237 : f32 to vector<8x32xf32>
    %662 = arith.mulf %661, %660 : vector<8x32xf32>
    %cst_238 = arith.constant 5.000000e-01 : f32
    %663 = vector.broadcast %cst_238 : f32 to vector<8x32xf32>
    %664 = arith.addf %662, %663 : vector<8x32xf32>
    %665 = arith.mulf %654, %584 : vector<8x32xf32>
    %666 = arith.mulf %646, %656 : vector<8x32xf32>
    %667 = arith.addf %665, %666 : vector<8x32xf32>
    %668 = math.tanh %667 : vector<8x32xf32>
    %669 = arith.mulf %664, %668 : vector<8x32xf32>
    %c1_239 = arith.constant 1 : index
    %670 = arith.index_cast %634 : i32 to index
    %c0_240 = arith.constant 0 : index
    %671 = vector.load %arg6[%c1_239, %670, %c0_240] : memref<2x64x32xf32, #tpu.memory_space<vmem>>, vector<1x8x32xf32>
    %672 = vector.shape_cast %671 : vector<1x8x32xf32> to vector<8x32xf32>
    %673 = vector.shape_cast %669 : vector<8x32xf32> to vector<1x8x32xf32>
    tpu.vector_store %arg6[%c1_239, %670, %c0_240], %673 {strides = array<i32>} : memref<2x64x32xf32, #tpu.memory_space<vmem>>, vector<1x8x32xf32>,
    %c8_i32_241 = arith.constant 8 : i32
    return
  }
  func.func @transform_0(%arg0: i32) -> (i32, i32) {
    %c0_i32 = arith.constant 0 : i32
    %c0_i32_0 = arith.constant 0 : i32
    %c0_i32_1 = arith.constant 0 : i32
    return %c0_i32, %c0_i32_0 : i32, i32
  }
  func.func @transform_1(%arg0: i32) -> (i32, i32) {
    %c0_i32 = arith.constant 0 : i32
    %c0_i32_0 = arith.constant 0 : i32
    %c0_i32_1 = arith.constant 0 : i32
    return %c0_i32, %c0_i32_0 : i32, i32
  }
  func.func @transform_2(%arg0: i32) -> (i32, i32) {
    %c0_i32 = arith.constant 0 : i32
    %c0_i32_0 = arith.constant 0 : i32
    %c0_i32_1 = arith.constant 0 : i32
    return %c0_i32, %c0_i32_0 : i32, i32
  }
  func.func @transform_3(%arg0: i32) -> (i32, i32) {
    %c0_i32 = arith.constant 0 : i32
    %c0_i32_0 = arith.constant 0 : i32
    %c0_i32_1 = arith.constant 0 : i32
    return %c0_i32, %c0_i32_0 : i32, i32
  }
  func.func @transform_4(%arg0: i32) -> (i32, i32) {
    %c0_i32 = arith.constant 0 : i32
    %c0_i32_0 = arith.constant 0 : i32
    %c0_i32_1 = arith.constant 0 : i32
    return %c0_i32, %c0_i32_0 : i32, i32
  }
  func.func @transform_5(%arg0: i32) -> (i32, i32, i32) {
    %c0_i32 = arith.constant 0 : i32
    %c0_i32_0 = arith.constant 0 : i32
    %c0_i32_1 = arith.constant 0 : i32
    %c0_i32_2 = arith.constant 0 : i32
    return %c0_i32, %c0_i32_0, %c0_i32_1 : i32, i32, i32
  }
}

</mosaic_0001>

<llo_original>
// kernel: bilstm_encoder_forward.3
$region0: #{bilstm_encoder_forward.3}
  #allocation0 [shape = 'u32[]', space=smem, size = 0x4, offset = 0x4, fixed_abs, tag = 'smem constant byte address 0x4 - core index']
  #allocation1 [shape = 'u32[144,128]{1,0:T(1,128)}', space=vmem, size = 0x12000, scoped, tag = 'internal scratch']
  #allocation2 [shape = 'f32[64,256]{1,0:T(8,128)}', space=vmem, size = 0x10000, scoped, tag = 'scratch operand']
  %s0 = inlined_call_operand.vmem [shape: f32[64,64], index: 0, kind: input, shape index: {}]
  %s1 = inlined_call_operand.vmem [shape: f32[64,256], index: 1, kind: input, shape index: {}]
  %s2 = inlined_call_operand.vmem [shape: f32[1,256], index: 2, kind: input, shape index: {}]
  %s3 = inlined_call_operand.vmem [shape: f32[32,128], index: 3, kind: input, shape index: {}]
  %s4 = inlined_call_operand.vmem [shape: f32[32,128], index: 4, kind: input, shape index: {}]
  %s5 = inlined_call_operand.vmem [shape: f32[2,64,32], index: 5, kind: output, shape index: {}]
  %s6 = sld [smem:[#allocation0]]
  $region30: #{bilstm_encoder_forward.3} parent=0
    _
  %s8 = ssub.s32 1, %s6
  %s9 = scalar_select 0, %s8, %s6
  // Predicated region
  $region2: #{bilstm_encoder_forward.3} parent=0 // pred_check
    _
  $region3: #{bilstm_encoder_forward.3} parent=0 // pred_check_branch
    %11 = sbr.rel (0) target = $region5
  $region4: #{bilstm_encoder_forward.3} parent=0 // pred_region
    _
  $region5: #{bilstm_encoder_forward.3} parent=0 // pred_fallthru
    _
  // Predicated region
  $region6: #{bilstm_encoder_forward.3} parent=0 // pred_check
    _
  $region7: #{bilstm_encoder_forward.3} parent=0 // pred_check_branch
    %13 = sbr.rel (0) target = $region9
  $region8: #{bilstm_encoder_forward.3} parent=0 // pred_region
    _
  $region9: #{bilstm_encoder_forward.3} parent=0 // pred_fallthru
    _
  // Predicated region
  $region10: #{bilstm_encoder_forward.3} parent=0 // pred_check
    _
  $region11: #{bilstm_encoder_forward.3} parent=0 // pred_check_branch
    %15 = sbr.rel (0) target = $region13
  $region12: #{bilstm_encoder_forward.3} parent=0 // pred_region
    _
  $region13: #{bilstm_encoder_forward.3} parent=0 // pred_fallthru
    _
  // Predicated region
  $region14: #{bilstm_encoder_forward.3} parent=0 // pred_check
    _
  $region15: #{bilstm_encoder_forward.3} parent=0 // pred_check_branch
    %17 = sbr.rel (0) target = $region17
  $region16: #{bilstm_encoder_forward.3} parent=0 // pred_region
    _
  $region17: #{bilstm_encoder_forward.3} parent=0 // pred_fallthru
    _
  // Predicated region
  $region18: #{bilstm_encoder_forward.3} parent=0 // pred_check
    _
  $region19: #{bilstm_encoder_forward.3} parent=0 // pred_check_branch
    %19 = sbr.rel (0) target = $region21
  $region20: #{bilstm_encoder_forward.3} parent=0 // pred_region
    _
  $region21: #{bilstm_encoder_forward.3} parent=0 // pred_fallthru
    _
  %v20 = vld [vmem:[%s0] sm:$0xff]
  %v21 = vld [vmem:[%s0 + $0x8] sm:$0xff]
  %v22 = vld [vmem:[%s0 + $0x10] sm:$0xff]
  %v23 = vld [vmem:[%s0 + $0x18] sm:$0xff]
  %v24 = vld [vmem:[%s0 + $0x20] sm:$0xff]
  %v25 = vld [vmem:[%s0 + $0x28] sm:$0xff]
  %v26 = vld [vmem:[%s0 + $0x30] sm:$0xff]
  %v27 = vld [vmem:[%s0 + $0x38] sm:$0xff]
  %v28 = vld [vmem:[%s1] sm:$0xff]
  %v29 = vld [vmem:[%s1 + $0x8] sm:$0xff]
  %v30 = vld [vmem:[%s1 + $0x10] sm:$0xff]
  %v31 = vld [vmem:[%s1 + $0x18] sm:$0xff]
  %v32 = vld [vmem:[%s1 + $0x20] sm:$0xff]
  %v33 = vld [vmem:[%s1 + $0x28] sm:$0xff]
  %v34 = vld [vmem:[%s1 + $0x30] sm:$0xff]
  %v35 = vld [vmem:[%s1 + $0x38] sm:$0xff]
  %v36 = vld [vmem:[%s1 + $0x40] sm:$0xff]
  %v37 = vld [vmem:[%s1 + $0x48] sm:$0xff]
  %v38 = vld [vmem:[%s1 + $0x50] sm:$0xff]
  %v39 = vld [vmem:[%s1 + $0x58] sm:$0xff]
  %v40 = vld [vmem:[%s1 + $0x60] sm:$0xff]
  %v41 = vld [vmem:[%s1 + $0x68] sm:$0xff]
  %v42 = vld [vmem:[%s1 + $0x70] sm:$0xff]
  %v43 = vld [vmem:[%s1 + $0x78] sm:$0xff]
  %v44 = vld [vmem:[%s2] sm:$0x3]
  %v46 = vlaneseq
  %v47 = vshrl.u32 %v46, 7
  %v48 = vsub.s32 0, %v47
  %v49 = vrot.slane %v44, %v48
  %v50 = vlaneseq
  %v51 = vshrl.u32 %v50, 7
  %v52 = vsub.s32 1, %v51
  %v53 = vrot.slane %v44, %v52
  %vm56 = vcmask 523264
  %v58 = vsel %vm56, %v20, 0
  %v61 = vsel %vm56, %v21, 0
  %v64 = vsel %vm56, %v22, 0
  %v67 = vsel %vm56, %v23, 0
  %v70 = vsel %vm56, %v24, 0
  %v73 = vsel %vm56, %v25, 0
  %v76 = vsel %vm56, %v26, 0
  %v79 = vsel %vm56, %v27, 0
  %81 = vmatprep.subr.mxu0 0.0
  %82 = vmatpush1.msra.mxu0 0.0
  %83 = vmatprep.subr.mxu0 0.0
  %84 = vmatpush1.msra.mxu0 0.0
  %85 = vmatprep.subr.mxu0 0.0
  %86 = vmatpush1.msra.mxu0 0.0
  %87 = vmatprep.subr.mxu0 0.0
  %88 = vmatpush1.msra.mxu0 0.0
  %89 = vmatprep.subr.mxu0 0.0
  %90 = vmatpush1.msra.mxu0 0.0
  %91 = vmatprep.subr.mxu0 0.0
  %92 = vmatpush1.msra.mxu0 0.0
  %93 = vmatprep.subr.mxu0 0.0
  %94 = vmatpush1.msra.mxu0 0.0
  %95 = vmatprep.subr.mxu0 0.0
  %96 = vmatpush1.msra.mxu0 0.0
  %97 = vmatprep.subr.mxu0 %v43
  %98 = vmatpush1.msra.mxu0 %v42
  %99 = vmatprep.subr.mxu0 %v41
  %100 = vmatpush1.msra.mxu0 %v40
  %101 = vmatprep.subr.mxu0 %v39
  %102 = vmatpush1.msra.mxu0 %v38
  %103 = vmatprep.subr.mxu0 %v37
  %104 = vmatpush1.msra.mxu0 %v36
  %105 = vmatprep.subr.mxu0 %v35
  %106 = vmatpush1.msra.mxu0 %v34
  %107 = vmatprep.subr.mxu0 %v33
  %108 = vmatpush1.msra.mxu0 %v32
  %109 = vmatprep.subr.mxu0 %v31
  %110 = vmatpush1.msra.mxu0 %v30
  %111 = vmatprep.subr.mxu0 %v29
  %112 = vmatpush1.msra.mxu0 %v28
  %113 = vmatprep.subr.mxu0 0.0
  %114 = vmatpush2.msra.mxu0 0.0
  %115 = vmatprep.subr.mxu0 0.0
  %116 = vmatpush2.msra.mxu0 0.0
  %117 = vmatprep.subr.mxu0 0.0
  %118 = vmatpush2.msra.mxu0 0.0
  %119 = vmatprep.subr.mxu0 0.0
  %120 = vmatpush2.msra.mxu0 0.0
  %121 = vmatprep.subr.mxu0 0.0
  %122 = vmatpush2.msra.mxu0 0.0
  %123 = vmatprep.subr.mxu0 0.0
  %124 = vmatpush2.msra.mxu0 0.0
  %125 = vmatprep.subr.mxu0 0.0
  %126 = vmatpush2.msra.mxu0 0.0
  %127 = vmatprep.subr.mxu0 0.0
  %128 = vmatpush2.msra.mxu0 0.0
  %129 = vmatprep.subr.mxu0 0.0
  %130 = vmatpush2.msra.mxu0 0.0
  %131 = vmatprep.subr.mxu0 0.0
  %132 = vmatpush2.msra.mxu0 0.0
  %133 = vmatprep.subr.mxu0 0.0
  %134 = vmatpush2.msra.mxu0 0.0
  %135 = vmatprep.subr.mxu0 0.0
  %136 = vmatpush2.msra.mxu0 0.0
  %137 = vmatprep.subr.mxu0 0.0
  %138 = vmatpush2.msra.mxu0 0.0
  %139 = vmatprep.subr.mxu0 0.0
  %140 = vmatpush2.msra.mxu0 0.0
  %141 = vmatprep.subr.mxu0 0.0
  %142 = vmatpush2.msra.mxu0 0.0
  %143 = vmatprep.subr.mxu0 0.0
  %144 = vmatpush2.msra.mxu0 0.0
  %145 = vmatprep.mubr.f32.mxu0 0.0
  %146 = vmatmul.mubr.f32.gmra.mxu0 %v58
  %v147 = vpop.f32.mrf.mxu0
  %v148 = vadd.f32 %v49, %v147
  %v149 = vpop.f32.mrf.mxu0
  %v150 = vadd.f32 %v53, %v149
  %151 = vmatprep.mubr.f32.mxu0 0.0
  %152 = vmatmul.mubr.f32.gmra.mxu0 %v61
  %v153 = vpop.f32.mrf.mxu0
  %v154 = vadd.f32 %v49, %v153
  %v155 = vpop.f32.mrf.mxu0
  %v156 = vadd.f32 %v53, %v155
  %157 = vmatprep.mubr.f32.mxu0 0.0
  %158 = vmatmul.mubr.f32.gmra.mxu0 %v64
  %v159 = vpop.f32.mrf.mxu0
  %v160 = vadd.f32 %v49, %v159
  %v161 = vpop.f32.mrf.mxu0
  %v162 = vadd.f32 %v53, %v161
  %163 = vmatprep.mubr.f32.mxu0 0.0
  %164 = vmatmul.mubr.f32.gmra.mxu0 %v67
  %v165 = vpop.f32.mrf.mxu0
  %v166 = vadd.f32 %v49, %v165
  %v167 = vpop.f32.mrf.mxu0
  %v168 = vadd.f32 %v53, %v167
  %169 = vmatprep.mubr.f32.mxu0 0.0
  %170 = vmatmul.mubr.f32.gmra.mxu0 %v70
  %v171 = vpop.f32.mrf.mxu0
  %v172 = vadd.f32 %v49, %v171
  %v173 = vpop.f32.mrf.mxu0
  %v174 = vadd.f32 %v53, %v173
  %175 = vmatprep.mubr.f32.mxu0 0.0
  %176 = vmatmul.mubr.f32.gmra.mxu0 %v73
  %v177 = vpop.f32.mrf.mxu0
  %v178 = vadd.f32 %v49, %v177
  %v179 = vpop.f32.mrf.mxu0
  %v180 = vadd.f32 %v53, %v179
  %181 = vmatprep.mubr.f32.mxu0 0.0
  %182 = vmatmul.mubr.f32.gmra.mxu0 %v76
  %v183 = vpop.f32.mrf.mxu0
  %v184 = vadd.f32 %v49, %v183
  %v185 = vpop.f32.mrf.mxu0
  %v186 = vadd.f32 %v53, %v185
  %187 = vmatprep.mubr.f32.mxu0 0.0
  %188 = vmatmul.mubr.f32.gmra.mxu0 %v79
  %v189 = vpop.f32.mrf.mxu0
  %v190 = vadd.f32 %v49, %v189
  %v191 = vpop.f32.mrf.mxu0
  %v192 = vadd.f32 %v53, %v191
  %193 = vdwg.mxu0
  %194 = vst [vmem:[#allocation2] sm:$0xff] %v148
  %195 = vst [vmem:[#allocation2 + $0x8] sm:$0xff] %v150
  %196 = vst [vmem:[#allocation2 + $0x10] sm:$0xff] %v154
  %197 = vst [vmem:[#allocation2 + $0x18] sm:$0xff] %v156
  %198 = vst [vmem:[#allocation2 + $0x20] sm:$0xff] %v160
  %199 = vst [vmem:[#allocation2 + $0x28] sm:$0xff] %v162
  %200 = vst [vmem:[#allocation2 + $0x30] sm:$0xff] %v166
  %201 = vst [vmem:[#allocation2 + $0x38] sm:$0xff] %v168
  %202 = vst [vmem:[#allocation2 + $0x40] sm:$0xff] %v172
  %203 = vst [vmem:[#allocation2 + $0x48] sm:$0xff] %v174
  %204 = vst [vmem:[#allocation2 + $0x50] sm:$0xff] %v178
  %205 = vst [vmem:[#allocation2 + $0x58] sm:$0xff] %v180
  %206 = vst [vmem:[#allocation2 + $0x60] sm:$0xff] %v184
  %207 = vst [vmem:[#allocation2 + $0x68] sm:$0xff] %v186
  %208 = vst [vmem:[#allocation2 + $0x70] sm:$0xff] %v190
  %209 = vst [vmem:[#allocation2 + $0x78] sm:$0xff] %v192
  %v210 = vld [vmem:[%s3] sm:$0xff]
  %v211 = vld [vmem:[%s3 + $0x8] sm:$0xff]
  %v212 = vld [vmem:[%s3 + $0x10] sm:$0xff]
  %v213 = vld [vmem:[%s3 + $0x18] sm:$0xff]
  %v214 = vld [vmem:[%s4] sm:$0xff]
  %v215 = vld [vmem:[%s4 + $0x8] sm:$0xff]
  %v216 = vld [vmem:[%s4 + $0x10] sm:$0xff]
  %v217 = vld [vmem:[%s4 + $0x18] sm:$0xff]
  %s218 = smul.u32 0, 2
  %s219 = smul.addr %s218, 8
  %s220 = scalar_lea.vmem [#allocation2], %s219
  %v221 = vld [vmem:[%s220] sm:$0xff]
  %vm222 = vcmask 261120
  %v224 = vsel %vm222, 0.0, 0
  %226 = vmatprep.subr.mxu0 0.0
  %227 = vmatpush1.msra.mxu0 0.0
  %228 = vmatprep.subr.mxu0 0.0
  %229 = vmatpush1.msra.mxu0 0.0
  %230 = vmatprep.subr.mxu0 0.0
  %231 = vmatpush1.msra.mxu0 0.0
  %232 = vmatprep.subr.mxu0 0.0
  %233 = vmatpush1.msra.mxu0 0.0
  %234 = vmatprep.subr.mxu0 0.0
  %235 = vmatpush1.msra.mxu0 0.0
  %236 = vmatprep.subr.mxu0 0.0
  %237 = vmatpush1.msra.mxu0 0.0
  %238 = vmatprep.subr.mxu0 0.0
  %239 = vmatpush1.msra.mxu0 0.0
  %240 = vmatprep.subr.mxu0 0.0
  %241 = vmatpush1.msra.mxu0 0.0
  %242 = vmatprep.subr.mxu0 0.0
  %243 = vmatpush1.msra.mxu0 0.0
  %244 = vmatprep.subr.mxu0 0.0
  %245 = vmatpush1.msra.mxu0 0.0
  %246 = vmatprep.subr.mxu0 0.0
  %247 = vmatpush1.msra.mxu0 0.0
  %248 = vmatprep.subr.mxu0 0.0
  %249 = vmatpush1.msra.mxu0 0.0
  %250 = vmatprep.subr.mxu0 0.0
  %251 = vmatpush1.msra.mxu0 %v213
  %252 = vmatprep.subr.mxu0 0.0
  %253 = vmatpush1.msra.mxu0 %v212
  %254 = vmatprep.subr.mxu0 0.0
  %255 = vmatpush1.msra.mxu0 %v211
  %256 = vmatprep.subr.mxu0 0.0
  %257 = vmatpush1.msra.mxu0 %v210
  %258 = vmatprep.subr.mxu0 0.0
  %259 = vmatpush2.msra.mxu0 0.0
  %260 = vmatprep.subr.mxu0 0.0
  %261 = vmatpush2.msra.mxu0 0.0
  %262 = vmatprep.subr.mxu0 0.0
  %263 = vmatpush2.msra.mxu0 0.0
  %264 = vmatprep.subr.mxu0 0.0
  %265 = vmatpush2.msra.mxu0 0.0
  %266 = vmatprep.subr.mxu0 0.0
  %267 = vmatpush2.msra.mxu0 0.0
  %268 = vmatprep.subr.mxu0 0.0
  %269 = vmatpush2.msra.mxu0 0.0
  %270 = vmatprep.subr.mxu0 0.0
  %271 = vmatpush2.msra.mxu0 0.0
  %272 = vmatprep.subr.mxu0 0.0
  %273 = vmatpush2.msra.mxu0 0.0
  %274 = vmatprep.subr.mxu0 0.0
  %275 = vmatpush2.msra.mxu0 0.0
  %276 = vmatprep.subr.mxu0 0.0
  %277 = vmatpush2.msra.mxu0 0.0
  %278 = vmatprep.subr.mxu0 0.0
  %279 = vmatpush2.msra.mxu0 0.0
  %280 = vmatprep.subr.mxu0 0.0
  %281 = vmatpush2.msra.mxu0 0.0
  %282 = vmatprep.subr.mxu0 0.0
  %283 = vmatpush2.msra.mxu0 0.0
  %284 = vmatprep.subr.mxu0 0.0
  %285 = vmatpush2.msra.mxu0 0.0
  %286 = vmatprep.subr.mxu0 0.0
  %287 = vmatpush2.msra.mxu0 0.0
  %288 = vmatprep.subr.mxu0 0.0
  %289 = vmatpush2.msra.mxu0 0.0
  %290 = vmatprep.mubr.f32.mxu0 0.0
  %291 = vmatmul.mubr.f32.gmra.mxu0 %v224
  %v292 = vpop.f32.mrf.mxu0
  %v293 = vadd.f32 0.0, %v292
  %v294 = vpop.f32.mrf.mxu0
  %295 = vdwg.mxu0
  %v296 = vadd.f32 %v221, %v293
  %v297 = vmul.f32 %v296, 0.5
  %v298 = vtanh.pop %v297
  %v299 = vmul.f32 %v298, 0.5
  %v300 = vadd.f32 %v299, 0.5
  %v301 = vtanh.pop %v296
  %v302 = vmul.f32 %v300, 0.0
  %304 = vrot.lane.b32.xlu0 %v301, 64
  %v305 = vpop.permute.xlu0 %304
  %v307 = vmul.f32 %v300, %v305
  %309 = vrot.lane.b32.xlu0 %v307, 32
  %v310 = vpop.permute.xlu0 %309
  %v312 = vadd.f32 %v302, %v310
  %v313 = vtanh.pop %v312
  %315 = vrot.lane.b32.xlu0 %v313, 64
  %v316 = vpop.permute.xlu0 %315
  %v318 = vmul.f32 %v300, %v316
  %320 = vrot.lane.b32.xlu0 %v318, 32
  %v321 = vpop.permute.xlu0 %320
  %323 = vst.msk [vmem:[%s5] sm:$0xff] %vm222, %v321
  %s324 = smul.u32 7, 2
  %s325 = smul.addr %s324, 8
  %s326 = scalar_lea.vmem [#allocation2], %s325
  %v327 = vld [vmem:[%s326 + $0x8] sm:$0xff]
  %328 = vmatprep.subr.mxu0 0.0
  %329 = vmatpush1.msra.mxu0 0.0
  %330 = vmatprep.subr.mxu0 0.0
  %331 = vmatpush1.msra.mxu0 0.0
  %332 = vmatprep.subr.mxu0 0.0
  %333 = vmatpush1.msra.mxu0 0.0
  %334 = vmatprep.subr.mxu0 0.0
  %335 = vmatpush1.msra.mxu0 0.0
  %336 = vmatprep.subr.mxu0 0.0
  %337 = vmatpush1.msra.mxu0 0.0
  %338 = vmatprep.subr.mxu0 0.0
  %339 = vmatpush1.msra.mxu0 0.0
  %340 = vmatprep.subr.mxu0 0.0
  %341 = vmatpush1.msra.mxu0 0.0
  %342 = vmatprep.subr.mxu0 0.0
  %343 = vmatpush1.msra.mxu0 0.0
  %344 = vmatprep.subr.mxu0 0.0
  %345 = vmatpush1.msra.mxu0 0.0
  %346 = vmatprep.subr.mxu0 0.0
  %347 = vmatpush1.msra.mxu0 0.0
  %348 = vmatprep.subr.mxu0 0.0
  %349 = vmatpush1.msra.mxu0 0.0
  %350 = vmatprep.subr.mxu0 0.0
  %351 = vmatpush1.msra.mxu0 0.0
  %352 = vmatprep.subr.mxu0 0.0
  %353 = vmatpush1.msra.mxu0 %v217
  %354 = vmatprep.subr.mxu0 0.0
  %355 = vmatpush1.msra.mxu0 %v216
  %356 = vmatprep.subr.mxu0 0.0
  %357 = vmatpush1.msra.mxu0 %v215
  %358 = vmatprep.subr.mxu0 0.0
  %359 = vmatpush1.msra.mxu0 %v214
  %360 = vmatprep.subr.mxu0 0.0
  %361 = vmatpush2.msra.mxu0 0.0
  %362 = vmatprep.subr.mxu0 0.0
  %363 = vmatpush2.msra.mxu0 0.0
  %364 = vmatprep.subr.mxu0 0.0
  %365 = vmatpush2.msra.mxu0 0.0
  %366 = vmatprep.subr.mxu0 0.0
  %367 = vmatpush2.msra.mxu0 0.0
  %368 = vmatprep.subr.mxu0 0.0
  %369 = vmatpush2.msra.mxu0 0.0
  %370 = vmatprep.subr.mxu0 0.0
  %371 = vmatpush2.msra.mxu0 0.0
  %372 = vmatprep.subr.mxu0 0.0
  %373 = vmatpush2.msra.mxu0 0.0
  %374 = vmatprep.subr.mxu0 0.0
  %375 = vmatpush2.msra.mxu0 0.0
  %376 = vmatprep.subr.mxu0 0.0
  %377 = vmatpush2.msra.mxu0 0.0
  %378 = vmatprep.subr.mxu0 0.0
  %379 = vmatpush2.msra.mxu0 0.0
  %380 = vmatprep.subr.mxu0 0.0
  %381 = vmatpush2.msra.mxu0 0.0
  %382 = vmatprep.subr.mxu0 0.0
  %383 = vmatpush2.msra.mxu0 0.0
  %384 = vmatprep.subr.mxu0 0.0
  %385 = vmatpush2.msra.mxu0 0.0
  %386 = vmatprep.subr.mxu0 0.0
  %387 = vmatpush2.msra.mxu0 0.0
  %388 = vmatprep.subr.mxu0 0.0
  %389 = vmatpush2.msra.mxu0 0.0
  %390 = vmatprep.subr.mxu0 0.0
  %391 = vmatpush2.msra.mxu0 0.0
  %392 = vmatprep.mubr.f32.mxu0 0.0
  %393 = vmatmul.mubr.f32.gmra.mxu0 %v224
  %v394 = vpop.f32.mrf.mxu0
  %v395 = vadd.f32 0.0, %v394
  %v396 = vpop.f32.mrf.mxu0
  %397 = vdwg.mxu0
  %v398 = vadd.f32 %v327, %v395
  %v399 = vmul.f32 %v398, 0.5
  %v400 = vtanh.pop %v399
  %v401 = vmul.f32 %v400, 0.5
  %v402 = vadd.f32 %v401, 0.5
  %v403 = vtanh.pop %v398
  %v404 = vmul.f32 %v402, 0.0
  %406 = vrot.lane.b32.xlu0 %v403, 64
  %v407 = vpop.permute.xlu0 %406
  %v409 = vmul.f32 %v402, %v407
  %411 = vrot.lane.b32.xlu0 %v409, 32
  %v412 = vpop.permute.xlu0 %411
  %v414 = vadd.f32 %v404, %v412
  %v415 = vtanh.pop %v414
  %417 = vrot.lane.b32.xlu0 %v415, 64
  %v418 = vpop.permute.xlu0 %417
  %v420 = vmul.f32 %v402, %v418
  %422 = vrot.lane.b32.xlu0 %v420, 32
  %v423 = vpop.permute.xlu0 %422
  %s425 = sadd.s32 56, 64
  %s426 = scalar_lea.vmem %s5, %s425
  %427 = vst.msk [vmem:[%s426] sm:$0xff] %vm222, %v423
  %s428 = smul.u32 1, 2
  %s429 = smul.addr %s428, 8
  %s430 = scalar_lea.vmem [#allocation2], %s429
  %v431 = vld [vmem:[%s430] sm:$0xff]
  %v432 = vsel %vm222, %v321, 0
  %434 = vmatprep.subr.mxu0 0.0
  %435 = vmatpush1.msra.mxu0 0.0
  %436 = vmatprep.subr.mxu0 0.0
  %437 = vmatpush1.msra.mxu0 0.0
  %438 = vmatprep.subr.mxu0 0.0
  %439 = vmatpush1.msra.mxu0 0.0
  %440 = vmatprep.subr.mxu0 0.0
  %441 = vmatpush1.msra.mxu0 0.0
  %442 = vmatprep.subr.mxu0 0.0
  %443 = vmatpush1.msra.mxu0 0.0
  %444 = vmatprep.subr.mxu0 0.0
  %445 = vmatpush1.msra.mxu0 0.0
  %446 = vmatprep.subr.mxu0 0.0
  %447 = vmatpush1.msra.mxu0 0.0
  %448 = vmatprep.subr.mxu0 0.0
  %449 = vmatpush1.msra.mxu0 0.0
  %450 = vmatprep.subr.mxu0 0.0
  %451 = vmatpush1.msra.mxu0 0.0
  %452 = vmatprep.subr.mxu0 0.0
  %453 = vmatpush1.msra.mxu0 0.0
  %454 = vmatprep.subr.mxu0 0.0
  %455 = vmatpush1.msra.mxu0 0.0
  %456 = vmatprep.subr.mxu0 0.0
  %457 = vmatpush1.msra.mxu0 0.0
  %458 = vmatprep.subr.mxu0 0.0
  %459 = vmatpush1.msra.mxu0 %v213
  %460 = vmatprep.subr.mxu0 0.0
  %461 = vmatpush1.msra.mxu0 %v212
  %462 = vmatprep.subr.mxu0 0.0
  %463 = vmatpush1.msra.mxu0 %v211
  %464 = vmatprep.subr.mxu0 0.0
  %465 = vmatpush1.msra.mxu0 %v210
  %466 = vmatprep.subr.mxu0 0.0
  %467 = vmatpush2.msra.mxu0 0.0
  %468 = vmatprep.subr.mxu0 0.0
  %469 = vmatpush2.msra.mxu0 0.0
  %470 = vmatprep.subr.mxu0 0.0
  %471 = vmatpush2.msra.mxu0 0.0
  %472 = vmatprep.subr.mxu0 0.0
  %473 = vmatpush2.msra.mxu0 0.0
  %474 = vmatprep.subr.mxu0 0.0
  %475 = vmatpush2.msra.mxu0 0.0
  %476 = vmatprep.subr.mxu0 0.0
  %477 = vmatpush2.msra.mxu0 0.0
  %478 = vmatprep.subr.mxu0 0.0
  %479 = vmatpush2.msra.mxu0 0.0
  %480 = vmatprep.subr.mxu0 0.0
  %481 = vmatpush2.msra.mxu0 0.0
  %482 = vmatprep.subr.mxu0 0.0
  %483 = vmatpush2.msra.mxu0 0.0
  %484 = vmatprep.subr.mxu0 0.0
  %485 = vmatpush2.msra.mxu0 0.0
  %486 = vmatprep.subr.mxu0 0.0
  %487 = vmatpush2.msra.mxu0 0.0
  %488 = vmatprep.subr.mxu0 0.0
  %489 = vmatpush2.msra.mxu0 0.0
  %490 = vmatprep.subr.mxu0 0.0
  %491 = vmatpush2.msra.mxu0 0.0
  %492 = vmatprep.subr.mxu0 0.0
  %493 = vmatpush2.msra.mxu0 0.0
  %494 = vmatprep.subr.mxu0 0.0
  %495 = vmatpush2.msra.mxu0 0.0
  %496 = vmatprep.subr.mxu0 0.0
  %497 = vmatpush2.msra.mxu0 0.0
  %498 = vmatprep.mubr.f32.mxu0 0.0
  %499 = vmatmul.mubr.f32.gmra.mxu0 %v432
  %v500 = vpop.f32.mrf.mxu0
  %v501 = vadd.f32 0.0, %v500
  %v502 = vpop.f32.mrf.mxu0
  %503 = vdwg.mxu0
  %v504 = vadd.f32 %v431, %v501
  %v505 = vmul.f32 %v504, 0.5
  %v506 = vtanh.pop %v505
  %v507 = vmul.f32 %v506, 0.5
  %v508 = vadd.f32 %v507, 0.5
  %v509 = vtanh.pop %v504
  %v510 = vmul.f32 %v508, %v312
  %512 = vrot.lane.b32.xlu0 %v509, 64
  %v513 = vpop.permute.xlu0 %512
  %v515 = vmul.f32 %v508, %v513
  %517 = vrot.lane.b32.xlu0 %v515, 32
  %v518 = vpop.permute.xlu0 %517
  %v520 = vadd.f32 %v510, %v518
  %v521 = vtanh.pop %v520
  %523 = vrot.lane.b32.xlu0 %v521, 64
  %v524 = vpop.permute.xlu0 %523
  %v526 = vmul.f32 %v508, %v524
  %528 = vrot.lane.b32.xlu0 %v526, 32
  %v529 = vpop.permute.xlu0 %528
  %s531 = scalar_lea.vmem %s5, 8
  %532 = vst.msk [vmem:[%s531] sm:$0xff] %vm222, %v529
  %s533 = smul.u32 6, 2
  %s534 = smul.addr %s533, 8
  %s535 = scalar_lea.vmem [#allocation2], %s534
  %v536 = vld [vmem:[%s535 + $0x8] sm:$0xff]
  %v537 = vsel %vm222, %v423, 0
  %539 = vmatprep.subr.mxu0 0.0
  %540 = vmatpush1.msra.mxu0 0.0
  %541 = vmatprep.subr.mxu0 0.0
  %542 = vmatpush1.msra.mxu0 0.0
  %543 = vmatprep.subr.mxu0 0.0
  %544 = vmatpush1.msra.mxu0 0.0
  %545 = vmatprep.subr.mxu0 0.0
  %546 = vmatpush1.msra.mxu0 0.0
  %547 = vmatprep.subr.mxu0 0.0
  %548 = vmatpush1.msra.mxu0 0.0
  %549 = vmatprep.subr.mxu0 0.0
  %550 = vmatpush1.msra.mxu0 0.0
  %551 = vmatprep.subr.mxu0 0.0
  %552 = vmatpush1.msra.mxu0 0.0
  %553 = vmatprep.subr.mxu0 0.0
  %554 = vmatpush1.msra.mxu0 0.0
  %555 = vmatprep.subr.mxu0 0.0
  %556 = vmatpush1.msra.mxu0 0.0
  %557 = vmatprep.subr.mxu0 0.0
  %558 = vmatpush1.msra.mxu0 0.0
  %559 = vmatprep.subr.mxu0 0.0
  %560 = vmatpush1.msra.mxu0 0.0
  %561 = vmatprep.subr.mxu0 0.0
  %562 = vmatpush1.msra.mxu0 0.0
  %563 = vmatprep.subr.mxu0 0.0
  %564 = vmatpush1.msra.mxu0 %v217
  %565 = vmatprep.subr.mxu0 0.0
  %566 = vmatpush1.msra.mxu0 %v216
  %567 = vmatprep.subr.mxu0 0.0
  %568 = vmatpush1.msra.mxu0 %v215
  %569 = vmatprep.subr.mxu0 0.0
  %570 = vmatpush1.msra.mxu0 %v214
  %571 = vmatprep.subr.mxu0 0.0
  %572 = vmatpush2.msra.mxu0 0.0
  %573 = vmatprep.subr.mxu0 0.0
  %574 = vmatpush2.msra.mxu0 0.0
  %575 = vmatprep.subr.mxu0 0.0
  %576 = vmatpush2.msra.mxu0 0.0
  %577 = vmatprep.subr.mxu0 0.0
  %578 = vmatpush2.msra.mxu0 0.0
  %579 = vmatprep.subr.mxu0 0.0
  %580 = vmatpush2.msra.mxu0 0.0
  %581 = vmatprep.subr.mxu0 0.0
  %582 = vmatpush2.msra.mxu0 0.0
  %583 = vmatprep.subr.mxu0 0.0
  %584 = vmatpush2.msra.mxu0 0.0
  %585 = vmatprep.subr.mxu0 0.0
  %586 = vmatpush2.msra.mxu0 0.0
  %587 = vmatprep.subr.mxu0 0.0
  %588 = vmatpush2.msra.mxu0 0.0
  %589 = vmatprep.subr.mxu0 0.0
  %590 = vmatpush2.msra.mxu0 0.0
  %591 = vmatprep.subr.mxu0 0.0
  %592 = vmatpush2.msra.mxu0 0.0
  %593 = vmatprep.subr.mxu0 0.0
  %594 = vmatpush2.msra.mxu0 0.0
  %595 = vmatprep.subr.mxu0 0.0
  %596 = vmatpush2.msra.mxu0 0.0
  %597 = vmatprep.subr.mxu0 0.0
  %598 = vmatpush2.msra.mxu0 0.0
  %599 = vmatprep.subr.mxu0 0.0
  %600 = vmatpush2.msra.mxu0 0.0
  %601 = vmatprep.subr.mxu0 0.0
  %602 = vmatpush2.msra.mxu0 0.0
  %603 = vmatprep.mubr.f32.mxu0 0.0
  %604 = vmatmul.mubr.f32.gmra.mxu0 %v537
  %v605 = vpop.f32.mrf.mxu0
  %v606 = vadd.f32 0.0, %v605
  %v607 = vpop.f32.mrf.mxu0
  %608 = vdwg.mxu0
  %v609 = vadd.f32 %v536, %v606
  %v610 = vmul.f32 %v609, 0.5
  %v611 = vtanh.pop %v610
  %v612 = vmul.f32 %v611, 0.5
  %v613 = vadd.f32 %v612, 0.5
  %v614 = vtanh.pop %v609
  %v615 = vmul.f32 %v613, %v414
  %617 = vrot.lane.b32.xlu0 %v614, 64
  %v618 = vpop.permute.xlu0 %617
  %v620 = vmul.f32 %v613, %v618
  %622 = vrot.lane.b32.xlu0 %v620, 32
  %v623 = vpop.permute.xlu0 %622
  %v625 = vadd.f32 %v615, %v623
  %v626 = vtanh.pop %v625
  %628 = vrot.lane.b32.xlu0 %v626, 64
  %v629 = vpop.permute.xlu0 %628
  %v631 = vmul.f32 %v613, %v629
  %633 = vrot.lane.b32.xlu0 %v631, 32
  %v634 = vpop.permute.xlu0 %633
  %s636 = sadd.s32 48, 64
  %s637 = scalar_lea.vmem %s5, %s636
  %638 = vst.msk [vmem:[%s637] sm:$0xff] %vm222, %v634
  %s639 = smul.u32 2, 2
  %s640 = smul.addr %s639, 8
  %s641 = scalar_lea.vmem [#allocation2], %s640
  %v642 = vld [vmem:[%s641] sm:$0xff]
  %v643 = vsel %vm222, %v529, 0
  %645 = vmatprep.subr.mxu0 0.0
  %646 = vmatpush1.msra.mxu0 0.0
  %647 = vmatprep.subr.mxu0 0.0
  %648 = vmatpush1.msra.mxu0 0.0
  %649 = vmatprep.subr.mxu0 0.0
  %650 = vmatpush1.msra.mxu0 0.0
  %651 = vmatprep.subr.mxu0 0.0
  %652 = vmatpush1.msra.mxu0 0.0
  %653 = vmatprep.subr.mxu0 0.0
  %654 = vmatpush1.msra.mxu0 0.0
  %655 = vmatprep.subr.mxu0 0.0
  %656 = vmatpush1.msra.mxu0 0.0
  %657 = vmatprep.subr.mxu0 0.0
  %658 = vmatpush1.msra.mxu0 0.0
  %659 = vmatprep.subr.mxu0 0.0
  %660 = vmatpush1.msra.mxu0 0.0
  %661 = vmatprep.subr.mxu0 0.0
  %662 = vmatpush1.msra.mxu0 0.0
  %663 = vmatprep.subr.mxu0 0.0
  %664 = vmatpush1.msra.mxu0 0.0
  %665 = vmatprep.subr.mxu0 0.0
  %666 = vmatpush1.msra.mxu0 0.0
  %667 = vmatprep.subr.mxu0 0.0
  %668 = vmatpush1.msra.mxu0 0.0
  %669 = vmatprep.subr.mxu0 0.0
  %670 = vmatpush1.msra.mxu0 %v213
  %671 = vmatprep.subr.mxu0 0.0
  %672 = vmatpush1.msra.mxu0 %v212
  %673 = vmatprep.subr.mxu0 0.0
  %674 = vmatpush1.msra.mxu0 %v211
  %675 = vmatprep.subr.mxu0 0.0
  %676 = vmatpush1.msra.mxu0 %v210
  %677 = vmatprep.subr.mxu0 0.0
  %678 = vmatpush2.msra.mxu0 0.0
  %679 = vmatprep.subr.mxu0 0.0
  %680 = vmatpush2.msra.mxu0 0.0
  %681 = vmatprep.subr.mxu0 0.0
  %682 = vmatpush2.msra.mxu0 0.0
  %683 = vmatprep.subr.mxu0 0.0
  %684 = vmatpush2.msra.mxu0 0.0
  %685 = vmatprep.subr.mxu0 0.0
  %686 = vmatpush2.msra.mxu0 0.0
  %687 = vmatprep.subr.mxu0 0.0
  %688 = vmatpush2.msra.mxu0 0.0
  %689 = vmatprep.subr.mxu0 0.0
  %690 = vmatpush2.msra.mxu0 0.0
  %691 = vmatprep.subr.mxu0 0.0
  %692 = vmatpush2.msra.mxu0 0.0
  %693 = vmatprep.subr.mxu0 0.0
  %694 = vmatpush2.msra.mxu0 0.0
  %695 = vmatprep.subr.mxu0 0.0
  %696 = vmatpush2.msra.mxu0 0.0
  %697 = vmatprep.subr.mxu0 0.0
  %698 = vmatpush2.msra.mxu0 0.0
  %699 = vmatprep.subr.mxu0 0.0
  %700 = vmatpush2.msra.mxu0 0.0
  %701 = vmatprep.subr.mxu0 0.0
  %702 = vmatpush2.msra.mxu0 0.0
  %703 = vmatprep.subr.mxu0 0.0
  %704 = vmatpush2.msra.mxu0 0.0
  %705 = vmatprep.subr.mxu0 0.0
  %706 = vmatpush2.msra.mxu0 0.0
  %707 = vmatprep.subr.mxu0 0.0
  %708 = vmatpush2.msra.mxu0 0.0
  %709 = vmatprep.mubr.f32.mxu0 0.0
  %710 = vmatmul.mubr.f32.gmra.mxu0 %v643
  %v711 = vpop.f32.mrf.mxu0
  %v712 = vadd.f32 0.0, %v711
  %v713 = vpop.f32.mrf.mxu0
  %714 = vdwg.mxu0
  %v715 = vadd.f32 %v642, %v712
  %v716 = vmul.f32 %v715, 0.5
  %v717 = vtanh.pop %v716
  %v718 = vmul.f32 %v717, 0.5
  %v719 = vadd.f32 %v718, 0.5
  %v720 = vtanh.pop %v715
  %v721 = vmul.f32 %v719, %v520
  %723 = vrot.lane.b32.xlu0 %v720, 64
  %v724 = vpop.permute.xlu0 %723
  %v726 = vmul.f32 %v719, %v724
  %728 = vrot.lane.b32.xlu0 %v726, 32
  %v729 = vpop.permute.xlu0 %728
  %v731 = vadd.f32 %v721, %v729
  %v732 = vtanh.pop %v731
  %734 = vrot.lane.b32.xlu0 %v732, 64
  %v735 = vpop.permute.xlu0 %734
  %v737 = vmul.f32 %v719, %v735
  %739 = vrot.lane.b32.xlu0 %v737, 32
  %v740 = vpop.permute.xlu0 %739
  %s742 = scalar_lea.vmem %s5, 16
  %743 = vst.msk [vmem:[%s742] sm:$0xff] %vm222, %v740
  %s744 = smul.u32 5, 2
  %s745 = smul.addr %s744, 8
  %s746 = scalar_lea.vmem [#allocation2], %s745
  %v747 = vld [vmem:[%s746 + $0x8] sm:$0xff]
  %v748 = vsel %vm222, %v634, 0
  %750 = vmatprep.subr.mxu0 0.0
  %751 = vmatpush1.msra.mxu0 0.0
  %752 = vmatprep.subr.mxu0 0.0
  %753 = vmatpush1.msra.mxu0 0.0
  %754 = vmatprep.subr.mxu0 0.0
  %755 = vmatpush1.msra.mxu0 0.0
  %756 = vmatprep.subr.mxu0 0.0
  %757 = vmatpush1.msra.mxu0 0.0
  %758 = vmatprep.subr.mxu0 0.0
  %759 = vmatpush1.msra.mxu0 0.0
  %760 = vmatprep.subr.mxu0 0.0
  %761 = vmatpush1.msra.mxu0 0.0
  %762 = vmatprep.subr.mxu0 0.0
  %763 = vmatpush1.msra.mxu0 0.0
  %764 = vmatprep.subr.mxu0 0.0
  %765 = vmatpush1.msra.mxu0 0.0
  %766 = vmatprep.subr.mxu0 0.0
  %767 = vmatpush1.msra.mxu0 0.0
  %768 = vmatprep.subr.mxu0 0.0
  %769 = vmatpush1.msra.mxu0 0.0
  %770 = vmatprep.subr.mxu0 0.0
  %771 = vmatpush1.msra.mxu0 0.0
  %772 = vmatprep.subr.mxu0 0.0
  %773 = vmatpush1.msra.mxu0 0.0
  %774 = vmatprep.subr.mxu0 0.0
  %775 = vmatpush1.msra.mxu0 %v217
  %776 = vmatprep.subr.mxu0 0.0
  %777 = vmatpush1.msra.mxu0 %v216
  %778 = vmatprep.subr.mxu0 0.0
  %779 = vmatpush1.msra.mxu0 %v215
  %780 = vmatprep.subr.mxu0 0.0
  %781 = vmatpush1.msra.mxu0 %v214
  %782 = vmatprep.subr.mxu0 0.0
  %783 = vmatpush2.msra.mxu0 0.0
  %784 = vmatprep.subr.mxu0 0.0
  %785 = vmatpush2.msra.mxu0 0.0
  %786 = vmatprep.subr.mxu0 0.0
  %787 = vmatpush2.msra.mxu0 0.0
  %788 = vmatprep.subr.mxu0 0.0
  %789 = vmatpush2.msra.mxu0 0.0
  %790 = vmatprep.subr.mxu0 0.0
  %791 = vmatpush2.msra.mxu0 0.0
  %792 = vmatprep.subr.mxu0 0.0
  %793 = vmatpush2.msra.mxu0 0.0
  %794 = vmatprep.subr.mxu0 0.0
  %795 = vmatpush2.msra.mxu0 0.0
  %796 = vmatprep.subr.mxu0 0.0
  %797 = vmatpush2.msra.mxu0 0.0
  %798 = vmatprep.subr.mxu0 0.0
  %799 = vmatpush2.msra.mxu0 0.0
  %800 = vmatprep.subr.mxu0 0.0
  %801 = vmatpush2.msra.mxu0 0.0
  %802 = vmatprep.subr.mxu0 0.0
  %803 = vmatpush2.msra.mxu0 0.0
  %804 = vmatprep.subr.mxu0 0.0
  %805 = vmatpush2.msra.mxu0 0.0
  %806 = vmatprep.subr.mxu0 0.0
  %807 = vmatpush2.msra.mxu0 0.0
  %808 = vmatprep.subr.mxu0 0.0
  %809 = vmatpush2.msra.mxu0 0.0
  %810 = vmatprep.subr.mxu0 0.0
  %811 = vmatpush2.msra.mxu0 0.0
  %812 = vmatprep.subr.mxu0 0.0
  %813 = vmatpush2.msra.mxu0 0.0
  %814 = vmatprep.mubr.f32.mxu0 0.0
  %815 = vmatmul.mubr.f32.gmra.mxu0 %v748
  %v816 = vpop.f32.mrf.mxu0
  %v817 = vadd.f32 0.0, %v816
  %v818 = vpop.f32.mrf.mxu0
  %819 = vdwg.mxu0
  %v820 = vadd.f32 %v747, %v817
  %v821 = vmul.f32 %v820, 0.5
  %v822 = vtanh.pop %v821
  %v823 = vmul.f32 %v822, 0.5
  %v824 = vadd.f32 %v823, 0.5
  %v825 = vtanh.pop %v820
  %v826 = vmul.f32 %v824, %v625
  %828 = vrot.lane.b32.xlu0 %v825, 64
  %v829 = vpop.permute.xlu0 %828
  %v831 = vmul.f32 %v824, %v829
  %833 = vrot.lane.b32.xlu0 %v831, 32
  %v834 = vpop.permute.xlu0 %833
  %v836 = vadd.f32 %v826, %v834
  %v837 = vtanh.pop %v836
  %839 = vrot.lane.b32.xlu0 %v837, 64
  %v840 = vpop.permute.xlu0 %839
  %v842 = vmul.f32 %v824, %v840
  %844 = vrot.lane.b32.xlu0 %v842, 32
  %v845 = vpop.permute.xlu0 %844
  %s847 = sadd.s32 40, 64
  %s848 = scalar_lea.vmem %s5, %s847
  %849 = vst.msk [vmem:[%s848] sm:$0xff] %vm222, %v845
  %s850 = smul.u32 3, 2
  %s851 = smul.addr %s850, 8
  %s852 = scalar_lea.vmem [#allocation2], %s851
  %v853 = vld [vmem:[%s852] sm:$0xff]
  %v854 = vsel %vm222, %v740, 0
  %856 = vmatprep.subr.mxu0 0.0
  %857 = vmatpush1.msra.mxu0 0.0
  %858 = vmatprep.subr.mxu0 0.0
  %859 = vmatpush1.msra.mxu0 0.0
  %860 = vmatprep.subr.mxu0 0.0
  %861 = vmatpush1.msra.mxu0 0.0
  %862 = vmatprep.subr.mxu0 0.0
  %863 = vmatpush1.msra.mxu0 0.0
  %864 = vmatprep.subr.mxu0 0.0
  %865 = vmatpush1.msra.mxu0 0.0
  %866 = vmatprep.subr.mxu0 0.0
  %867 = vmatpush1.msra.mxu0 0.0
  %868 = vmatprep.subr.mxu0 0.0
  %869 = vmatpush1.msra.mxu0 0.0
  %870 = vmatprep.subr.mxu0 0.0
  %871 = vmatpush1.msra.mxu0 0.0
  %872 = vmatprep.subr.mxu0 0.0
  %873 = vmatpush1.msra.mxu0 0.0
  %874 = vmatprep.subr.mxu0 0.0
  %875 = vmatpush1.msra.mxu0 0.0
  %876 = vmatprep.subr.mxu0 0.0
  %877 = vmatpush1.msra.mxu0 0.0
  %878 = vmatprep.subr.mxu0 0.0
  %879 = vmatpush1.msra.mxu0 0.0
  %880 = vmatprep.subr.mxu0 0.0
  %881 = vmatpush1.msra.mxu0 %v213
  %882 = vmatprep.subr.mxu0 0.0
  %883 = vmatpush1.msra.mxu0 %v212
  %884 = vmatprep.subr.mxu0 0.0
  %885 = vmatpush1.msra.mxu0 %v211
  %886 = vmatprep.subr.mxu0 0.0
  %887 = vmatpush1.msra.mxu0 %v210
  %888 = vmatprep.subr.mxu0 0.0
  %889 = vmatpush2.msra.mxu0 0.0
  %890 = vmatprep.subr.mxu0 0.0
  %891 = vmatpush2.msra.mxu0 0.0
  %892 = vmatprep.subr.mxu0 0.0
  %893 = vmatpush2.msra.mxu0 0.0
  %894 = vmatprep.subr.mxu0 0.0
  %895 = vmatpush2.msra.mxu0 0.0
  %896 = vmatprep.subr.mxu0 0.0
  %897 = vmatpush2.msra.mxu0 0.0
  %898 = vmatprep.subr.mxu0 0.0
  %899 = vmatpush2.msra.mxu0 0.0
  %900 = vmatprep.subr.mxu0 0.0
  %901 = vmatpush2.msra.mxu0 0.0
  %902 = vmatprep.subr.mxu0 0.0
  %903 = vmatpush2.msra.mxu0 0.0
  %904 = vmatprep.subr.mxu0 0.0
  %905 = vmatpush2.msra.mxu0 0.0
  %906 = vmatprep.subr.mxu0 0.0
  %907 = vmatpush2.msra.mxu0 0.0
  %908 = vmatprep.subr.mxu0 0.0
  %909 = vmatpush2.msra.mxu0 0.0
  %910 = vmatprep.subr.mxu0 0.0
  %911 = vmatpush2.msra.mxu0 0.0
  %912 = vmatprep.subr.mxu0 0.0
  %913 = vmatpush2.msra.mxu0 0.0
  %914 = vmatprep.subr.mxu0 0.0
  %915 = vmatpush2.msra.mxu0 0.0
  %916 = vmatprep.subr.mxu0 0.0
  %917 = vmatpush2.msra.mxu0 0.0
  %918 = vmatprep.subr.mxu0 0.0
  %919 = vmatpush2.msra.mxu0 0.0
  %920 = vmatprep.mubr.f32.mxu0 0.0
  %921 = vmatmul.mubr.f32.gmra.mxu0 %v854
  %v922 = vpop.f32.mrf.mxu0
  %v923 = vadd.f32 0.0, %v922
  %v924 = vpop.f32.mrf.mxu0
  %925 = vdwg.mxu0
  %v926 = vadd.f32 %v853, %v923
  %v927 = vmul.f32 %v926, 0.5
  %v928 = vtanh.pop %v927
  %v929 = vmul.f32 %v928, 0.5
  %v930 = vadd.f32 %v929, 0.5
  %v931 = vtanh.pop %v926
  %v932 = vmul.f32 %v930, %v731
  %934 = vrot.lane.b32.xlu0 %v931, 64
  %v935 = vpop.permute.xlu0 %934
  %v937 = vmul.f32 %v930, %v935
  %939 = vrot.lane.b32.xlu0 %v937, 32
  %v940 = vpop.permute.xlu0 %939
  %v942 = vadd.f32 %v932, %v940
  %v943 = vtanh.pop %v942
  %945 = vrot.lane.b32.xlu0 %v943, 64
  %v946 = vpop.permute.xlu0 %945
  %v948 = vmul.f32 %v930, %v946
  %950 = vrot.lane.b32.xlu0 %v948, 32
  %v951 = vpop.permute.xlu0 %950
  %s953 = scalar_lea.vmem %s5, 24
  %954 = vst.msk [vmem:[%s953] sm:$0xff] %vm222, %v951
  %s955 = smul.u32 4, 2
  %s956 = smul.addr %s955, 8
  %s957 = scalar_lea.vmem [#allocation2], %s956
  %v958 = vld [vmem:[%s957 + $0x8] sm:$0xff]
  %v959 = vsel %vm222, %v845, 0
  %961 = vmatprep.subr.mxu0 0.0
  %962 = vmatpush1.msra.mxu0 0.0
  %963 = vmatprep.subr.mxu0 0.0
  %964 = vmatpush1.msra.mxu0 0.0
  %965 = vmatprep.subr.mxu0 0.0
  %966 = vmatpush1.msra.mxu0 0.0
  %967 = vmatprep.subr.mxu0 0.0
  %968 = vmatpush1.msra.mxu0 0.0
  %969 = vmatprep.subr.mxu0 0.0
  %970 = vmatpush1.msra.mxu0 0.0
  %971 = vmatprep.subr.mxu0 0.0
  %972 = vmatpush1.msra.mxu0 0.0
  %973 = vmatprep.subr.mxu0 0.0
  %974 = vmatpush1.msra.mxu0 0.0
  %975 = vmatprep.subr.mxu0 0.0
  %976 = vmatpush1.msra.mxu0 0.0
  %977 = vmatprep.subr.mxu0 0.0
  %978 = vmatpush1.msra.mxu0 0.0
  %979 = vmatprep.subr.mxu0 0.0
  %980 = vmatpush1.msra.mxu0 0.0
  %981 = vmatprep.subr.mxu0 0.0
  %982 = vmatpush1.msra.mxu0 0.0
  %983 = vmatprep.subr.mxu0 0.0
  %984 = vmatpush1.msra.mxu0 0.0
  %985 = vmatprep.subr.mxu0 0.0
  %986 = vmatpush1.msra.mxu0 %v217
  %987 = vmatprep.subr.mxu0 0.0
  %988 = vmatpush1.msra.mxu0 %v216
  %989 = vmatprep.subr.mxu0 0.0
  %990 = vmatpush1.msra.mxu0 %v215
  %991 = vmatprep.subr.mxu0 0.0
  %992 = vmatpush1.msra.mxu0 %v214
  %993 = vmatprep.subr.mxu0 0.0
  %994 = vmatpush2.msra.mxu0 0.0
  %995 = vmatprep.subr.mxu0 0.0
  %996 = vmatpush2.msra.mxu0 0.0
  %997 = vmatprep.subr.mxu0 0.0
  %998 = vmatpush2.msra.mxu0 0.0
  %999 = vmatprep.subr.mxu0 0.0
  %1000 = vmatpush2.msra.mxu0 0.0
  %1001 = vmatprep.subr.mxu0 0.0
  %1002 = vmatpush2.msra.mxu0 0.0
  %1003 = vmatprep.subr.mxu0 0.0
  %1004 = vmatpush2.msra.mxu0 0.0
  %1005 = vmatprep.subr.mxu0 0.0
  %1006 = vmatpush2.msra.mxu0 0.0
  %1007 = vmatprep.subr.mxu0 0.0
  %1008 = vmatpush2.msra.mxu0 0.0
  %1009 = vmatprep.subr.mxu0 0.0
  %1010 = vmatpush2.msra.mxu0 0.0
  %1011 = vmatprep.subr.mxu0 0.0
  %1012 = vmatpush2.msra.mxu0 0.0
  %1013 = vmatprep.subr.mxu0 0.0
  %1014 = vmatpush2.msra.mxu0 0.0
  %1015 = vmatprep.subr.mxu0 0.0
  %1016 = vmatpush2.msra.mxu0 0.0
  %1017 = vmatprep.subr.mxu0 0.0
  %1018 = vmatpush2.msra.mxu0 0.0
  %1019 = vmatprep.subr.mxu0 0.0
  %1020 = vmatpush2.msra.mxu0 0.0
  %1021 = vmatprep.subr.mxu0 0.0
  %1022 = vmatpush2.msra.mxu0 0.0
  %1023 = vmatprep.subr.mxu0 0.0
  %1024 = vmatpush2.msra.mxu0 0.0
  %1025 = vmatprep.mubr.f32.mxu0 0.0
  %1026 = vmatmul.mubr.f32.gmra.mxu0 %v959
  %v1027 = vpop.f32.mrf.mxu0
  %v1028 = vadd.f32 0.0, %v1027
  %v1029 = vpop.f32.mrf.mxu0
  %1030 = vdwg.mxu0
  %v1031 = vadd.f32 %v958, %v1028
  %v1032 = vmul.f32 %v1031, 0.5
  %v1033 = vtanh.pop %v1032
  %v1034 = vmul.f32 %v1033, 0.5
  %v1035 = vadd.f32 %v1034, 0.5
  %v1036 = vtanh.pop %v1031
  %v1037 = vmul.f32 %v1035, %v836
  %1039 = vrot.lane.b32.xlu0 %v1036, 64
  %v1040 = vpop.permute.xlu0 %1039
  %v1042 = vmul.f32 %v1035, %v1040
  %1044 = vrot.lane.b32.xlu0 %v1042, 32
  %v1045 = vpop.permute.xlu0 %1044
  %v1047 = vadd.f32 %v1037, %v1045
  %v1048 = vtanh.pop %v1047
  %1050 = vrot.lane.b32.xlu0 %v1048, 64
  %v1051 = vpop.permute.xlu0 %1050
  %v1053 = vmul.f32 %v1035, %v1051
  %1055 = vrot.lane.b32.xlu0 %v1053, 32
  %v1056 = vpop.permute.xlu0 %1055
  %s1058 = sadd.s32 32, 64
  %s1059 = scalar_lea.vmem %s5, %s1058
  %1060 = vst.msk [vmem:[%s1059] sm:$0xff] %vm222, %v1056
  %v1061 = vld [vmem:[%s957] sm:$0xff]
  %v1062 = vsel %vm222, %v951, 0
  %1064 = vmatprep.subr.mxu0 0.0
  %1065 = vmatpush1.msra.mxu0 0.0
  %1066 = vmatprep.subr.mxu0 0.0
  %1067 = vmatpush1.msra.mxu0 0.0
  %1068 = vmatprep.subr.mxu0 0.0
  %1069 = vmatpush1.msra.mxu0 0.0
  %1070 = vmatprep.subr.mxu0 0.0
  %1071 = vmatpush1.msra.mxu0 0.0
  %1072 = vmatprep.subr.mxu0 0.0
  %1073 = vmatpush1.msra.mxu0 0.0
  %1074 = vmatprep.subr.mxu0 0.0
  %1075 = vmatpush1.msra.mxu0 0.0
  %1076 = vmatprep.subr.mxu0 0.0
  %1077 = vmatpush1.msra.mxu0 0.0
  %1078 = vmatprep.subr.mxu0 0.0
  %1079 = vmatpush1.msra.mxu0 0.0
  %1080 = vmatprep.subr.mxu0 0.0
  %1081 = vmatpush1.msra.mxu0 0.0
  %1082 = vmatprep.subr.mxu0 0.0
  %1083 = vmatpush1.msra.mxu0 0.0
  %1084 = vmatprep.subr.mxu0 0.0
  %1085 = vmatpush1.msra.mxu0 0.0
  %1086 = vmatprep.subr.mxu0 0.0
  %1087 = vmatpush1.msra.mxu0 0.0
  %1088 = vmatprep.subr.mxu0 0.0
  %1089 = vmatpush1.msra.mxu0 %v213
  %1090 = vmatprep.subr.mxu0 0.0
  %1091 = vmatpush1.msra.mxu0 %v212
  %1092 = vmatprep.subr.mxu0 0.0
  %1093 = vmatpush1.msra.mxu0 %v211
  %1094 = vmatprep.subr.mxu0 0.0
  %1095 = vmatpush1.msra.mxu0 %v210
  %1096 = vmatprep.subr.mxu0 0.0
  %1097 = vmatpush2.msra.mxu0 0.0
  %1098 = vmatprep.subr.mxu0 0.0
  %1099 = vmatpush2.msra.mxu0 0.0
  %1100 = vmatprep.subr.mxu0 0.0
  %1101 = vmatpush2.msra.mxu0 0.0
  %1102 = vmatprep.subr.mxu0 0.0
  %1103 = vmatpush2.msra.mxu0 0.0
  %1104 = vmatprep.subr.mxu0 0.0
  %1105 = vmatpush2.msra.mxu0 0.0
  %1106 = vmatprep.subr.mxu0 0.0
  %1107 = vmatpush2.msra.mxu0 0.0
  %1108 = vmatprep.subr.mxu0 0.0
  %1109 = vmatpush2.msra.mxu0 0.0
  %1110 = vmatprep.subr.mxu0 0.0
  %1111 = vmatpush2.msra.mxu0 0.0
  %1112 = vmatprep.subr.mxu0 0.0
  %1113 = vmatpush2.msra.mxu0 0.0
  %1114 = vmatprep.subr.mxu0 0.0
  %1115 = vmatpush2.msra.mxu0 0.0
  %1116 = vmatprep.subr.mxu0 0.0
  %1117 = vmatpush2.msra.mxu0 0.0
  %1118 = vmatprep.subr.mxu0 0.0
  %1119 = vmatpush2.msra.mxu0 0.0
  %1120 = vmatprep.subr.mxu0 0.0
  %1121 = vmatpush2.msra.mxu0 0.0
  %1122 = vmatprep.subr.mxu0 0.0
  %1123 = vmatpush2.msra.mxu0 0.0
  %1124 = vmatprep.subr.mxu0 0.0
  %1125 = vmatpush2.msra.mxu0 0.0
  %1126 = vmatprep.subr.mxu0 0.0
  %1127 = vmatpush2.msra.mxu0 0.0
  %1128 = vmatprep.mubr.f32.mxu0 0.0
  %1129 = vmatmul.mubr.f32.gmra.mxu0 %v1062
  %v1130 = vpop.f32.mrf.mxu0
  %v1131 = vadd.f32 0.0, %v1130
  %v1132 = vpop.f32.mrf.mxu0
  %1133 = vdwg.mxu0
  %v1134 = vadd.f32 %v1061, %v1131
  %v1135 = vmul.f32 %v1134, 0.5
  %v1136 = vtanh.pop %v1135
  %v1137 = vmul.f32 %v1136, 0.5
  %v1138 = vadd.f32 %v1137, 0.5
  %v1139 = vtanh.pop %v1134
  %v1140 = vmul.f32 %v1138, %v942
  %1142 = vrot.lane.b32.xlu0 %v1139, 64
  %v1143 = vpop.permute.xlu0 %1142
  %v1145 = vmul.f32 %v1138, %v1143
  %1147 = vrot.lane.b32.xlu0 %v1145, 32
  %v1148 = vpop.permute.xlu0 %1147
  %v1150 = vadd.f32 %v1140, %v1148
  %v1151 = vtanh.pop %v1150
  %1153 = vrot.lane.b32.xlu0 %v1151, 64
  %v1154 = vpop.permute.xlu0 %1153
  %v1156 = vmul.f32 %v1138, %v1154
  %1158 = vrot.lane.b32.xlu0 %v1156, 32
  %v1159 = vpop.permute.xlu0 %1158
  %s1161 = scalar_lea.vmem %s5, 32
  %1162 = vst.msk [vmem:[%s1161] sm:$0xff] %vm222, %v1159
  %v1163 = vld [vmem:[%s852 + $0x8] sm:$0xff]
  %v1164 = vsel %vm222, %v1056, 0
  %1166 = vmatprep.subr.mxu0 0.0
  %1167 = vmatpush1.msra.mxu0 0.0
  %1168 = vmatprep.subr.mxu0 0.0
  %1169 = vmatpush1.msra.mxu0 0.0
  %1170 = vmatprep.subr.mxu0 0.0
  %1171 = vmatpush1.msra.mxu0 0.0
  %1172 = vmatprep.subr.mxu0 0.0
  %1173 = vmatpush1.msra.mxu0 0.0
  %1174 = vmatprep.subr.mxu0 0.0
  %1175 = vmatpush1.msra.mxu0 0.0
  %1176 = vmatprep.subr.mxu0 0.0
  %1177 = vmatpush1.msra.mxu0 0.0
  %1178 = vmatprep.subr.mxu0 0.0
  %1179 = vmatpush1.msra.mxu0 0.0
  %1180 = vmatprep.subr.mxu0 0.0
  %1181 = vmatpush1.msra.mxu0 0.0
  %1182 = vmatprep.subr.mxu0 0.0
  %1183 = vmatpush1.msra.mxu0 0.0
  %1184 = vmatprep.subr.mxu0 0.0
  %1185 = vmatpush1.msra.mxu0 0.0
  %1186 = vmatprep.subr.mxu0 0.0
  %1187 = vmatpush1.msra.mxu0 0.0
  %1188 = vmatprep.subr.mxu0 0.0
  %1189 = vmatpush1.msra.mxu0 0.0
  %1190 = vmatprep.subr.mxu0 0.0
  %1191 = vmatpush1.msra.mxu0 %v217
  %1192 = vmatprep.subr.mxu0 0.0
  %1193 = vmatpush1.msra.mxu0 %v216
  %1194 = vmatprep.subr.mxu0 0.0
  %1195 = vmatpush1.msra.mxu0 %v215
  %1196 = vmatprep.subr.mxu0 0.0
  %1197 = vmatpush1.msra.mxu0 %v214
  %1198 = vmatprep.subr.mxu0 0.0
  %1199 = vmatpush2.msra.mxu0 0.0
  %1200 = vmatprep.subr.mxu0 0.0
  %1201 = vmatpush2.msra.mxu0 0.0
  %1202 = vmatprep.subr.mxu0 0.0
  %1203 = vmatpush2.msra.mxu0 0.0
  %1204 = vmatprep.subr.mxu0 0.0
  %1205 = vmatpush2.msra.mxu0 0.0
  %1206 = vmatprep.subr.mxu0 0.0
  %1207 = vmatpush2.msra.mxu0 0.0
  %1208 = vmatprep.subr.mxu0 0.0
  %1209 = vmatpush2.msra.mxu0 0.0
  %1210 = vmatprep.subr.mxu0 0.0
  %1211 = vmatpush2.msra.mxu0 0.0
  %1212 = vmatprep.subr.mxu0 0.0
  %1213 = vmatpush2.msra.mxu0 0.0
  %1214 = vmatprep.subr.mxu0 0.0
  %1215 = vmatpush2.msra.mxu0 0.0
  %1216 = vmatprep.subr.mxu0 0.0
  %1217 = vmatpush2.msra.mxu0 0.0
  %1218 = vmatprep.subr.mxu0 0.0
  %1219 = vmatpush2.msra.mxu0 0.0
  %1220 = vmatprep.subr.mxu0 0.0
  %1221 = vmatpush2.msra.mxu0 0.0
  %1222 = vmatprep.subr.mxu0 0.0
  %1223 = vmatpush2.msra.mxu0 0.0
  %1224 = vmatprep.subr.mxu0 0.0
  %1225 = vmatpush2.msra.mxu0 0.0
  %1226 = vmatprep.subr.mxu0 0.0
  %1227 = vmatpush2.msra.mxu0 0.0
  %1228 = vmatprep.subr.mxu0 0.0
  %1229 = vmatpush2.msra.mxu0 0.0
  %1230 = vmatprep.mubr.f32.mxu0 0.0
  %1231 = vmatmul.mubr.f32.gmra.mxu0 %v1164
  %v1232 = vpop.f32.mrf.mxu0
  %v1233 = vadd.f32 0.0, %v1232
  %v1234 = vpop.f32.mrf.mxu0
  %1235 = vdwg.mxu0
  %v1236 = vadd.f32 %v1163, %v1233
  %v1237 = vmul.f32 %v1236, 0.5
  %v1238 = vtanh.pop %v1237
  %v1239 = vmul.f32 %v1238, 0.5
  %v1240 = vadd.f32 %v1239, 0.5
  %v1241 = vtanh.pop %v1236
  %v1242 = vmul.f32 %v1240, %v1047
  %1244 = vrot.lane.b32.xlu0 %v1241, 64
  %v1245 = vpop.permute.xlu0 %1244
  %v1247 = vmul.f32 %v1240, %v1245
  %1249 = vrot.lane.b32.xlu0 %v1247, 32
  %v1250 = vpop.permute.xlu0 %1249
  %v1252 = vadd.f32 %v1242, %v1250
  %v1253 = vtanh.pop %v1252
  %1255 = vrot.lane.b32.xlu0 %v1253, 64
  %v1256 = vpop.permute.xlu0 %1255
  %v1258 = vmul.f32 %v1240, %v1256
  %1260 = vrot.lane.b32.xlu0 %v1258, 32
  %v1261 = vpop.permute.xlu0 %1260
  %s1263 = sadd.s32 24, 64
  %s1264 = scalar_lea.vmem %s5, %s1263
  %1265 = vst.msk [vmem:[%s1264] sm:$0xff] %vm222, %v1261
  %v1266 = vld [vmem:[%s746] sm:$0xff]
  %v1267 = vsel %vm222, %v1159, 0
  %1269 = vmatprep.subr.mxu0 0.0
  %1270 = vmatpush1.msra.mxu0 0.0
  %1271 = vmatprep.subr.mxu0 0.0
  %1272 = vmatpush1.msra.mxu0 0.0
  %1273 = vmatprep.subr.mxu0 0.0
  %1274 = vmatpush1.msra.mxu0 0.0
  %1275 = vmatprep.subr.mxu0 0.0
  %1276 = vmatpush1.msra.mxu0 0.0
  %1277 = vmatprep.subr.mxu0 0.0
  %1278 = vmatpush1.msra.mxu0 0.0
  %1279 = vmatprep.subr.mxu0 0.0
  %1280 = vmatpush1.msra.mxu0 0.0
  %1281 = vmatprep.subr.mxu0 0.0
  %1282 = vmatpush1.msra.mxu0 0.0
  %1283 = vmatprep.subr.mxu0 0.0
  %1284 = vmatpush1.msra.mxu0 0.0
  %1285 = vmatprep.subr.mxu0 0.0
  %1286 = vmatpush1.msra.mxu0 0.0
  %1287 = vmatprep.subr.mxu0 0.0
  %1288 = vmatpush1.msra.mxu0 0.0
  %1289 = vmatprep.subr.mxu0 0.0
  %1290 = vmatpush1.msra.mxu0 0.0
  %1291 = vmatprep.subr.mxu0 0.0
  %1292 = vmatpush1.msra.mxu0 0.0
  %1293 = vmatprep.subr.mxu0 0.0
  %1294 = vmatpush1.msra.mxu0 %v213
  %1295 = vmatprep.subr.mxu0 0.0
  %1296 = vmatpush1.msra.mxu0 %v212
  %1297 = vmatprep.subr.mxu0 0.0
  %1298 = vmatpush1.msra.mxu0 %v211
  %1299 = vmatprep.subr.mxu0 0.0
  %1300 = vmatpush1.msra.mxu0 %v210
  %1301 = vmatprep.subr.mxu0 0.0
  %1302 = vmatpush2.msra.mxu0 0.0
  %1303 = vmatprep.subr.mxu0 0.0
  %1304 = vmatpush2.msra.mxu0 0.0
  %1305 = vmatprep.subr.mxu0 0.0
  %1306 = vmatpush2.msra.mxu0 0.0
  %1307 = vmatprep.subr.mxu0 0.0
  %1308 = vmatpush2.msra.mxu0 0.0
  %1309 = vmatprep.subr.mxu0 0.0
  %1310 = vmatpush2.msra.mxu0 0.0
  %1311 = vmatprep.subr.mxu0 0.0
  %1312 = vmatpush2.msra.mxu0 0.0
  %1313 = vmatprep.subr.mxu0 0.0
  %1314 = vmatpush2.msra.mxu0 0.0
  %1315 = vmatprep.subr.mxu0 0.0
  %1316 = vmatpush2.msra.mxu0 0.0
  %1317 = vmatprep.subr.mxu0 0.0
  %1318 = vmatpush2.msra.mxu0 0.0
  %1319 = vmatprep.subr.mxu0 0.0
  %1320 = vmatpush2.msra.mxu0 0.0
  %1321 = vmatprep.subr.mxu0 0.0
  %1322 = vmatpush2.msra.mxu0 0.0
  %1323 = vmatprep.subr.mxu0 0.0
  %1324 = vmatpush2.msra.mxu0 0.0
  %1325 = vmatprep.subr.mxu0 0.0
  %1326 = vmatpush2.msra.mxu0 0.0
  %1327 = vmatprep.subr.mxu0 0.0
  %1328 = vmatpush2.msra.mxu0 0.0
  %1329 = vmatprep.subr.mxu0 0.0
  %1330 = vmatpush2.msra.mxu0 0.0
  %1331 = vmatprep.subr.mxu0 0.0
  %1332 = vmatpush2.msra.mxu0 0.0
  %1333 = vmatprep.mubr.f32.mxu0 0.0
  %1334 = vmatmul.mubr.f32.gmra.mxu0 %v1267
  %v1335 = vpop.f32.mrf.mxu0
  %v1336 = vadd.f32 0.0, %v1335
  %v1337 = vpop.f32.mrf.mxu0
  %1338 = vdwg.mxu0
  %v1339 = vadd.f32 %v1266, %v1336
  %v1340 = vmul.f32 %v1339, 0.5
  %v1341 = vtanh.pop %v1340
  %v1342 = vmul.f32 %v1341, 0.5
  %v1343 = vadd.f32 %v1342, 0.5
  %v1344 = vtanh.pop %v1339
  %v1345 = vmul.f32 %v1343, %v1150
  %1347 = vrot.lane.b32.xlu0 %v1344, 64
  %v1348 = vpop.permute.xlu0 %1347
  %v1350 = vmul.f32 %v1343, %v1348
  %1352 = vrot.lane.b32.xlu0 %v1350, 32
  %v1353 = vpop.permute.xlu0 %1352
  %v1355 = vadd.f32 %v1345, %v1353
  %v1356 = vtanh.pop %v1355
  %1358 = vrot.lane.b32.xlu0 %v1356, 64
  %v1359 = vpop.permute.xlu0 %1358
  %v1361 = vmul.f32 %v1343, %v1359
  %1363 = vrot.lane.b32.xlu0 %v1361, 32
  %v1364 = vpop.permute.xlu0 %1363
  %s1366 = scalar_lea.vmem %s5, 40
  %1367 = vst.msk [vmem:[%s1366] sm:$0xff] %vm222, %v1364
  %v1368 = vld [vmem:[%s641 + $0x8] sm:$0xff]
  %v1369 = vsel %vm222, %v1261, 0
  %1371 = vmatprep.subr.mxu0 0.0
  %1372 = vmatpush1.msra.mxu0 0.0
  %1373 = vmatprep.subr.mxu0 0.0
  %1374 = vmatpush1.msra.mxu0 0.0
  %1375 = vmatprep.subr.mxu0 0.0
  %1376 = vmatpush1.msra.mxu0 0.0
  %1377 = vmatprep.subr.mxu0 0.0
  %1378 = vmatpush1.msra.mxu0 0.0
  %1379 = vmatprep.subr.mxu0 0.0
  %1380 = vmatpush1.msra.mxu0 0.0
  %1381 = vmatprep.subr.mxu0 0.0
  %1382 = vmatpush1.msra.mxu0 0.0
  %1383 = vmatprep.subr.mxu0 0.0
  %1384 = vmatpush1.msra.mxu0 0.0
  %1385 = vmatprep.subr.mxu0 0.0
  %1386 = vmatpush1.msra.mxu0 0.0
  %1387 = vmatprep.subr.mxu0 0.0
  %1388 = vmatpush1.msra.mxu0 0.0
  %1389 = vmatprep.subr.mxu0 0.0
  %1390 = vmatpush1.msra.mxu0 0.0
  %1391 = vmatprep.subr.mxu0 0.0
  %1392 = vmatpush1.msra.mxu0 0.0
  %1393 = vmatprep.subr.mxu0 0.0
  %1394 = vmatpush1.msra.mxu0 0.0
  %1395 = vmatprep.subr.mxu0 0.0
  %1396 = vmatpush1.msra.mxu0 %v217
  %1397 = vmatprep.subr.mxu0 0.0
  %1398 = vmatpush1.msra.mxu0 %v216
  %1399 = vmatprep.subr.mxu0 0.0
  %1400 = vmatpush1.msra.mxu0 %v215
  %1401 = vmatprep.subr.mxu0 0.0
  %1402 = vmatpush1.msra.mxu0 %v214
  %1403 = vmatprep.subr.mxu0 0.0
  %1404 = vmatpush2.msra.mxu0 0.0
  %1405 = vmatprep.subr.mxu0 0.0
  %1406 = vmatpush2.msra.mxu0 0.0
  %1407 = vmatprep.subr.mxu0 0.0
  %1408 = vmatpush2.msra.mxu0 0.0
  %1409 = vmatprep.subr.mxu0 0.0
  %1410 = vmatpush2.msra.mxu0 0.0
  %1411 = vmatprep.subr.mxu0 0.0
  %1412 = vmatpush2.msra.mxu0 0.0
  %1413 = vmatprep.subr.mxu0 0.0
  %1414 = vmatpush2.msra.mxu0 0.0
  %1415 = vmatprep.subr.mxu0 0.0
  %1416 = vmatpush2.msra.mxu0 0.0
  %1417 = vmatprep.subr.mxu0 0.0
  %1418 = vmatpush2.msra.mxu0 0.0
  %1419 = vmatprep.subr.mxu0 0.0
  %1420 = vmatpush2.msra.mxu0 0.0
  %1421 = vmatprep.subr.mxu0 0.0
  %1422 = vmatpush2.msra.mxu0 0.0
  %1423 = vmatprep.subr.mxu0 0.0
  %1424 = vmatpush2.msra.mxu0 0.0
  %1425 = vmatprep.subr.mxu0 0.0
  %1426 = vmatpush2.msra.mxu0 0.0
  %1427 = vmatprep.subr.mxu0 0.0
  %1428 = vmatpush2.msra.mxu0 0.0
  %1429 = vmatprep.subr.mxu0 0.0
  %1430 = vmatpush2.msra.mxu0 0.0
  %1431 = vmatprep.subr.mxu0 0.0
  %1432 = vmatpush2.msra.mxu0 0.0
  %1433 = vmatprep.subr.mxu0 0.0
  %1434 = vmatpush2.msra.mxu0 0.0
  %1435 = vmatprep.mubr.f32.mxu0 0.0
  %1436 = vmatmul.mubr.f32.gmra.mxu0 %v1369
  %v1437 = vpop.f32.mrf.mxu0
  %v1438 = vadd.f32 0.0, %v1437
  %v1439 = vpop.f32.mrf.mxu0
  %1440 = vdwg.mxu0
  %v1441 = vadd.f32 %v1368, %v1438
  %v1442 = vmul.f32 %v1441, 0.5
  %v1443 = vtanh.pop %v1442
  %v1444 = vmul.f32 %v1443, 0.5
  %v1445 = vadd.f32 %v1444, 0.5
  %v1446 = vtanh.pop %v1441
  %v1447 = vmul.f32 %v1445, %v1252
  %1449 = vrot.lane.b32.xlu0 %v1446, 64
  %v1450 = vpop.permute.xlu0 %1449
  %v1452 = vmul.f32 %v1445, %v1450
  %1454 = vrot.lane.b32.xlu0 %v1452, 32
  %v1455 = vpop.permute.xlu0 %1454
  %v1457 = vadd.f32 %v1447, %v1455
  %v1458 = vtanh.pop %v1457
  %1460 = vrot.lane.b32.xlu0 %v1458, 64
  %v1461 = vpop.permute.xlu0 %1460
  %v1463 = vmul.f32 %v1445, %v1461
  %1465 = vrot.lane.b32.xlu0 %v1463, 32
  %v1466 = vpop.permute.xlu0 %1465
  %s1468 = sadd.s32 16, 64
  %s1469 = scalar_lea.vmem %s5, %s1468
  %1470 = vst.msk [vmem:[%s1469] sm:$0xff] %vm222, %v1466
  %v1471 = vld [vmem:[%s535] sm:$0xff]
  %v1472 = vsel %vm222, %v1364, 0
  %1474 = vmatprep.subr.mxu0 0.0
  %1475 = vmatpush1.msra.mxu0 0.0
  %1476 = vmatprep.subr.mxu0 0.0
  %1477 = vmatpush1.msra.mxu0 0.0
  %1478 = vmatprep.subr.mxu0 0.0
  %1479 = vmatpush1.msra.mxu0 0.0
  %1480 = vmatprep.subr.mxu0 0.0
  %1481 = vmatpush1.msra.mxu0 0.0
  %1482 = vmatprep.subr.mxu0 0.0
  %1483 = vmatpush1.msra.mxu0 0.0
  %1484 = vmatprep.subr.mxu0 0.0
  %1485 = vmatpush1.msra.mxu0 0.0
  %1486 = vmatprep.subr.mxu0 0.0
  %1487 = vmatpush1.msra.mxu0 0.0
  %1488 = vmatprep.subr.mxu0 0.0
  %1489 = vmatpush1.msra.mxu0 0.0
  %1490 = vmatprep.subr.mxu0 0.0
  %1491 = vmatpush1.msra.mxu0 0.0
  %1492 = vmatprep.subr.mxu0 0.0
  %1493 = vmatpush1.msra.mxu0 0.0
  %1494 = vmatprep.subr.mxu0 0.0
  %1495 = vmatpush1.msra.mxu0 0.0
  %1496 = vmatprep.subr.mxu0 0.0
  %1497 = vmatpush1.msra.mxu0 0.0
  %1498 = vmatprep.subr.mxu0 0.0
  %1499 = vmatpush1.msra.mxu0 %v213
  %1500 = vmatprep.subr.mxu0 0.0
  %1501 = vmatpush1.msra.mxu0 %v212
  %1502 = vmatprep.subr.mxu0 0.0
  %1503 = vmatpush1.msra.mxu0 %v211
  %1504 = vmatprep.subr.mxu0 0.0
  %1505 = vmatpush1.msra.mxu0 %v210
  %1506 = vmatprep.subr.mxu0 0.0
  %1507 = vmatpush2.msra.mxu0 0.0
  %1508 = vmatprep.subr.mxu0 0.0
  %1509 = vmatpush2.msra.mxu0 0.0
  %1510 = vmatprep.subr.mxu0 0.0
  %1511 = vmatpush2.msra.mxu0 0.0
  %1512 = vmatprep.subr.mxu0 0.0
  %1513 = vmatpush2.msra.mxu0 0.0
  %1514 = vmatprep.subr.mxu0 0.0
  %1515 = vmatpush2.msra.mxu0 0.0
  %1516 = vmatprep.subr.mxu0 0.0
  %1517 = vmatpush2.msra.mxu0 0.0
  %1518 = vmatprep.subr.mxu0 0.0
  %1519 = vmatpush2.msra.mxu0 0.0
  %1520 = vmatprep.subr.mxu0 0.0
  %1521 = vmatpush2.msra.mxu0 0.0
  %1522 = vmatprep.subr.mxu0 0.0
  %1523 = vmatpush2.msra.mxu0 0.0
  %1524 = vmatprep.subr.mxu0 0.0
  %1525 = vmatpush2.msra.mxu0 0.0
  %1526 = vmatprep.subr.mxu0 0.0
  %1527 = vmatpush2.msra.mxu0 0.0
  %1528 = vmatprep.subr.mxu0 0.0
  %1529 = vmatpush2.msra.mxu0 0.0
  %1530 = vmatprep.subr.mxu0 0.0
  %1531 = vmatpush2.msra.mxu0 0.0
  %1532 = vmatprep.subr.mxu0 0.0
  %1533 = vmatpush2.msra.mxu0 0.0
  %1534 = vmatprep.subr.mxu0 0.0
  %1535 = vmatpush2.msra.mxu0 0.0
  %1536 = vmatprep.subr.mxu0 0.0
  %1537 = vmatpush2.msra.mxu0 0.0
  %1538 = vmatprep.mubr.f32.mxu0 0.0
  %1539 = vmatmul.mubr.f32.gmra.mxu0 %v1472
  %v1540 = vpop.f32.mrf.mxu0
  %v1541 = vadd.f32 0.0, %v1540
  %v1542 = vpop.f32.mrf.mxu0
  %1543 = vdwg.mxu0
  %v1544 = vadd.f32 %v1471, %v1541
  %v1545 = vmul.f32 %v1544, 0.5
  %v1546 = vtanh.pop %v1545
  %v1547 = vmul.f32 %v1546, 0.5
  %v1548 = vadd.f32 %v1547, 0.5
  %v1549 = vtanh.pop %v1544
  %v1550 = vmul.f32 %v1548, %v1355
  %1552 = vrot.lane.b32.xlu0 %v1549, 64
  %v1553 = vpop.permute.xlu0 %1552
  %v1555 = vmul.f32 %v1548, %v1553
  %1557 = vrot.lane.b32.xlu0 %v1555, 32
  %v1558 = vpop.permute.xlu0 %1557
  %v1560 = vadd.f32 %v1550, %v1558
  %v1561 = vtanh.pop %v1560
  %1563 = vrot.lane.b32.xlu0 %v1561, 64
  %v1564 = vpop.permute.xlu0 %1563
  %v1566 = vmul.f32 %v1548, %v1564
  %1568 = vrot.lane.b32.xlu0 %v1566, 32
  %v1569 = vpop.permute.xlu0 %1568
  %s1571 = scalar_lea.vmem %s5, 48
  %1572 = vst.msk [vmem:[%s1571] sm:$0xff] %vm222, %v1569
  %v1573 = vld [vmem:[%s430 + $0x8] sm:$0xff]
  %v1574 = vsel %vm222, %v1466, 0
  %1576 = vmatprep.subr.mxu0 0.0
  %1577 = vmatpush1.msra.mxu0 0.0
  %1578 = vmatprep.subr.mxu0 0.0
  %1579 = vmatpush1.msra.mxu0 0.0
  %1580 = vmatprep.subr.mxu0 0.0
  %1581 = vmatpush1.msra.mxu0 0.0
  %1582 = vmatprep.subr.mxu0 0.0
  %1583 = vmatpush1.msra.mxu0 0.0
  %1584 = vmatprep.subr.mxu0 0.0
  %1585 = vmatpush1.msra.mxu0 0.0
  %1586 = vmatprep.subr.mxu0 0.0
  %1587 = vmatpush1.msra.mxu0 0.0
  %1588 = vmatprep.subr.mxu0 0.0
  %1589 = vmatpush1.msra.mxu0 0.0
  %1590 = vmatprep.subr.mxu0 0.0
  %1591 = vmatpush1.msra.mxu0 0.0
  %1592 = vmatprep.subr.mxu0 0.0
  %1593 = vmatpush1.msra.mxu0 0.0
  %1594 = vmatprep.subr.mxu0 0.0
  %1595 = vmatpush1.msra.mxu0 0.0
  %1596 = vmatprep.subr.mxu0 0.0
  %1597 = vmatpush1.msra.mxu0 0.0
  %1598 = vmatprep.subr.mxu0 0.0
  %1599 = vmatpush1.msra.mxu0 0.0
  %1600 = vmatprep.subr.mxu0 0.0
  %1601 = vmatpush1.msra.mxu0 %v217
  %1602 = vmatprep.subr.mxu0 0.0
  %1603 = vmatpush1.msra.mxu0 %v216
  %1604 = vmatprep.subr.mxu0 0.0
  %1605 = vmatpush1.msra.mxu0 %v215
  %1606 = vmatprep.subr.mxu0 0.0
  %1607 = vmatpush1.msra.mxu0 %v214
  %1608 = vmatprep.subr.mxu0 0.0
  %1609 = vmatpush2.msra.mxu0 0.0
  %1610 = vmatprep.subr.mxu0 0.0
  %1611 = vmatpush2.msra.mxu0 0.0
  %1612 = vmatprep.subr.mxu0 0.0
  %1613 = vmatpush2.msra.mxu0 0.0
  %1614 = vmatprep.subr.mxu0 0.0
  %1615 = vmatpush2.msra.mxu0 0.0
  %1616 = vmatprep.subr.mxu0 0.0
  %1617 = vmatpush2.msra.mxu0 0.0
  %1618 = vmatprep.subr.mxu0 0.0
  %1619 = vmatpush2.msra.mxu0 0.0
  %1620 = vmatprep.subr.mxu0 0.0
  %1621 = vmatpush2.msra.mxu0 0.0
  %1622 = vmatprep.subr.mxu0 0.0
  %1623 = vmatpush2.msra.mxu0 0.0
  %1624 = vmatprep.subr.mxu0 0.0
  %1625 = vmatpush2.msra.mxu0 0.0
  %1626 = vmatprep.subr.mxu0 0.0
  %1627 = vmatpush2.msra.mxu0 0.0
  %1628 = vmatprep.subr.mxu0 0.0
  %1629 = vmatpush2.msra.mxu0 0.0
  %1630 = vmatprep.subr.mxu0 0.0
  %1631 = vmatpush2.msra.mxu0 0.0
  %1632 = vmatprep.subr.mxu0 0.0
  %1633 = vmatpush2.msra.mxu0 0.0
  %1634 = vmatprep.subr.mxu0 0.0
  %1635 = vmatpush2.msra.mxu0 0.0
  %1636 = vmatprep.subr.mxu0 0.0
  %1637 = vmatpush2.msra.mxu0 0.0
  %1638 = vmatprep.subr.mxu0 0.0
  %1639 = vmatpush2.msra.mxu0 0.0
  %1640 = vmatprep.mubr.f32.mxu0 0.0
  %1641 = vmatmul.mubr.f32.gmra.mxu0 %v1574
  %v1642 = vpop.f32.mrf.mxu0
  %v1643 = vadd.f32 0.0, %v1642
  %v1644 = vpop.f32.mrf.mxu0
  %1645 = vdwg.mxu0
  %v1646 = vadd.f32 %v1573, %v1643
  %v1647 = vmul.f32 %v1646, 0.5
  %v1648 = vtanh.pop %v1647
  %v1649 = vmul.f32 %v1648, 0.5
  %v1650 = vadd.f32 %v1649, 0.5
  %v1651 = vtanh.pop %v1646
  %v1652 = vmul.f32 %v1650, %v1457
  %1654 = vrot.lane.b32.xlu0 %v1651, 64
  %v1655 = vpop.permute.xlu0 %1654
  %v1657 = vmul.f32 %v1650, %v1655
  %1659 = vrot.lane.b32.xlu0 %v1657, 32
  %v1660 = vpop.permute.xlu0 %1659
  %v1662 = vadd.f32 %v1652, %v1660
  %v1663 = vtanh.pop %v1662
  %1665 = vrot.lane.b32.xlu0 %v1663, 64
  %v1666 = vpop.permute.xlu0 %1665
  %v1668 = vmul.f32 %v1650, %v1666
  %1670 = vrot.lane.b32.xlu0 %v1668, 32
  %v1671 = vpop.permute.xlu0 %1670
  %s1673 = sadd.s32 8, 64
  %s1674 = scalar_lea.vmem %s5, %s1673
  %1675 = vst.msk [vmem:[%s1674] sm:$0xff] %vm222, %v1671
  %v1676 = vld [vmem:[%s326] sm:$0xff]
  %v1677 = vsel %vm222, %v1569, 0
  %1679 = vmatprep.subr.mxu0 0.0
  %1680 = vmatpush1.msra.mxu0 0.0
  %1681 = vmatprep.subr.mxu0 0.0
  %1682 = vmatpush1.msra.mxu0 0.0
  %1683 = vmatprep.subr.mxu0 0.0
  %1684 = vmatpush1.msra.mxu0 0.0
  %1685 = vmatprep.subr.mxu0 0.0
  %1686 = vmatpush1.msra.mxu0 0.0
  %1687 = vmatprep.subr.mxu0 0.0
  %1688 = vmatpush1.msra.mxu0 0.0
  %1689 = vmatprep.subr.mxu0 0.0
  %1690 = vmatpush1.msra.mxu0 0.0
  %1691 = vmatprep.subr.mxu0 0.0
  %1692 = vmatpush1.msra.mxu0 0.0
  %1693 = vmatprep.subr.mxu0 0.0
  %1694 = vmatpush1.msra.mxu0 0.0
  %1695 = vmatprep.subr.mxu0 0.0
  %1696 = vmatpush1.msra.mxu0 0.0
  %1697 = vmatprep.subr.mxu0 0.0
  %1698 = vmatpush1.msra.mxu0 0.0
  %1699 = vmatprep.subr.mxu0 0.0
  %1700 = vmatpush1.msra.mxu0 0.0
  %1701 = vmatprep.subr.mxu0 0.0
  %1702 = vmatpush1.msra.mxu0 0.0
  %1703 = vmatprep.subr.mxu0 0.0
  %1704 = vmatpush1.msra.mxu0 %v213
  %1705 = vmatprep.subr.mxu0 0.0
  %1706 = vmatpush1.msra.mxu0 %v212
  %1707 = vmatprep.subr.mxu0 0.0
  %1708 = vmatpush1.msra.mxu0 %v211
  %1709 = vmatprep.subr.mxu0 0.0
  %1710 = vmatpush1.msra.mxu0 %v210
  %1711 = vmatprep.subr.mxu0 0.0
  %1712 = vmatpush2.msra.mxu0 0.0
  %1713 = vmatprep.subr.mxu0 0.0
  %1714 = vmatpush2.msra.mxu0 0.0
  %1715 = vmatprep.subr.mxu0 0.0
  %1716 = vmatpush2.msra.mxu0 0.0
  %1717 = vmatprep.subr.mxu0 0.0
  %1718 = vmatpush2.msra.mxu0 0.0
  %1719 = vmatprep.subr.mxu0 0.0
  %1720 = vmatpush2.msra.mxu0 0.0
  %1721 = vmatprep.subr.mxu0 0.0
  %1722 = vmatpush2.msra.mxu0 0.0
  %1723 = vmatprep.subr.mxu0 0.0
  %1724 = vmatpush2.msra.mxu0 0.0
  %1725 = vmatprep.subr.mxu0 0.0
  %1726 = vmatpush2.msra.mxu0 0.0
  %1727 = vmatprep.subr.mxu0 0.0
  %1728 = vmatpush2.msra.mxu0 0.0
  %1729 = vmatprep.subr.mxu0 0.0
  %1730 = vmatpush2.msra.mxu0 0.0
  %1731 = vmatprep.subr.mxu0 0.0
  %1732 = vmatpush2.msra.mxu0 0.0
  %1733 = vmatprep.subr.mxu0 0.0
  %1734 = vmatpush2.msra.mxu0 0.0
  %1735 = vmatprep.subr.mxu0 0.0
  %1736 = vmatpush2.msra.mxu0 0.0
  %1737 = vmatprep.subr.mxu0 0.0
  %1738 = vmatpush2.msra.mxu0 0.0
  %1739 = vmatprep.subr.mxu0 0.0
  %1740 = vmatpush2.msra.mxu0 0.0
  %1741 = vmatprep.subr.mxu0 0.0
  %1742 = vmatpush2.msra.mxu0 0.0
  %1743 = vmatprep.mubr.f32.mxu0 0.0
  %1744 = vmatmul.mubr.f32.gmra.mxu0 %v1677
  %v1745 = vpop.f32.mrf.mxu0
  %v1746 = vadd.f32 0.0, %v1745
  %v1747 = vpop.f32.mrf.mxu0
  %1748 = vdwg.mxu0
  %v1749 = vadd.f32 %v1676, %v1746
  %v1750 = vmul.f32 %v1749, 0.5
  %v1751 = vtanh.pop %v1750
  %v1752 = vmul.f32 %v1751, 0.5
  %v1753 = vadd.f32 %v1752, 0.5
  %v1754 = vtanh.pop %v1749
  %v1755 = vmul.f32 %v1753, %v1560
  %1757 = vrot.lane.b32.xlu0 %v1754, 64
  %v1758 = vpop.permute.xlu0 %1757
  %v1760 = vmul.f32 %v1753, %v1758
  %1762 = vrot.lane.b32.xlu0 %v1760, 32
  %v1763 = vpop.permute.xlu0 %1762
  %v1765 = vadd.f32 %v1755, %v1763
  %v1766 = vtanh.pop %v1765
  %1768 = vrot.lane.b32.xlu0 %v1766, 64
  %v1769 = vpop.permute.xlu0 %1768
  %v1771 = vmul.f32 %v1753, %v1769
  %1773 = vrot.lane.b32.xlu0 %v1771, 32
  %v1774 = vpop.permute.xlu0 %1773
  %s1776 = scalar_lea.vmem %s5, 56
  %1777 = vst.msk [vmem:[%s1776] sm:$0xff] %vm222, %v1774
  %v1778 = vld [vmem:[%s220 + $0x8] sm:$0xff]
  %v1779 = vsel %vm222, %v1671, 0
  %1781 = vmatprep.subr.mxu0 0.0
  %1782 = vmatpush1.msra.mxu0 0.0
  %1783 = vmatprep.subr.mxu0 0.0
  %1784 = vmatpush1.msra.mxu0 0.0
  %1785 = vmatprep.subr.mxu0 0.0
  %1786 = vmatpush1.msra.mxu0 0.0
  %1787 = vmatprep.subr.mxu0 0.0
  %1788 = vmatpush1.msra.mxu0 0.0
  %1789 = vmatprep.subr.mxu0 0.0
  %1790 = vmatpush1.msra.mxu0 0.0
  %1791 = vmatprep.subr.mxu0 0.0
  %1792 = vmatpush1.msra.mxu0 0.0
  %1793 = vmatprep.subr.mxu0 0.0
  %1794 = vmatpush1.msra.mxu0 0.0
  %1795 = vmatprep.subr.mxu0 0.0
  %1796 = vmatpush1.msra.mxu0 0.0
  %1797 = vmatprep.subr.mxu0 0.0
  %1798 = vmatpush1.msra.mxu0 0.0
  %1799 = vmatprep.subr.mxu0 0.0
  %1800 = vmatpush1.msra.mxu0 0.0
  %1801 = vmatprep.subr.mxu0 0.0
  %1802 = vmatpush1.msra.mxu0 0.0
  %1803 = vmatprep.subr.mxu0 0.0
  %1804 = vmatpush1.msra.mxu0 0.0
  %1805 = vmatprep.subr.mxu0 0.0
  %1806 = vmatpush1.msra.mxu0 %v217
  %1807 = vmatprep.subr.mxu0 0.0
  %1808 = vmatpush1.msra.mxu0 %v216
  %1809 = vmatprep.subr.mxu0 0.0
  %1810 = vmatpush1.msra.mxu0 %v215
  %1811 = vmatprep.subr.mxu0 0.0
  %1812 = vmatpush1.msra.mxu0 %v214
  %1813 = vmatprep.subr.mxu0 0.0
  %1814 = vmatpush2.msra.mxu0 0.0
  %1815 = vmatprep.subr.mxu0 0.0
  %1816 = vmatpush2.msra.mxu0 0.0
  %1817 = vmatprep.subr.mxu0 0.0
  %1818 = vmatpush2.msra.mxu0 0.0
  %1819 = vmatprep.subr.mxu0 0.0
  %1820 = vmatpush2.msra.mxu0 0.0
  %1821 = vmatprep.subr.mxu0 0.0
  %1822 = vmatpush2.msra.mxu0 0.0
  %1823 = vmatprep.subr.mxu0 0.0
  %1824 = vmatpush2.msra.mxu0 0.0
  %1825 = vmatprep.subr.mxu0 0.0
  %1826 = vmatpush2.msra.mxu0 0.0
  %1827 = vmatprep.subr.mxu0 0.0
  %1828 = vmatpush2.msra.mxu0 0.0
  %1829 = vmatprep.subr.mxu0 0.0
  %1830 = vmatpush2.msra.mxu0 0.0
  %1831 = vmatprep.subr.mxu0 0.0
  %1832 = vmatpush2.msra.mxu0 0.0
  %1833 = vmatprep.subr.mxu0 0.0
  %1834 = vmatpush2.msra.mxu0 0.0
  %1835 = vmatprep.subr.mxu0 0.0
  %1836 = vmatpush2.msra.mxu0 0.0
  %1837 = vmatprep.subr.mxu0 0.0
  %1838 = vmatpush2.msra.mxu0 0.0
  %1839 = vmatprep.subr.mxu0 0.0
  %1840 = vmatpush2.msra.mxu0 0.0
  %1841 = vmatprep.subr.mxu0 0.0
  %1842 = vmatpush2.msra.mxu0 0.0
  %1843 = vmatprep.subr.mxu0 0.0
  %1844 = vmatpush2.msra.mxu0 0.0
  %1845 = vmatprep.mubr.f32.mxu0 0.0
  %1846 = vmatmul.mubr.f32.gmra.mxu0 %v1779
  %v1847 = vpop.f32.mrf.mxu0
  %v1848 = vadd.f32 0.0, %v1847
  %v1849 = vpop.f32.mrf.mxu0
  %1850 = vdwg.mxu0
  %v1851 = vadd.f32 %v1778, %v1848
  %v1852 = vmul.f32 %v1851, 0.5
  %v1853 = vtanh.pop %v1852
  %v1854 = vmul.f32 %v1853, 0.5
  %v1855 = vadd.f32 %v1854, 0.5
  %v1856 = vtanh.pop %v1851
  %v1857 = vmul.f32 %v1855, %v1662
  %1859 = vrot.lane.b32.xlu0 %v1856, 64
  %v1860 = vpop.permute.xlu0 %1859
  %v1862 = vmul.f32 %v1855, %v1860
  %1864 = vrot.lane.b32.xlu0 %v1862, 32
  %v1865 = vpop.permute.xlu0 %1864
  %v1867 = vadd.f32 %v1857, %v1865
  %v1868 = vtanh.pop %v1867
  %1870 = vrot.lane.b32.xlu0 %v1868, 64
  %v1871 = vpop.permute.xlu0 %1870
  %v1873 = vmul.f32 %v1855, %v1871
  %1875 = vrot.lane.b32.xlu0 %v1873, 32
  %v1876 = vpop.permute.xlu0 %1875
  %s1878 = sadd.s32 0, 64
  %s1879 = scalar_lea.vmem %s5, %s1878
  %1880 = vst.msk [vmem:[%s1879] sm:$0xff] %vm222, %v1876
  // Predicated region
  $region22: #{bilstm_encoder_forward.3} parent=0 // pred_check
    _
  $region23: #{bilstm_encoder_forward.3} parent=0 // pred_check_branch
    %1882 = sbr.rel (0) target = $region25
  $region24: #{bilstm_encoder_forward.3} parent=0 // pred_region
    _
  $region25: #{bilstm_encoder_forward.3} parent=0 // pred_fallthru
    _
  // Predicated region
  $region26: #{bilstm_encoder_forward.3} parent=0 // pred_check
    _
  $region27: #{bilstm_encoder_forward.3} parent=0 // pred_check_branch
    %1884 = sbr.rel (0) target = $region29
  $region28: #{bilstm_encoder_forward.3} parent=0 // pred_region
    _
  $region29: #{bilstm_encoder_forward.3} parent=0 // pred_fallthru
    _

// kernel: bilstm_encoder_forward.2
$region0: #{bilstm_encoder_forward.2}
  #allocation0 [shape = 'u32[]', space=smem, size = 0x4, offset = 0x4, fixed_abs, tag = 'smem constant byte address 0x4 - core index']
  #allocation1 [shape = 'u32[144,128]{1,0:T(1,128)}', space=vmem, size = 0x12000, scoped, tag = 'internal scratch']
  #allocation2 [shape = 'f32[64,256]{1,0:T(8,128)}', space=vmem, size = 0x10000, scoped, tag = 'scratch operand']
  %s0 = inlined_call_operand.vmem [shape: f32[64,32], index: 0, kind: input, shape index: {}]
  %s1 = inlined_call_operand.vmem [shape: f32[32,256], index: 1, kind: input, shape index: {}]
  %s2 = inlined_call_operand.vmem [shape: f32[1,256], index: 2, kind: input, shape index: {}]
  %s3 = inlined_call_operand.vmem [shape: f32[32,128], index: 3, kind: input, shape index: {}]
  %s4 = inlined_call_operand.vmem [shape: f32[32,128], index: 4, kind: input, shape index: {}]
  %s5 = inlined_call_operand.vmem [shape: f32[2,64,32], index: 5, kind: output, shape index: {}]
  %s6 = sld [smem:[#allocation0]]
  $region30: #{bilstm_encoder_forward.2} parent=0
    _
  %s8 = ssub.s32 1, %s6
  %s9 = scalar_select 0, %s8, %s6
  // Predicated region
  $region2: #{bilstm_encoder_forward.2} parent=0 // pred_check
    _
  $region3: #{bilstm_encoder_forward.2} parent=0 // pred_check_branch
    %11 = sbr.rel (0) target = $region5
  $region4: #{bilstm_encoder_forward.2} parent=0 // pred_region
    _
  $region5: #{bilstm_encoder_forward.2} parent=0 // pred_fallthru
    _
  // Predicated region
  $region6: #{bilstm_encoder_forward.2} parent=0 // pred_check
    _
  $region7: #{bilstm_encoder_forward.2} parent=0 // pred_check_branch
    %13 = sbr.rel (0) target = $region9
  $region8: #{bilstm_encoder_forward.2} parent=0 // pred_region
    _
  $region9: #{bilstm_encoder_forward.2} parent=0 // pred_fallthru
    _
  // Predicated region
  $region10: #{bilstm_encoder_forward.2} parent=0 // pred_check
    _
  $region11: #{bilstm_encoder_forward.2} parent=0 // pred_check_branch
    %15 = sbr.rel (0) target = $region13
  $region12: #{bilstm_encoder_forward.2} parent=0 // pred_region
    _
  $region13: #{bilstm_encoder_forward.2} parent=0 // pred_fallthru
    _
  // Predicated region
  $region14: #{bilstm_encoder_forward.2} parent=0 // pred_check
    _
  $region15: #{bilstm_encoder_forward.2} parent=0 // pred_check_branch
    %17 = sbr.rel (0) target = $region17
  $region16: #{bilstm_encoder_forward.2} parent=0 // pred_region
    _
  $region17: #{bilstm_encoder_forward.2} parent=0 // pred_fallthru
    _
  // Predicated region
  $region18: #{bilstm_encoder_forward.2} parent=0 // pred_check
    _
  $region19: #{bilstm_encoder_forward.2} parent=0 // pred_check_branch
    %19 = sbr.rel (0) target = $region21
  $region20: #{bilstm_encoder_forward.2} parent=0 // pred_region
    _
  $region21: #{bilstm_encoder_forward.2} parent=0 // pred_fallthru
    _
  %v20 = vld [vmem:[%s0] sm:$0xff]
  %v21 = vld [vmem:[%s0 + $0x8] sm:$0xff]
  %v22 = vld [vmem:[%s0 + $0x10] sm:$0xff]
  %v23 = vld [vmem:[%s0 + $0x18] sm:$0xff]
  %v24 = vld [vmem:[%s0 + $0x20] sm:$0xff]
  %v25 = vld [vmem:[%s0 + $0x28] sm:$0xff]
  %v26 = vld [vmem:[%s0 + $0x30] sm:$0xff]
  %v27 = vld [vmem:[%s0 + $0x38] sm:$0xff]
  %v28 = vld [vmem:[%s1] sm:$0xff]
  %v29 = vld [vmem:[%s1 + $0x8] sm:$0xff]
  %v30 = vld [vmem:[%s1 + $0x10] sm:$0xff]
  %v31 = vld [vmem:[%s1 + $0x18] sm:$0xff]
  %v32 = vld [vmem:[%s1 + $0x20] sm:$0xff]
  %v33 = vld [vmem:[%s1 + $0x28] sm:$0xff]
  %v34 = vld [vmem:[%s1 + $0x30] sm:$0xff]
  %v35 = vld [vmem:[%s1 + $0x38] sm:$0xff]
  %v36 = vld [vmem:[%s2] sm:$0x3]
  %v38 = vlaneseq
  %v39 = vshrl.u32 %v38, 7
  %v40 = vsub.s32 0, %v39
  %v41 = vrot.slane %v36, %v40
  %v42 = vlaneseq
  %v43 = vshrl.u32 %v42, 7
  %v44 = vsub.s32 1, %v43
  %v45 = vrot.slane %v36, %v44
  %vm48 = vcmask 261120
  %v50 = vsel %vm48, %v20, 0
  %v53 = vsel %vm48, %v21, 0
  %v56 = vsel %vm48, %v22, 0
  %v59 = vsel %vm48, %v23, 0
  %v62 = vsel %vm48, %v24, 0
  %v65 = vsel %vm48, %v25, 0
  %v68 = vsel %vm48, %v26, 0
  %v71 = vsel %vm48, %v27, 0
  %73 = vmatprep.subr.mxu0 0.0
  %74 = vmatpush1.msra.mxu0 0.0
  %75 = vmatprep.subr.mxu0 0.0
  %76 = vmatpush1.msra.mxu0 0.0
  %77 = vmatprep.subr.mxu0 0.0
  %78 = vmatpush1.msra.mxu0 0.0
  %79 = vmatprep.subr.mxu0 0.0
  %80 = vmatpush1.msra.mxu0 0.0
  %81 = vmatprep.subr.mxu0 0.0
  %82 = vmatpush1.msra.mxu0 0.0
  %83 = vmatprep.subr.mxu0 0.0
  %84 = vmatpush1.msra.mxu0 0.0
  %85 = vmatprep.subr.mxu0 0.0
  %86 = vmatpush1.msra.mxu0 0.0
  %87 = vmatprep.subr.mxu0 0.0
  %88 = vmatpush1.msra.mxu0 0.0
  %89 = vmatprep.subr.mxu0 0.0
  %90 = vmatpush1.msra.mxu0 0.0
  %91 = vmatprep.subr.mxu0 0.0
  %92 = vmatpush1.msra.mxu0 0.0
  %93 = vmatprep.subr.mxu0 0.0
  %94 = vmatpush1.msra.mxu0 0.0
  %95 = vmatprep.subr.mxu0 0.0
  %96 = vmatpush1.msra.mxu0 0.0
  %97 = vmatprep.subr.mxu0 %v35
  %98 = vmatpush1.msra.mxu0 %v34
  %99 = vmatprep.subr.mxu0 %v33
  %100 = vmatpush1.msra.mxu0 %v32
  %101 = vmatprep.subr.mxu0 %v31
  %102 = vmatpush1.msra.mxu0 %v30
  %103 = vmatprep.subr.mxu0 %v29
  %104 = vmatpush1.msra.mxu0 %v28
  %105 = vmatprep.subr.mxu0 0.0
  %106 = vmatpush2.msra.mxu0 0.0
  %107 = vmatprep.subr.mxu0 0.0
  %108 = vmatpush2.msra.mxu0 0.0
  %109 = vmatprep.subr.mxu0 0.0
  %110 = vmatpush2.msra.mxu0 0.0
  %111 = vmatprep.subr.mxu0 0.0
  %112 = vmatpush2.msra.mxu0 0.0
  %113 = vmatprep.subr.mxu0 0.0
  %114 = vmatpush2.msra.mxu0 0.0
  %115 = vmatprep.subr.mxu0 0.0
  %116 = vmatpush2.msra.mxu0 0.0
  %117 = vmatprep.subr.mxu0 0.0
  %118 = vmatpush2.msra.mxu0 0.0
  %119 = vmatprep.subr.mxu0 0.0
  %120 = vmatpush2.msra.mxu0 0.0
  %121 = vmatprep.subr.mxu0 0.0
  %122 = vmatpush2.msra.mxu0 0.0
  %123 = vmatprep.subr.mxu0 0.0
  %124 = vmatpush2.msra.mxu0 0.0
  %125 = vmatprep.subr.mxu0 0.0
  %126 = vmatpush2.msra.mxu0 0.0
  %127 = vmatprep.subr.mxu0 0.0
  %128 = vmatpush2.msra.mxu0 0.0
  %129 = vmatprep.subr.mxu0 0.0
  %130 = vmatpush2.msra.mxu0 0.0
  %131 = vmatprep.subr.mxu0 0.0
  %132 = vmatpush2.msra.mxu0 0.0
  %133 = vmatprep.subr.mxu0 0.0
  %134 = vmatpush2.msra.mxu0 0.0
  %135 = vmatprep.subr.mxu0 0.0
  %136 = vmatpush2.msra.mxu0 0.0
  %137 = vmatprep.mubr.f32.mxu0 0.0
  %138 = vmatmul.mubr.f32.gmra.mxu0 %v50
  %v139 = vpop.f32.mrf.mxu0
  %v140 = vadd.f32 %v41, %v139
  %v141 = vpop.f32.mrf.mxu0
  %v142 = vadd.f32 %v45, %v141
  %143 = vmatprep.mubr.f32.mxu0 0.0
  %144 = vmatmul.mubr.f32.gmra.mxu0 %v53
  %v145 = vpop.f32.mrf.mxu0
  %v146 = vadd.f32 %v41, %v145
  %v147 = vpop.f32.mrf.mxu0
  %v148 = vadd.f32 %v45, %v147
  %149 = vmatprep.mubr.f32.mxu0 0.0
  %150 = vmatmul.mubr.f32.gmra.mxu0 %v56
  %v151 = vpop.f32.mrf.mxu0
  %v152 = vadd.f32 %v41, %v151
  %v153 = vpop.f32.mrf.mxu0
  %v154 = vadd.f32 %v45, %v153
  %155 = vmatprep.mubr.f32.mxu0 0.0
  %156 = vmatmul.mubr.f32.gmra.mxu0 %v59
  %v157 = vpop.f32.mrf.mxu0
  %v158 = vadd.f32 %v41, %v157
  %v159 = vpop.f32.mrf.mxu0
  %v160 = vadd.f32 %v45, %v159
  %161 = vmatprep.mubr.f32.mxu0 0.0
  %162 = vmatmul.mubr.f32.gmra.mxu0 %v62
  %v163 = vpop.f32.mrf.mxu0
  %v164 = vadd.f32 %v41, %v163
  %v165 = vpop.f32.mrf.mxu0
  %v166 = vadd.f32 %v45, %v165
  %167 = vmatprep.mubr.f32.mxu0 0.0
  %168 = vmatmul.mubr.f32.gmra.mxu0 %v65
  %v169 = vpop.f32.mrf.mxu0
  %v170 = vadd.f32 %v41, %v169
  %v171 = vpop.f32.mrf.mxu0
  %v172 = vadd.f32 %v45, %v171
  %173 = vmatprep.mubr.f32.mxu0 0.0
  %174 = vmatmul.mubr.f32.gmra.mxu0 %v68
  %v175 = vpop.f32.mrf.mxu0
  %v176 = vadd.f32 %v41, %v175
  %v177 = vpop.f32.mrf.mxu0
  %v178 = vadd.f32 %v45, %v177
  %179 = vmatprep.mubr.f32.mxu0 0.0
  %180 = vmatmul.mubr.f32.gmra.mxu0 %v71
  %v181 = vpop.f32.mrf.mxu0
  %v182 = vadd.f32 %v41, %v181
  %v183 = vpop.f32.mrf.mxu0
  %v184 = vadd.f32 %v45, %v183
  %185 = vdwg.mxu0
  %186 = vst [vmem:[#allocation2] sm:$0xff] %v140
  %187 = vst [vmem:[#allocation2 + $0x8] sm:$0xff] %v142
  %188 = vst [vmem:[#allocation2 + $0x10] sm:$0xff] %v146
  %189 = vst [vmem:[#allocation2 + $0x18] sm:$0xff] %v148
  %190 = vst [vmem:[#allocation2 + $0x20] sm:$0xff] %v152
  %191 = vst [vmem:[#allocation2 + $0x28] sm:$0xff] %v154
  %192 = vst [vmem:[#allocation2 + $0x30] sm:$0xff] %v158
  %193 = vst [vmem:[#allocation2 + $0x38] sm:$0xff] %v160
  %194 = vst [vmem:[#allocation2 + $0x40] sm:$0xff] %v164
  %195 = vst [vmem:[#allocation2 + $0x48] sm:$0xff] %v166
  %196 = vst [vmem:[#allocation2 + $0x50] sm:$0xff] %v170
  %197 = vst [vmem:[#allocation2 + $0x58] sm:$0xff] %v172
  %198 = vst [vmem:[#allocation2 + $0x60] sm:$0xff] %v176
  %199 = vst [vmem:[#allocation2 + $0x68] sm:$0xff] %v178
  %200 = vst [vmem:[#allocation2 + $0x70] sm:$0xff] %v182
  %201 = vst [vmem:[#allocation2 + $0x78] sm:$0xff] %v184
  %v202 = vld [vmem:[%s3] sm:$0xff]
  %v203 = vld [vmem:[%s3 + $0x8] sm:$0xff]
  %v204 = vld [vmem:[%s3 + $0x10] sm:$0xff]
  %v205 = vld [vmem:[%s3 + $0x18] sm:$0xff]
  %v206 = vld [vmem:[%s4] sm:$0xff]
  %v207 = vld [vmem:[%s4 + $0x8] sm:$0xff]
  %v208 = vld [vmem:[%s4 + $0x10] sm:$0xff]
  %v209 = vld [vmem:[%s4 + $0x18] sm:$0xff]
  %s210 = smul.u32 0, 2
  %s211 = smul.addr %s210, 8
  %s212 = scalar_lea.vmem [#allocation2], %s211
  %v213 = vld [vmem:[%s212] sm:$0xff]
  %v215 = vsel %vm48, 0.0, 0
  %217 = vmatprep.subr.mxu0 0.0
  %218 = vmatpush1.msra.mxu0 0.0
  %219 = vmatprep.subr.mxu0 0.0
  %220 = vmatpush1.msra.mxu0 0.0
  %221 = vmatprep.subr.mxu0 0.0
  %222 = vmatpush1.msra.mxu0 0.0
  %223 = vmatprep.subr.mxu0 0.0
  %224 = vmatpush1.msra.mxu0 0.0
  %225 = vmatprep.subr.mxu0 0.0
  %226 = vmatpush1.msra.mxu0 0.0
  %227 = vmatprep.subr.mxu0 0.0
  %228 = vmatpush1.msra.mxu0 0.0
  %229 = vmatprep.subr.mxu0 0.0
  %230 = vmatpush1.msra.mxu0 0.0
  %231 = vmatprep.subr.mxu0 0.0
  %232 = vmatpush1.msra.mxu0 0.0
  %233 = vmatprep.subr.mxu0 0.0
  %234 = vmatpush1.msra.mxu0 0.0
  %235 = vmatprep.subr.mxu0 0.0
  %236 = vmatpush1.msra.mxu0 0.0
  %237 = vmatprep.subr.mxu0 0.0
  %238 = vmatpush1.msra.mxu0 0.0
  %239 = vmatprep.subr.mxu0 0.0
  %240 = vmatpush1.msra.mxu0 0.0
  %241 = vmatprep.subr.mxu0 0.0
  %242 = vmatpush1.msra.mxu0 %v205
  %243 = vmatprep.subr.mxu0 0.0
  %244 = vmatpush1.msra.mxu0 %v204
  %245 = vmatprep.subr.mxu0 0.0
  %246 = vmatpush1.msra.mxu0 %v203
  %247 = vmatprep.subr.mxu0 0.0
  %248 = vmatpush1.msra.mxu0 %v202
  %249 = vmatprep.subr.mxu0 0.0
  %250 = vmatpush2.msra.mxu0 0.0
  %251 = vmatprep.subr.mxu0 0.0
  %252 = vmatpush2.msra.mxu0 0.0
  %253 = vmatprep.subr.mxu0 0.0
  %254 = vmatpush2.msra.mxu0 0.0
  %255 = vmatprep.subr.mxu0 0.0
  %256 = vmatpush2.msra.mxu0 0.0
  %257 = vmatprep.subr.mxu0 0.0
  %258 = vmatpush2.msra.mxu0 0.0
  %259 = vmatprep.subr.mxu0 0.0
  %260 = vmatpush2.msra.mxu0 0.0
  %261 = vmatprep.subr.mxu0 0.0
  %262 = vmatpush2.msra.mxu0 0.0
  %263 = vmatprep.subr.mxu0 0.0
  %264 = vmatpush2.msra.mxu0 0.0
  %265 = vmatprep.subr.mxu0 0.0
  %266 = vmatpush2.msra.mxu0 0.0
  %267 = vmatprep.subr.mxu0 0.0
  %268 = vmatpush2.msra.mxu0 0.0
  %269 = vmatprep.subr.mxu0 0.0
  %270 = vmatpush2.msra.mxu0 0.0
  %271 = vmatprep.subr.mxu0 0.0
  %272 = vmatpush2.msra.mxu0 0.0
  %273 = vmatprep.subr.mxu0 0.0
  %274 = vmatpush2.msra.mxu0 0.0
  %275 = vmatprep.subr.mxu0 0.0
  %276 = vmatpush2.msra.mxu0 0.0
  %277 = vmatprep.subr.mxu0 0.0
  %278 = vmatpush2.msra.mxu0 0.0
  %279 = vmatprep.subr.mxu0 0.0
  %280 = vmatpush2.msra.mxu0 0.0
  %281 = vmatprep.mubr.f32.mxu0 0.0
  %282 = vmatmul.mubr.f32.gmra.mxu0 %v215
  %v283 = vpop.f32.mrf.mxu0
  %v284 = vadd.f32 0.0, %v283
  %v285 = vpop.f32.mrf.mxu0
  %286 = vdwg.mxu0
  %v287 = vadd.f32 %v213, %v284
  %v288 = vmul.f32 %v287, 0.5
  %v289 = vtanh.pop %v288
  %v290 = vmul.f32 %v289, 0.5
  %v291 = vadd.f32 %v290, 0.5
  %v292 = vtanh.pop %v287
  %v293 = vmul.f32 %v291, 0.0
  %295 = vrot.lane.b32.xlu0 %v292, 64
  %v296 = vpop.permute.xlu0 %295
  %v298 = vmul.f32 %v291, %v296
  %300 = vrot.lane.b32.xlu0 %v298, 32
  %v301 = vpop.permute.xlu0 %300
  %v303 = vadd.f32 %v293, %v301
  %v304 = vtanh.pop %v303
  %306 = vrot.lane.b32.xlu0 %v304, 64
  %v307 = vpop.permute.xlu0 %306
  %v309 = vmul.f32 %v291, %v307
  %311 = vrot.lane.b32.xlu0 %v309, 32
  %v312 = vpop.permute.xlu0 %311
  %314 = vst.msk [vmem:[%s5] sm:$0xff] %vm48, %v312
  %s315 = smul.u32 7, 2
  %s316 = smul.addr %s315, 8
  %s317 = scalar_lea.vmem [#allocation2], %s316
  %v318 = vld [vmem:[%s317 + $0x8] sm:$0xff]
  %319 = vmatprep.subr.mxu0 0.0
  %320 = vmatpush1.msra.mxu0 0.0
  %321 = vmatprep.subr.mxu0 0.0
  %322 = vmatpush1.msra.mxu0 0.0
  %323 = vmatprep.subr.mxu0 0.0
  %324 = vmatpush1.msra.mxu0 0.0
  %325 = vmatprep.subr.mxu0 0.0
  %326 = vmatpush1.msra.mxu0 0.0
  %327 = vmatprep.subr.mxu0 0.0
  %328 = vmatpush1.msra.mxu0 0.0
  %329 = vmatprep.subr.mxu0 0.0
  %330 = vmatpush1.msra.mxu0 0.0
  %331 = vmatprep.subr.mxu0 0.0
  %332 = vmatpush1.msra.mxu0 0.0
  %333 = vmatprep.subr.mxu0 0.0
  %334 = vmatpush1.msra.mxu0 0.0
  %335 = vmatprep.subr.mxu0 0.0
  %336 = vmatpush1.msra.mxu0 0.0
  %337 = vmatprep.subr.mxu0 0.0
  %338 = vmatpush1.msra.mxu0 0.0
  %339 = vmatprep.subr.mxu0 0.0
  %340 = vmatpush1.msra.mxu0 0.0
  %341 = vmatprep.subr.mxu0 0.0
  %342 = vmatpush1.msra.mxu0 0.0
  %343 = vmatprep.subr.mxu0 0.0
  %344 = vmatpush1.msra.mxu0 %v209
  %345 = vmatprep.subr.mxu0 0.0
  %346 = vmatpush1.msra.mxu0 %v208
  %347 = vmatprep.subr.mxu0 0.0
  %348 = vmatpush1.msra.mxu0 %v207
  %349 = vmatprep.subr.mxu0 0.0
  %350 = vmatpush1.msra.mxu0 %v206
  %351 = vmatprep.subr.mxu0 0.0
  %352 = vmatpush2.msra.mxu0 0.0
  %353 = vmatprep.subr.mxu0 0.0
  %354 = vmatpush2.msra.mxu0 0.0
  %355 = vmatprep.subr.mxu0 0.0
  %356 = vmatpush2.msra.mxu0 0.0
  %357 = vmatprep.subr.mxu0 0.0
  %358 = vmatpush2.msra.mxu0 0.0
  %359 = vmatprep.subr.mxu0 0.0
  %360 = vmatpush2.msra.mxu0 0.0
  %361 = vmatprep.subr.mxu0 0.0
  %362 = vmatpush2.msra.mxu0 0.0
  %363 = vmatprep.subr.mxu0 0.0
  %364 = vmatpush2.msra.mxu0 0.0
  %365 = vmatprep.subr.mxu0 0.0
  %366 = vmatpush2.msra.mxu0 0.0
  %367 = vmatprep.subr.mxu0 0.0
  %368 = vmatpush2.msra.mxu0 0.0
  %369 = vmatprep.subr.mxu0 0.0
  %370 = vmatpush2.msra.mxu0 0.0
  %371 = vmatprep.subr.mxu0 0.0
  %372 = vmatpush2.msra.mxu0 0.0
  %373 = vmatprep.subr.mxu0 0.0
  %374 = vmatpush2.msra.mxu0 0.0
  %375 = vmatprep.subr.mxu0 0.0
  %376 = vmatpush2.msra.mxu0 0.0
  %377 = vmatprep.subr.mxu0 0.0
  %378 = vmatpush2.msra.mxu0 0.0
  %379 = vmatprep.subr.mxu0 0.0
  %380 = vmatpush2.msra.mxu0 0.0
  %381 = vmatprep.subr.mxu0 0.0
  %382 = vmatpush2.msra.mxu0 0.0
  %383 = vmatprep.mubr.f32.mxu0 0.0
  %384 = vmatmul.mubr.f32.gmra.mxu0 %v215
  %v385 = vpop.f32.mrf.mxu0
  %v386 = vadd.f32 0.0, %v385
  %v387 = vpop.f32.mrf.mxu0
  %388 = vdwg.mxu0
  %v389 = vadd.f32 %v318, %v386
  %v390 = vmul.f32 %v389, 0.5
  %v391 = vtanh.pop %v390
  %v392 = vmul.f32 %v391, 0.5
  %v393 = vadd.f32 %v392, 0.5
  %v394 = vtanh.pop %v389
  %v395 = vmul.f32 %v393, 0.0
  %397 = vrot.lane.b32.xlu0 %v394, 64
  %v398 = vpop.permute.xlu0 %397
  %v400 = vmul.f32 %v393, %v398
  %402 = vrot.lane.b32.xlu0 %v400, 32
  %v403 = vpop.permute.xlu0 %402
  %v405 = vadd.f32 %v395, %v403
  %v406 = vtanh.pop %v405
  %408 = vrot.lane.b32.xlu0 %v406, 64
  %v409 = vpop.permute.xlu0 %408
  %v411 = vmul.f32 %v393, %v409
  %413 = vrot.lane.b32.xlu0 %v411, 32
  %v414 = vpop.permute.xlu0 %413
  %s416 = sadd.s32 56, 64
  %s417 = scalar_lea.vmem %s5, %s416
  %418 = vst.msk [vmem:[%s417] sm:$0xff] %vm48, %v414
  %s419 = smul.u32 1, 2
  %s420 = smul.addr %s419, 8
  %s421 = scalar_lea.vmem [#allocation2], %s420
  %v422 = vld [vmem:[%s421] sm:$0xff]
  %v423 = vsel %vm48, %v312, 0
  %425 = vmatprep.subr.mxu0 0.0
  %426 = vmatpush1.msra.mxu0 0.0
  %427 = vmatprep.subr.mxu0 0.0
  %428 = vmatpush1.msra.mxu0 0.0
  %429 = vmatprep.subr.mxu0 0.0
  %430 = vmatpush1.msra.mxu0 0.0
  %431 = vmatprep.subr.mxu0 0.0
  %432 = vmatpush1.msra.mxu0 0.0
  %433 = vmatprep.subr.mxu0 0.0
  %434 = vmatpush1.msra.mxu0 0.0
  %435 = vmatprep.subr.mxu0 0.0
  %436 = vmatpush1.msra.mxu0 0.0
  %437 = vmatprep.subr.mxu0 0.0
  %438 = vmatpush1.msra.mxu0 0.0
  %439 = vmatprep.subr.mxu0 0.0
  %440 = vmatpush1.msra.mxu0 0.0
  %441 = vmatprep.subr.mxu0 0.0
  %442 = vmatpush1.msra.mxu0 0.0
  %443 = vmatprep.subr.mxu0 0.0
  %444 = vmatpush1.msra.mxu0 0.0
  %445 = vmatprep.subr.mxu0 0.0
  %446 = vmatpush1.msra.mxu0 0.0
  %447 = vmatprep.subr.mxu0 0.0
  %448 = vmatpush1.msra.mxu0 0.0
  %449 = vmatprep.subr.mxu0 0.0
  %450 = vmatpush1.msra.mxu0 %v205
  %451 = vmatprep.subr.mxu0 0.0
  %452 = vmatpush1.msra.mxu0 %v204
  %453 = vmatprep.subr.mxu0 0.0
  %454 = vmatpush1.msra.mxu0 %v203
  %455 = vmatprep.subr.mxu0 0.0
  %456 = vmatpush1.msra.mxu0 %v202
  %457 = vmatprep.subr.mxu0 0.0
  %458 = vmatpush2.msra.mxu0 0.0
  %459 = vmatprep.subr.mxu0 0.0
  %460 = vmatpush2.msra.mxu0 0.0
  %461 = vmatprep.subr.mxu0 0.0
  %462 = vmatpush2.msra.mxu0 0.0
  %463 = vmatprep.subr.mxu0 0.0
  %464 = vmatpush2.msra.mxu0 0.0
  %465 = vmatprep.subr.mxu0 0.0
  %466 = vmatpush2.msra.mxu0 0.0
  %467 = vmatprep.subr.mxu0 0.0
  %468 = vmatpush2.msra.mxu0 0.0
  %469 = vmatprep.subr.mxu0 0.0
  %470 = vmatpush2.msra.mxu0 0.0
  %471 = vmatprep.subr.mxu0 0.0
  %472 = vmatpush2.msra.mxu0 0.0
  %473 = vmatprep.subr.mxu0 0.0
  %474 = vmatpush2.msra.mxu0 0.0
  %475 = vmatprep.subr.mxu0 0.0
  %476 = vmatpush2.msra.mxu0 0.0
  %477 = vmatprep.subr.mxu0 0.0
  %478 = vmatpush2.msra.mxu0 0.0
  %479 = vmatprep.subr.mxu0 0.0
  %480 = vmatpush2.msra.mxu0 0.0
  %481 = vmatprep.subr.mxu0 0.0
  %482 = vmatpush2.msra.mxu0 0.0
  %483 = vmatprep.subr.mxu0 0.0
  %484 = vmatpush2.msra.mxu0 0.0
  %485 = vmatprep.subr.mxu0 0.0
  %486 = vmatpush2.msra.mxu0 0.0
  %487 = vmatprep.subr.mxu0 0.0
  %488 = vmatpush2.msra.mxu0 0.0
  %489 = vmatprep.mubr.f32.mxu0 0.0
  %490 = vmatmul.mubr.f32.gmra.mxu0 %v423
  %v491 = vpop.f32.mrf.mxu0
  %v492 = vadd.f32 0.0, %v491
  %v493 = vpop.f32.mrf.mxu0
  %494 = vdwg.mxu0
  %v495 = vadd.f32 %v422, %v492
  %v496 = vmul.f32 %v495, 0.5
  %v497 = vtanh.pop %v496
  %v498 = vmul.f32 %v497, 0.5
  %v499 = vadd.f32 %v498, 0.5
  %v500 = vtanh.pop %v495
  %v501 = vmul.f32 %v499, %v303
  %503 = vrot.lane.b32.xlu0 %v500, 64
  %v504 = vpop.permute.xlu0 %503
  %v506 = vmul.f32 %v499, %v504
  %508 = vrot.lane.b32.xlu0 %v506, 32
  %v509 = vpop.permute.xlu0 %508
  %v511 = vadd.f32 %v501, %v509
  %v512 = vtanh.pop %v511
  %514 = vrot.lane.b32.xlu0 %v512, 64
  %v515 = vpop.permute.xlu0 %514
  %v517 = vmul.f32 %v499, %v515
  %519 = vrot.lane.b32.xlu0 %v517, 32
  %v520 = vpop.permute.xlu0 %519
  %s522 = scalar_lea.vmem %s5, 8
  %523 = vst.msk [vmem:[%s522] sm:$0xff] %vm48, %v520
  %s524 = smul.u32 6, 2
  %s525 = smul.addr %s524, 8
  %s526 = scalar_lea.vmem [#allocation2], %s525
  %v527 = vld [vmem:[%s526 + $0x8] sm:$0xff]
  %v528 = vsel %vm48, %v414, 0
  %530 = vmatprep.subr.mxu0 0.0
  %531 = vmatpush1.msra.mxu0 0.0
  %532 = vmatprep.subr.mxu0 0.0
  %533 = vmatpush1.msra.mxu0 0.0
  %534 = vmatprep.subr.mxu0 0.0
  %535 = vmatpush1.msra.mxu0 0.0
  %536 = vmatprep.subr.mxu0 0.0
  %537 = vmatpush1.msra.mxu0 0.0
  %538 = vmatprep.subr.mxu0 0.0
  %539 = vmatpush1.msra.mxu0 0.0
  %540 = vmatprep.subr.mxu0 0.0
  %541 = vmatpush1.msra.mxu0 0.0
  %542 = vmatprep.subr.mxu0 0.0
  %543 = vmatpush1.msra.mxu0 0.0
  %544 = vmatprep.subr.mxu0 0.0
  %545 = vmatpush1.msra.mxu0 0.0
  %546 = vmatprep.subr.mxu0 0.0
  %547 = vmatpush1.msra.mxu0 0.0
  %548 = vmatprep.subr.mxu0 0.0
  %549 = vmatpush1.msra.mxu0 0.0
  %550 = vmatprep.subr.mxu0 0.0
  %551 = vmatpush1.msra.mxu0 0.0
  %552 = vmatprep.subr.mxu0 0.0
  %553 = vmatpush1.msra.mxu0 0.0
  %554 = vmatprep.subr.mxu0 0.0
  %555 = vmatpush1.msra.mxu0 %v209
  %556 = vmatprep.subr.mxu0 0.0
  %557 = vmatpush1.msra.mxu0 %v208
  %558 = vmatprep.subr.mxu0 0.0
  %559 = vmatpush1.msra.mxu0 %v207
  %560 = vmatprep.subr.mxu0 0.0
  %561 = vmatpush1.msra.mxu0 %v206
  %562 = vmatprep.subr.mxu0 0.0
  %563 = vmatpush2.msra.mxu0 0.0
  %564 = vmatprep.subr.mxu0 0.0
  %565 = vmatpush2.msra.mxu0 0.0
  %566 = vmatprep.subr.mxu0 0.0
  %567 = vmatpush2.msra.mxu0 0.0
  %568 = vmatprep.subr.mxu0 0.0
  %569 = vmatpush2.msra.mxu0 0.0
  %570 = vmatprep.subr.mxu0 0.0
  %571 = vmatpush2.msra.mxu0 0.0
  %572 = vmatprep.subr.mxu0 0.0
  %573 = vmatpush2.msra.mxu0 0.0
  %574 = vmatprep.subr.mxu0 0.0
  %575 = vmatpush2.msra.mxu0 0.0
  %576 = vmatprep.subr.mxu0 0.0
  %577 = vmatpush2.msra.mxu0 0.0
  %578 = vmatprep.subr.mxu0 0.0
  %579 = vmatpush2.msra.mxu0 0.0
  %580 = vmatprep.subr.mxu0 0.0
  %581 = vmatpush2.msra.mxu0 0.0
  %582 = vmatprep.subr.mxu0 0.0
  %583 = vmatpush2.msra.mxu0 0.0
  %584 = vmatprep.subr.mxu0 0.0
  %585 = vmatpush2.msra.mxu0 0.0
  %586 = vmatprep.subr.mxu0 0.0
  %587 = vmatpush2.msra.mxu0 0.0
  %588 = vmatprep.subr.mxu0 0.0
  %589 = vmatpush2.msra.mxu0 0.0
  %590 = vmatprep.subr.mxu0 0.0
  %591 = vmatpush2.msra.mxu0 0.0
  %592 = vmatprep.subr.mxu0 0.0
  %593 = vmatpush2.msra.mxu0 0.0
  %594 = vmatprep.mubr.f32.mxu0 0.0
  %595 = vmatmul.mubr.f32.gmra.mxu0 %v528
  %v596 = vpop.f32.mrf.mxu0
  %v597 = vadd.f32 0.0, %v596
  %v598 = vpop.f32.mrf.mxu0
  %599 = vdwg.mxu0
  %v600 = vadd.f32 %v527, %v597
  %v601 = vmul.f32 %v600, 0.5
  %v602 = vtanh.pop %v601
  %v603 = vmul.f32 %v602, 0.5
  %v604 = vadd.f32 %v603, 0.5
  %v605 = vtanh.pop %v600
  %v606 = vmul.f32 %v604, %v405
  %608 = vrot.lane.b32.xlu0 %v605, 64
  %v609 = vpop.permute.xlu0 %608
  %v611 = vmul.f32 %v604, %v609
  %613 = vrot.lane.b32.xlu0 %v611, 32
  %v614 = vpop.permute.xlu0 %613
  %v616 = vadd.f32 %v606, %v614
  %v617 = vtanh.pop %v616
  %619 = vrot.lane.b32.xlu0 %v617, 64
  %v620 = vpop.permute.xlu0 %619
  %v622 = vmul.f32 %v604, %v620
  %624 = vrot.lane.b32.xlu0 %v622, 32
  %v625 = vpop.permute.xlu0 %624
  %s627 = sadd.s32 48, 64
  %s628 = scalar_lea.vmem %s5, %s627
  %629 = vst.msk [vmem:[%s628] sm:$0xff] %vm48, %v625
  %s630 = smul.u32 2, 2
  %s631 = smul.addr %s630, 8
  %s632 = scalar_lea.vmem [#allocation2], %s631
  %v633 = vld [vmem:[%s632] sm:$0xff]
  %v634 = vsel %vm48, %v520, 0
  %636 = vmatprep.subr.mxu0 0.0
  %637 = vmatpush1.msra.mxu0 0.0
  %638 = vmatprep.subr.mxu0 0.0
  %639 = vmatpush1.msra.mxu0 0.0
  %640 = vmatprep.subr.mxu0 0.0
  %641 = vmatpush1.msra.mxu0 0.0
  %642 = vmatprep.subr.mxu0 0.0
  %643 = vmatpush1.msra.mxu0 0.0
  %644 = vmatprep.subr.mxu0 0.0
  %645 = vmatpush1.msra.mxu0 0.0
  %646 = vmatprep.subr.mxu0 0.0
  %647 = vmatpush1.msra.mxu0 0.0
  %648 = vmatprep.subr.mxu0 0.0
  %649 = vmatpush1.msra.mxu0 0.0
  %650 = vmatprep.subr.mxu0 0.0
  %651 = vmatpush1.msra.mxu0 0.0
  %652 = vmatprep.subr.mxu0 0.0
  %653 = vmatpush1.msra.mxu0 0.0
  %654 = vmatprep.subr.mxu0 0.0
  %655 = vmatpush1.msra.mxu0 0.0
  %656 = vmatprep.subr.mxu0 0.0
  %657 = vmatpush1.msra.mxu0 0.0
  %658 = vmatprep.subr.mxu0 0.0
  %659 = vmatpush1.msra.mxu0 0.0
  %660 = vmatprep.subr.mxu0 0.0
  %661 = vmatpush1.msra.mxu0 %v205
  %662 = vmatprep.subr.mxu0 0.0
  %663 = vmatpush1.msra.mxu0 %v204
  %664 = vmatprep.subr.mxu0 0.0
  %665 = vmatpush1.msra.mxu0 %v203
  %666 = vmatprep.subr.mxu0 0.0
  %667 = vmatpush1.msra.mxu0 %v202
  %668 = vmatprep.subr.mxu0 0.0
  %669 = vmatpush2.msra.mxu0 0.0
  %670 = vmatprep.subr.mxu0 0.0
  %671 = vmatpush2.msra.mxu0 0.0
  %672 = vmatprep.subr.mxu0 0.0
  %673 = vmatpush2.msra.mxu0 0.0
  %674 = vmatprep.subr.mxu0 0.0
  %675 = vmatpush2.msra.mxu0 0.0
  %676 = vmatprep.subr.mxu0 0.0
  %677 = vmatpush2.msra.mxu0 0.0
  %678 = vmatprep.subr.mxu0 0.0
  %679 = vmatpush2.msra.mxu0 0.0
  %680 = vmatprep.subr.mxu0 0.0
  %681 = vmatpush2.msra.mxu0 0.0
  %682 = vmatprep.subr.mxu0 0.0
  %683 = vmatpush2.msra.mxu0 0.0
  %684 = vmatprep.subr.mxu0 0.0
  %685 = vmatpush2.msra.mxu0 0.0
  %686 = vmatprep.subr.mxu0 0.0
  %687 = vmatpush2.msra.mxu0 0.0
  %688 = vmatprep.subr.mxu0 0.0
  %689 = vmatpush2.msra.mxu0 0.0
  %690 = vmatprep.subr.mxu0 0.0
  %691 = vmatpush2.msra.mxu0 0.0
  %692 = vmatprep.subr.mxu0 0.0
  %693 = vmatpush2.msra.mxu0 0.0
  %694 = vmatprep.subr.mxu0 0.0
  %695 = vmatpush2.msra.mxu0 0.0
  %696 = vmatprep.subr.mxu0 0.0
  %697 = vmatpush2.msra.mxu0 0.0
  %698 = vmatprep.subr.mxu0 0.0
  %699 = vmatpush2.msra.mxu0 0.0
  %700 = vmatprep.mubr.f32.mxu0 0.0
  %701 = vmatmul.mubr.f32.gmra.mxu0 %v634
  %v702 = vpop.f32.mrf.mxu0
  %v703 = vadd.f32 0.0, %v702
  %v704 = vpop.f32.mrf.mxu0
  %705 = vdwg.mxu0
  %v706 = vadd.f32 %v633, %v703
  %v707 = vmul.f32 %v706, 0.5
  %v708 = vtanh.pop %v707
  %v709 = vmul.f32 %v708, 0.5
  %v710 = vadd.f32 %v709, 0.5
  %v711 = vtanh.pop %v706
  %v712 = vmul.f32 %v710, %v511
  %714 = vrot.lane.b32.xlu0 %v711, 64
  %v715 = vpop.permute.xlu0 %714
  %v717 = vmul.f32 %v710, %v715
  %719 = vrot.lane.b32.xlu0 %v717, 32
  %v720 = vpop.permute.xlu0 %719
  %v722 = vadd.f32 %v712, %v720
  %v723 = vtanh.pop %v722
  %725 = vrot.lane.b32.xlu0 %v723, 64
  %v726 = vpop.permute.xlu0 %725
  %v728 = vmul.f32 %v710, %v726
  %730 = vrot.lane.b32.xlu0 %v728, 32
  %v731 = vpop.permute.xlu0 %730
  %s733 = scalar_lea.vmem %s5, 16
  %734 = vst.msk [vmem:[%s733] sm:$0xff] %vm48, %v731
  %s735 = smul.u32 5, 2
  %s736 = smul.addr %s735, 8
  %s737 = scalar_lea.vmem [#allocation2], %s736
  %v738 = vld [vmem:[%s737 + $0x8] sm:$0xff]
  %v739 = vsel %vm48, %v625, 0
  %741 = vmatprep.subr.mxu0 0.0
  %742 = vmatpush1.msra.mxu0 0.0
  %743 = vmatprep.subr.mxu0 0.0
  %744 = vmatpush1.msra.mxu0 0.0
  %745 = vmatprep.subr.mxu0 0.0
  %746 = vmatpush1.msra.mxu0 0.0
  %747 = vmatprep.subr.mxu0 0.0
  %748 = vmatpush1.msra.mxu0 0.0
  %749 = vmatprep.subr.mxu0 0.0
  %750 = vmatpush1.msra.mxu0 0.0
  %751 = vmatprep.subr.mxu0 0.0
  %752 = vmatpush1.msra.mxu0 0.0
  %753 = vmatprep.subr.mxu0 0.0
  %754 = vmatpush1.msra.mxu0 0.0
  %755 = vmatprep.subr.mxu0 0.0
  %756 = vmatpush1.msra.mxu0 0.0
  %757 = vmatprep.subr.mxu0 0.0
  %758 = vmatpush1.msra.mxu0 0.0
  %759 = vmatprep.subr.mxu0 0.0
  %760 = vmatpush1.msra.mxu0 0.0
  %761 = vmatprep.subr.mxu0 0.0
  %762 = vmatpush1.msra.mxu0 0.0
  %763 = vmatprep.subr.mxu0 0.0
  %764 = vmatpush1.msra.mxu0 0.0
  %765 = vmatprep.subr.mxu0 0.0
  %766 = vmatpush1.msra.mxu0 %v209
  %767 = vmatprep.subr.mxu0 0.0
  %768 = vmatpush1.msra.mxu0 %v208
  %769 = vmatprep.subr.mxu0 0.0
  %770 = vmatpush1.msra.mxu0 %v207
  %771 = vmatprep.subr.mxu0 0.0
  %772 = vmatpush1.msra.mxu0 %v206
  %773 = vmatprep.subr.mxu0 0.0
  %774 = vmatpush2.msra.mxu0 0.0
  %775 = vmatprep.subr.mxu0 0.0
  %776 = vmatpush2.msra.mxu0 0.0
  %777 = vmatprep.subr.mxu0 0.0
  %778 = vmatpush2.msra.mxu0 0.0
  %779 = vmatprep.subr.mxu0 0.0
  %780 = vmatpush2.msra.mxu0 0.0
  %781 = vmatprep.subr.mxu0 0.0
  %782 = vmatpush2.msra.mxu0 0.0
  %783 = vmatprep.subr.mxu0 0.0
  %784 = vmatpush2.msra.mxu0 0.0
  %785 = vmatprep.subr.mxu0 0.0
  %786 = vmatpush2.msra.mxu0 0.0
  %787 = vmatprep.subr.mxu0 0.0
  %788 = vmatpush2.msra.mxu0 0.0
  %789 = vmatprep.subr.mxu0 0.0
  %790 = vmatpush2.msra.mxu0 0.0
  %791 = vmatprep.subr.mxu0 0.0
  %792 = vmatpush2.msra.mxu0 0.0
  %793 = vmatprep.subr.mxu0 0.0
  %794 = vmatpush2.msra.mxu0 0.0
  %795 = vmatprep.subr.mxu0 0.0
  %796 = vmatpush2.msra.mxu0 0.0
  %797 = vmatprep.subr.mxu0 0.0
  %798 = vmatpush2.msra.mxu0 0.0
  %799 = vmatprep.subr.mxu0 0.0
  %800 = vmatpush2.msra.mxu0 0.0
  %801 = vmatprep.subr.mxu0 0.0
  %802 = vmatpush2.msra.mxu0 0.0
  %803 = vmatprep.subr.mxu0 0.0
  %804 = vmatpush2.msra.mxu0 0.0
  %805 = vmatprep.mubr.f32.mxu0 0.0
  %806 = vmatmul.mubr.f32.gmra.mxu0 %v739
  %v807 = vpop.f32.mrf.mxu0
  %v808 = vadd.f32 0.0, %v807
  %v809 = vpop.f32.mrf.mxu0
  %810 = vdwg.mxu0
  %v811 = vadd.f32 %v738, %v808
  %v812 = vmul.f32 %v811, 0.5
  %v813 = vtanh.pop %v812
  %v814 = vmul.f32 %v813, 0.5
  %v815 = vadd.f32 %v814, 0.5
  %v816 = vtanh.pop %v811
  %v817 = vmul.f32 %v815, %v616
  %819 = vrot.lane.b32.xlu0 %v816, 64
  %v820 = vpop.permute.xlu0 %819
  %v822 = vmul.f32 %v815, %v820
  %824 = vrot.lane.b32.xlu0 %v822, 32
  %v825 = vpop.permute.xlu0 %824
  %v827 = vadd.f32 %v817, %v825
  %v828 = vtanh.pop %v827
  %830 = vrot.lane.b32.xlu0 %v828, 64
  %v831 = vpop.permute.xlu0 %830
  %v833 = vmul.f32 %v815, %v831
  %835 = vrot.lane.b32.xlu0 %v833, 32
  %v836 = vpop.permute.xlu0 %835
  %s838 = sadd.s32 40, 64
  %s839 = scalar_lea.vmem %s5, %s838
  %840 = vst.msk [vmem:[%s839] sm:$0xff] %vm48, %v836
  %s841 = smul.u32 3, 2
  %s842 = smul.addr %s841, 8
  %s843 = scalar_lea.vmem [#allocation2], %s842
  %v844 = vld [vmem:[%s843] sm:$0xff]
  %v845 = vsel %vm48, %v731, 0
  %847 = vmatprep.subr.mxu0 0.0
  %848 = vmatpush1.msra.mxu0 0.0
  %849 = vmatprep.subr.mxu0 0.0
  %850 = vmatpush1.msra.mxu0 0.0
  %851 = vmatprep.subr.mxu0 0.0
  %852 = vmatpush1.msra.mxu0 0.0
  %853 = vmatprep.subr.mxu0 0.0
  %854 = vmatpush1.msra.mxu0 0.0
  %855 = vmatprep.subr.mxu0 0.0
  %856 = vmatpush1.msra.mxu0 0.0
  %857 = vmatprep.subr.mxu0 0.0
  %858 = vmatpush1.msra.mxu0 0.0
  %859 = vmatprep.subr.mxu0 0.0
  %860 = vmatpush1.msra.mxu0 0.0
  %861 = vmatprep.subr.mxu0 0.0
  %862 = vmatpush1.msra.mxu0 0.0
  %863 = vmatprep.subr.mxu0 0.0
  %864 = vmatpush1.msra.mxu0 0.0
  %865 = vmatprep.subr.mxu0 0.0
  %866 = vmatpush1.msra.mxu0 0.0
  %867 = vmatprep.subr.mxu0 0.0
  %868 = vmatpush1.msra.mxu0 0.0
  %869 = vmatprep.subr.mxu0 0.0
  %870 = vmatpush1.msra.mxu0 0.0
  %871 = vmatprep.subr.mxu0 0.0
  %872 = vmatpush1.msra.mxu0 %v205
  %873 = vmatprep.subr.mxu0 0.0
  %874 = vmatpush1.msra.mxu0 %v204
  %875 = vmatprep.subr.mxu0 0.0
  %876 = vmatpush1.msra.mxu0 %v203
  %877 = vmatprep.subr.mxu0 0.0
  %878 = vmatpush1.msra.mxu0 %v202
  %879 = vmatprep.subr.mxu0 0.0
  %880 = vmatpush2.msra.mxu0 0.0
  %881 = vmatprep.subr.mxu0 0.0
  %882 = vmatpush2.msra.mxu0 0.0
  %883 = vmatprep.subr.mxu0 0.0
  %884 = vmatpush2.msra.mxu0 0.0
  %885 = vmatprep.subr.mxu0 0.0
  %886 = vmatpush2.msra.mxu0 0.0
  %887 = vmatprep.subr.mxu0 0.0
  %888 = vmatpush2.msra.mxu0 0.0
  %889 = vmatprep.subr.mxu0 0.0
  %890 = vmatpush2.msra.mxu0 0.0
  %891 = vmatprep.subr.mxu0 0.0
  %892 = vmatpush2.msra.mxu0 0.0
  %893 = vmatprep.subr.mxu0 0.0
  %894 = vmatpush2.msra.mxu0 0.0
  %895 = vmatprep.subr.mxu0 0.0
  %896 = vmatpush2.msra.mxu0 0.0
  %897 = vmatprep.subr.mxu0 0.0
  %898 = vmatpush2.msra.mxu0 0.0
  %899 = vmatprep.subr.mxu0 0.0
  %900 = vmatpush2.msra.mxu0 0.0
  %901 = vmatprep.subr.mxu0 0.0
  %902 = vmatpush2.msra.mxu0 0.0
  %903 = vmatprep.subr.mxu0 0.0
  %904 = vmatpush2.msra.mxu0 0.0
  %905 = vmatprep.subr.mxu0 0.0
  %906 = vmatpush2.msra.mxu0 0.0
  %907 = vmatprep.subr.mxu0 0.0
  %908 = vmatpush2.msra.mxu0 0.0
  %909 = vmatprep.subr.mxu0 0.0
  %910 = vmatpush2.msra.mxu0 0.0
  %911 = vmatprep.mubr.f32.mxu0 0.0
  %912 = vmatmul.mubr.f32.gmra.mxu0 %v845
  %v913 = vpop.f32.mrf.mxu0
  %v914 = vadd.f32 0.0, %v913
  %v915 = vpop.f32.mrf.mxu0
  %916 = vdwg.mxu0
  %v917 = vadd.f32 %v844, %v914
  %v918 = vmul.f32 %v917, 0.5
  %v919 = vtanh.pop %v918
  %v920 = vmul.f32 %v919, 0.5
  %v921 = vadd.f32 %v920, 0.5
  %v922 = vtanh.pop %v917
  %v923 = vmul.f32 %v921, %v722
  %925 = vrot.lane.b32.xlu0 %v922, 64
  %v926 = vpop.permute.xlu0 %925
  %v928 = vmul.f32 %v921, %v926
  %930 = vrot.lane.b32.xlu0 %v928, 32
  %v931 = vpop.permute.xlu0 %930
  %v933 = vadd.f32 %v923, %v931
  %v934 = vtanh.pop %v933
  %936 = vrot.lane.b32.xlu0 %v934, 64
  %v937 = vpop.permute.xlu0 %936
  %v939 = vmul.f32 %v921, %v937
  %941 = vrot.lane.b32.xlu0 %v939, 32
  %v942 = vpop.permute.xlu0 %941
  %s944 = scalar_lea.vmem %s5, 24
  %945 = vst.msk [vmem:[%s944] sm:$0xff] %vm48, %v942
  %s946 = smul.u32 4, 2
  %s947 = smul.addr %s946, 8
  %s948 = scalar_lea.vmem [#allocation2], %s947
  %v949 = vld [vmem:[%s948 + $0x8] sm:$0xff]
  %v950 = vsel %vm48, %v836, 0
  %952 = vmatprep.subr.mxu0 0.0
  %953 = vmatpush1.msra.mxu0 0.0
  %954 = vmatprep.subr.mxu0 0.0
  %955 = vmatpush1.msra.mxu0 0.0
  %956 = vmatprep.subr.mxu0 0.0
  %957 = vmatpush1.msra.mxu0 0.0
  %958 = vmatprep.subr.mxu0 0.0
  %959 = vmatpush1.msra.mxu0 0.0
  %960 = vmatprep.subr.mxu0 0.0
  %961 = vmatpush1.msra.mxu0 0.0
  %962 = vmatprep.subr.mxu0 0.0
  %963 = vmatpush1.msra.mxu0 0.0
  %964 = vmatprep.subr.mxu0 0.0
  %965 = vmatpush1.msra.mxu0 0.0
  %966 = vmatprep.subr.mxu0 0.0
  %967 = vmatpush1.msra.mxu0 0.0
  %968 = vmatprep.subr.mxu0 0.0
  %969 = vmatpush1.msra.mxu0 0.0
  %970 = vmatprep.subr.mxu0 0.0
  %971 = vmatpush1.msra.mxu0 0.0
  %972 = vmatprep.subr.mxu0 0.0
  %973 = vmatpush1.msra.mxu0 0.0
  %974 = vmatprep.subr.mxu0 0.0
  %975 = vmatpush1.msra.mxu0 0.0
  %976 = vmatprep.subr.mxu0 0.0
  %977 = vmatpush1.msra.mxu0 %v209
  %978 = vmatprep.subr.mxu0 0.0
  %979 = vmatpush1.msra.mxu0 %v208
  %980 = vmatprep.subr.mxu0 0.0
  %981 = vmatpush1.msra.mxu0 %v207
  %982 = vmatprep.subr.mxu0 0.0
  %983 = vmatpush1.msra.mxu0 %v206
  %984 = vmatprep.subr.mxu0 0.0
  %985 = vmatpush2.msra.mxu0 0.0
  %986 = vmatprep.subr.mxu0 0.0
  %987 = vmatpush2.msra.mxu0 0.0
  %988 = vmatprep.subr.mxu0 0.0
  %989 = vmatpush2.msra.mxu0 0.0
  %990 = vmatprep.subr.mxu0 0.0
  %991 = vmatpush2.msra.mxu0 0.0
  %992 = vmatprep.subr.mxu0 0.0
  %993 = vmatpush2.msra.mxu0 0.0
  %994 = vmatprep.subr.mxu0 0.0
  %995 = vmatpush2.msra.mxu0 0.0
  %996 = vmatprep.subr.mxu0 0.0
  %997 = vmatpush2.msra.mxu0 0.0
  %998 = vmatprep.subr.mxu0 0.0
  %999 = vmatpush2.msra.mxu0 0.0
  %1000 = vmatprep.subr.mxu0 0.0
  %1001 = vmatpush2.msra.mxu0 0.0
  %1002 = vmatprep.subr.mxu0 0.0
  %1003 = vmatpush2.msra.mxu0 0.0
  %1004 = vmatprep.subr.mxu0 0.0
  %1005 = vmatpush2.msra.mxu0 0.0
  %1006 = vmatprep.subr.mxu0 0.0
  %1007 = vmatpush2.msra.mxu0 0.0
  %1008 = vmatprep.subr.mxu0 0.0
  %1009 = vmatpush2.msra.mxu0 0.0
  %1010 = vmatprep.subr.mxu0 0.0
  %1011 = vmatpush2.msra.mxu0 0.0
  %1012 = vmatprep.subr.mxu0 0.0
  %1013 = vmatpush2.msra.mxu0 0.0
  %1014 = vmatprep.subr.mxu0 0.0
  %1015 = vmatpush2.msra.mxu0 0.0
  %1016 = vmatprep.mubr.f32.mxu0 0.0
  %1017 = vmatmul.mubr.f32.gmra.mxu0 %v950
  %v1018 = vpop.f32.mrf.mxu0
  %v1019 = vadd.f32 0.0, %v1018
  %v1020 = vpop.f32.mrf.mxu0
  %1021 = vdwg.mxu0
  %v1022 = vadd.f32 %v949, %v1019
  %v1023 = vmul.f32 %v1022, 0.5
  %v1024 = vtanh.pop %v1023
  %v1025 = vmul.f32 %v1024, 0.5
  %v1026 = vadd.f32 %v1025, 0.5
  %v1027 = vtanh.pop %v1022
  %v1028 = vmul.f32 %v1026, %v827
  %1030 = vrot.lane.b32.xlu0 %v1027, 64
  %v1031 = vpop.permute.xlu0 %1030
  %v1033 = vmul.f32 %v1026, %v1031
  %1035 = vrot.lane.b32.xlu0 %v1033, 32
  %v1036 = vpop.permute.xlu0 %1035
  %v1038 = vadd.f32 %v1028, %v1036
  %v1039 = vtanh.pop %v1038
  %1041 = vrot.lane.b32.xlu0 %v1039, 64
  %v1042 = vpop.permute.xlu0 %1041
  %v1044 = vmul.f32 %v1026, %v1042
  %1046 = vrot.lane.b32.xlu0 %v1044, 32
  %v1047 = vpop.permute.xlu0 %1046
  %s1049 = sadd.s32 32, 64
  %s1050 = scalar_lea.vmem %s5, %s1049
  %1051 = vst.msk [vmem:[%s1050] sm:$0xff] %vm48, %v1047
  %v1052 = vld [vmem:[%s948] sm:$0xff]
  %v1053 = vsel %vm48, %v942, 0
  %1055 = vmatprep.subr.mxu0 0.0
  %1056 = vmatpush1.msra.mxu0 0.0
  %1057 = vmatprep.subr.mxu0 0.0
  %1058 = vmatpush1.msra.mxu0 0.0
  %1059 = vmatprep.subr.mxu0 0.0
  %1060 = vmatpush1.msra.mxu0 0.0
  %1061 = vmatprep.subr.mxu0 0.0
  %1062 = vmatpush1.msra.mxu0 0.0
  %1063 = vmatprep.subr.mxu0 0.0
  %1064 = vmatpush1.msra.mxu0 0.0
  %1065 = vmatprep.subr.mxu0 0.0
  %1066 = vmatpush1.msra.mxu0 0.0
  %1067 = vmatprep.subr.mxu0 0.0
  %1068 = vmatpush1.msra.mxu0 0.0
  %1069 = vmatprep.subr.mxu0 0.0
  %1070 = vmatpush1.msra.mxu0 0.0
  %1071 = vmatprep.subr.mxu0 0.0
  %1072 = vmatpush1.msra.mxu0 0.0
  %1073 = vmatprep.subr.mxu0 0.0
  %1074 = vmatpush1.msra.mxu0 0.0
  %1075 = vmatprep.subr.mxu0 0.0
  %1076 = vmatpush1.msra.mxu0 0.0
  %1077 = vmatprep.subr.mxu0 0.0
  %1078 = vmatpush1.msra.mxu0 0.0
  %1079 = vmatprep.subr.mxu0 0.0
  %1080 = vmatpush1.msra.mxu0 %v205
  %1081 = vmatprep.subr.mxu0 0.0
  %1082 = vmatpush1.msra.mxu0 %v204
  %1083 = vmatprep.subr.mxu0 0.0
  %1084 = vmatpush1.msra.mxu0 %v203
  %1085 = vmatprep.subr.mxu0 0.0
  %1086 = vmatpush1.msra.mxu0 %v202
  %1087 = vmatprep.subr.mxu0 0.0
  %1088 = vmatpush2.msra.mxu0 0.0
  %1089 = vmatprep.subr.mxu0 0.0
  %1090 = vmatpush2.msra.mxu0 0.0
  %1091 = vmatprep.subr.mxu0 0.0
  %1092 = vmatpush2.msra.mxu0 0.0
  %1093 = vmatprep.subr.mxu0 0.0
  %1094 = vmatpush2.msra.mxu0 0.0
  %1095 = vmatprep.subr.mxu0 0.0
  %1096 = vmatpush2.msra.mxu0 0.0
  %1097 = vmatprep.subr.mxu0 0.0
  %1098 = vmatpush2.msra.mxu0 0.0
  %1099 = vmatprep.subr.mxu0 0.0
  %1100 = vmatpush2.msra.mxu0 0.0
  %1101 = vmatprep.subr.mxu0 0.0
  %1102 = vmatpush2.msra.mxu0 0.0
  %1103 = vmatprep.subr.mxu0 0.0
  %1104 = vmatpush2.msra.mxu0 0.0
  %1105 = vmatprep.subr.mxu0 0.0
  %1106 = vmatpush2.msra.mxu0 0.0
  %1107 = vmatprep.subr.mxu0 0.0
  %1108 = vmatpush2.msra.mxu0 0.0
  %1109 = vmatprep.subr.mxu0 0.0
  %1110 = vmatpush2.msra.mxu0 0.0
  %1111 = vmatprep.subr.mxu0 0.0
  %1112 = vmatpush2.msra.mxu0 0.0
  %1113 = vmatprep.subr.mxu0 0.0
  %1114 = vmatpush2.msra.mxu0 0.0
  %1115 = vmatprep.subr.mxu0 0.0
  %1116 = vmatpush2.msra.mxu0 0.0
  %1117 = vmatprep.subr.mxu0 0.0
  %1118 = vmatpush2.msra.mxu0 0.0
  %1119 = vmatprep.mubr.f32.mxu0 0.0
  %1120 = vmatmul.mubr.f32.gmra.mxu0 %v1053
  %v1121 = vpop.f32.mrf.mxu0
  %v1122 = vadd.f32 0.0, %v1121
  %v1123 = vpop.f32.mrf.mxu0
  %1124 = vdwg.mxu0
  %v1125 = vadd.f32 %v1052, %v1122
  %v1126 = vmul.f32 %v1125, 0.5
  %v1127 = vtanh.pop %v1126
  %v1128 = vmul.f32 %v1127, 0.5
  %v1129 = vadd.f32 %v1128, 0.5
  %v1130 = vtanh.pop %v1125
  %v1131 = vmul.f32 %v1129, %v933
  %1133 = vrot.lane.b32.xlu0 %v1130, 64
  %v1134 = vpop.permute.xlu0 %1133
  %v1136 = vmul.f32 %v1129, %v1134
  %1138 = vrot.lane.b32.xlu0 %v1136, 32
  %v1139 = vpop.permute.xlu0 %1138
  %v1141 = vadd.f32 %v1131, %v1139
  %v1142 = vtanh.pop %v1141
  %1144 = vrot.lane.b32.xlu0 %v1142, 64
  %v1145 = vpop.permute.xlu0 %1144
  %v1147 = vmul.f32 %v1129, %v1145
  %1149 = vrot.lane.b32.xlu0 %v1147, 32
  %v1150 = vpop.permute.xlu0 %1149
  %s1152 = scalar_lea.vmem %s5, 32
  %1153 = vst.msk [vmem:[%s1152] sm:$0xff] %vm48, %v1150
  %v1154 = vld [vmem:[%s843 + $0x8] sm:$0xff]
  %v1155 = vsel %vm48, %v1047, 0
  %1157 = vmatprep.subr.mxu0 0.0
  %1158 = vmatpush1.msra.mxu0 0.0
  %1159 = vmatprep.subr.mxu0 0.0
  %1160 = vmatpush1.msra.mxu0 0.0
  %1161 = vmatprep.subr.mxu0 0.0
  %1162 = vmatpush1.msra.mxu0 0.0
  %1163 = vmatprep.subr.mxu0 0.0
  %1164 = vmatpush1.msra.mxu0 0.0
  %1165 = vmatprep.subr.mxu0 0.0
  %1166 = vmatpush1.msra.mxu0 0.0
  %1167 = vmatprep.subr.mxu0 0.0
  %1168 = vmatpush1.msra.mxu0 0.0
  %1169 = vmatprep.subr.mxu0 0.0
  %1170 = vmatpush1.msra.mxu0 0.0
  %1171 = vmatprep.subr.mxu0 0.0
  %1172 = vmatpush1.msra.mxu0 0.0
  %1173 = vmatprep.subr.mxu0 0.0
  %1174 = vmatpush1.msra.mxu0 0.0
  %1175 = vmatprep.subr.mxu0 0.0
  %1176 = vmatpush1.msra.mxu0 0.0
  %1177 = vmatprep.subr.mxu0 0.0
  %1178 = vmatpush1.msra.mxu0 0.0
  %1179 = vmatprep.subr.mxu0 0.0
  %1180 = vmatpush1.msra.mxu0 0.0
  %1181 = vmatprep.subr.mxu0 0.0
  %1182 = vmatpush1.msra.mxu0 %v209
  %1183 = vmatprep.subr.mxu0 0.0
  %1184 = vmatpush1.msra.mxu0 %v208
  %1185 = vmatprep.subr.mxu0 0.0
  %1186 = vmatpush1.msra.mxu0 %v207
  %1187 = vmatprep.subr.mxu0 0.0
  %1188 = vmatpush1.msra.mxu0 %v206
  %1189 = vmatprep.subr.mxu0 0.0
  %1190 = vmatpush2.msra.mxu0 0.0
  %1191 = vmatprep.subr.mxu0 0.0
  %1192 = vmatpush2.msra.mxu0 0.0
  %1193 = vmatprep.subr.mxu0 0.0
  %1194 = vmatpush2.msra.mxu0 0.0
  %1195 = vmatprep.subr.mxu0 0.0
  %1196 = vmatpush2.msra.mxu0 0.0
  %1197 = vmatprep.subr.mxu0 0.0
  %1198 = vmatpush2.msra.mxu0 0.0
  %1199 = vmatprep.subr.mxu0 0.0
  %1200 = vmatpush2.msra.mxu0 0.0
  %1201 = vmatprep.subr.mxu0 0.0
  %1202 = vmatpush2.msra.mxu0 0.0
  %1203 = vmatprep.subr.mxu0 0.0
  %1204 = vmatpush2.msra.mxu0 0.0
  %1205 = vmatprep.subr.mxu0 0.0
  %1206 = vmatpush2.msra.mxu0 0.0
  %1207 = vmatprep.subr.mxu0 0.0
  %1208 = vmatpush2.msra.mxu0 0.0
  %1209 = vmatprep.subr.mxu0 0.0
  %1210 = vmatpush2.msra.mxu0 0.0
  %1211 = vmatprep.subr.mxu0 0.0
  %1212 = vmatpush2.msra.mxu0 0.0
  %1213 = vmatprep.subr.mxu0 0.0
  %1214 = vmatpush2.msra.mxu0 0.0
  %1215 = vmatprep.subr.mxu0 0.0
  %1216 = vmatpush2.msra.mxu0 0.0
  %1217 = vmatprep.subr.mxu0 0.0
  %1218 = vmatpush2.msra.mxu0 0.0
  %1219 = vmatprep.subr.mxu0 0.0
  %1220 = vmatpush2.msra.mxu0 0.0
  %1221 = vmatprep.mubr.f32.mxu0 0.0
  %1222 = vmatmul.mubr.f32.gmra.mxu0 %v1155
  %v1223 = vpop.f32.mrf.mxu0
  %v1224 = vadd.f32 0.0, %v1223
  %v1225 = vpop.f32.mrf.mxu0
  %1226 = vdwg.mxu0
  %v1227 = vadd.f32 %v1154, %v1224
  %v1228 = vmul.f32 %v1227, 0.5
  %v1229 = vtanh.pop %v1228
  %v1230 = vmul.f32 %v1229, 0.5
  %v1231 = vadd.f32 %v1230, 0.5
  %v1232 = vtanh.pop %v1227
  %v1233 = vmul.f32 %v1231, %v1038
  %1235 = vrot.lane.b32.xlu0 %v1232, 64
  %v1236 = vpop.permute.xlu0 %1235
  %v1238 = vmul.f32 %v1231, %v1236
  %1240 = vrot.lane.b32.xlu0 %v1238, 32
  %v1241 = vpop.permute.xlu0 %1240
  %v1243 = vadd.f32 %v1233, %v1241
  %v1244 = vtanh.pop %v1243
  %1246 = vrot.lane.b32.xlu0 %v1244, 64
  %v1247 = vpop.permute.xlu0 %1246
  %v1249 = vmul.f32 %v1231, %v1247
  %1251 = vrot.lane.b32.xlu0 %v1249, 32
  %v1252 = vpop.permute.xlu0 %1251
  %s1254 = sadd.s32 24, 64
  %s1255 = scalar_lea.vmem %s5, %s1254
  %1256 = vst.msk [vmem:[%s1255] sm:$0xff] %vm48, %v1252
  %v1257 = vld [vmem:[%s737] sm:$0xff]
  %v1258 = vsel %vm48, %v1150, 0
  %1260 = vmatprep.subr.mxu0 0.0
  %1261 = vmatpush1.msra.mxu0 0.0
  %1262 = vmatprep.subr.mxu0 0.0
  %1263 = vmatpush1.msra.mxu0 0.0
  %1264 = vmatprep.subr.mxu0 0.0
  %1265 = vmatpush1.msra.mxu0 0.0
  %1266 = vmatprep.subr.mxu0 0.0
  %1267 = vmatpush1.msra.mxu0 0.0
  %1268 = vmatprep.subr.mxu0 0.0
  %1269 = vmatpush1.msra.mxu0 0.0
  %1270 = vmatprep.subr.mxu0 0.0
  %1271 = vmatpush1.msra.mxu0 0.0
  %1272 = vmatprep.subr.mxu0 0.0
  %1273 = vmatpush1.msra.mxu0 0.0
  %1274 = vmatprep.subr.mxu0 0.0
  %1275 = vmatpush1.msra.mxu0 0.0
  %1276 = vmatprep.subr.mxu0 0.0
  %1277 = vmatpush1.msra.mxu0 0.0
  %1278 = vmatprep.subr.mxu0 0.0
  %1279 = vmatpush1.msra.mxu0 0.0
  %1280 = vmatprep.subr.mxu0 0.0
  %1281 = vmatpush1.msra.mxu0 0.0
  %1282 = vmatprep.subr.mxu0 0.0
  %1283 = vmatpush1.msra.mxu0 0.0
  %1284 = vmatprep.subr.mxu0 0.0
  %1285 = vmatpush1.msra.mxu0 %v205
  %1286 = vmatprep.subr.mxu0 0.0
  %1287 = vmatpush1.msra.mxu0 %v204
  %1288 = vmatprep.subr.mxu0 0.0
  %1289 = vmatpush1.msra.mxu0 %v203
  %1290 = vmatprep.subr.mxu0 0.0
  %1291 = vmatpush1.msra.mxu0 %v202
  %1292 = vmatprep.subr.mxu0 0.0
  %1293 = vmatpush2.msra.mxu0 0.0
  %1294 = vmatprep.subr.mxu0 0.0
  %1295 = vmatpush2.msra.mxu0 0.0
  %1296 = vmatprep.subr.mxu0 0.0
  %1297 = vmatpush2.msra.mxu0 0.0
  %1298 = vmatprep.subr.mxu0 0.0
  %1299 = vmatpush2.msra.mxu0 0.0
  %1300 = vmatprep.subr.mxu0 0.0
  %1301 = vmatpush2.msra.mxu0 0.0
  %1302 = vmatprep.subr.mxu0 0.0
  %1303 = vmatpush2.msra.mxu0 0.0
  %1304 = vmatprep.subr.mxu0 0.0
  %1305 = vmatpush2.msra.mxu0 0.0
  %1306 = vmatprep.subr.mxu0 0.0
  %1307 = vmatpush2.msra.mxu0 0.0
  %1308 = vmatprep.subr.mxu0 0.0
  %1309 = vmatpush2.msra.mxu0 0.0
  %1310 = vmatprep.subr.mxu0 0.0
  %1311 = vmatpush2.msra.mxu0 0.0
  %1312 = vmatprep.subr.mxu0 0.0
  %1313 = vmatpush2.msra.mxu0 0.0
  %1314 = vmatprep.subr.mxu0 0.0
  %1315 = vmatpush2.msra.mxu0 0.0
  %1316 = vmatprep.subr.mxu0 0.0
  %1317 = vmatpush2.msra.mxu0 0.0
  %1318 = vmatprep.subr.mxu0 0.0
  %1319 = vmatpush2.msra.mxu0 0.0
  %1320 = vmatprep.subr.mxu0 0.0
  %1321 = vmatpush2.msra.mxu0 0.0
  %1322 = vmatprep.subr.mxu0 0.0
  %1323 = vmatpush2.msra.mxu0 0.0
  %1324 = vmatprep.mubr.f32.mxu0 0.0
  %1325 = vmatmul.mubr.f32.gmra.mxu0 %v1258
  %v1326 = vpop.f32.mrf.mxu0
  %v1327 = vadd.f32 0.0, %v1326
  %v1328 = vpop.f32.mrf.mxu0
  %1329 = vdwg.mxu0
  %v1330 = vadd.f32 %v1257, %v1327
  %v1331 = vmul.f32 %v1330, 0.5
  %v1332 = vtanh.pop %v1331
  %v1333 = vmul.f32 %v1332, 0.5
  %v1334 = vadd.f32 %v1333, 0.5
  %v1335 = vtanh.pop %v1330
  %v1336 = vmul.f32 %v1334, %v1141
  %1338 = vrot.lane.b32.xlu0 %v1335, 64
  %v1339 = vpop.permute.xlu0 %1338
  %v1341 = vmul.f32 %v1334, %v1339
  %1343 = vrot.lane.b32.xlu0 %v1341, 32
  %v1344 = vpop.permute.xlu0 %1343
  %v1346 = vadd.f32 %v1336, %v1344
  %v1347 = vtanh.pop %v1346
  %1349 = vrot.lane.b32.xlu0 %v1347, 64
  %v1350 = vpop.permute.xlu0 %1349
  %v1352 = vmul.f32 %v1334, %v1350
  %1354 = vrot.lane.b32.xlu0 %v1352, 32
  %v1355 = vpop.permute.xlu0 %1354
  %s1357 = scalar_lea.vmem %s5, 40
  %1358 = vst.msk [vmem:[%s1357] sm:$0xff] %vm48, %v1355
  %v1359 = vld [vmem:[%s632 + $0x8] sm:$0xff]
  %v1360 = vsel %vm48, %v1252, 0
  %1362 = vmatprep.subr.mxu0 0.0
  %1363 = vmatpush1.msra.mxu0 0.0
  %1364 = vmatprep.subr.mxu0 0.0
  %1365 = vmatpush1.msra.mxu0 0.0
  %1366 = vmatprep.subr.mxu0 0.0
  %1367 = vmatpush1.msra.mxu0 0.0
  %1368 = vmatprep.subr.mxu0 0.0
  %1369 = vmatpush1.msra.mxu0 0.0
  %1370 = vmatprep.subr.mxu0 0.0
  %1371 = vmatpush1.msra.mxu0 0.0
  %1372 = vmatprep.subr.mxu0 0.0
  %1373 = vmatpush1.msra.mxu0 0.0
  %1374 = vmatprep.subr.mxu0 0.0
  %1375 = vmatpush1.msra.mxu0 0.0
  %1376 = vmatprep.subr.mxu0 0.0
  %1377 = vmatpush1.msra.mxu0 0.0
  %1378 = vmatprep.subr.mxu0 0.0
  %1379 = vmatpush1.msra.mxu0 0.0
  %1380 = vmatprep.subr.mxu0 0.0
  %1381 = vmatpush1.msra.mxu0 0.0
  %1382 = vmatprep.subr.mxu0 0.0
  %1383 = vmatpush1.msra.mxu0 0.0
  %1384 = vmatprep.subr.mxu0 0.0
  %1385 = vmatpush1.msra.mxu0 0.0
  %1386 = vmatprep.subr.mxu0 0.0
  %1387 = vmatpush1.msra.mxu0 %v209
  %1388 = vmatprep.subr.mxu0 0.0
  %1389 = vmatpush1.msra.mxu0 %v208
  %1390 = vmatprep.subr.mxu0 0.0
  %1391 = vmatpush1.msra.mxu0 %v207
  %1392 = vmatprep.subr.mxu0 0.0
  %1393 = vmatpush1.msra.mxu0 %v206
  %1394 = vmatprep.subr.mxu0 0.0
  %1395 = vmatpush2.msra.mxu0 0.0
  %1396 = vmatprep.subr.mxu0 0.0
  %1397 = vmatpush2.msra.mxu0 0.0
  %1398 = vmatprep.subr.mxu0 0.0
  %1399 = vmatpush2.msra.mxu0 0.0
  %1400 = vmatprep.subr.mxu0 0.0
  %1401 = vmatpush2.msra.mxu0 0.0
  %1402 = vmatprep.subr.mxu0 0.0
  %1403 = vmatpush2.msra.mxu0 0.0
  %1404 = vmatprep.subr.mxu0 0.0
  %1405 = vmatpush2.msra.mxu0 0.0
  %1406 = vmatprep.subr.mxu0 0.0
  %1407 = vmatpush2.msra.mxu0 0.0
  %1408 = vmatprep.subr.mxu0 0.0
  %1409 = vmatpush2.msra.mxu0 0.0
  %1410 = vmatprep.subr.mxu0 0.0
  %1411 = vmatpush2.msra.mxu0 0.0
  %1412 = vmatprep.subr.mxu0 0.0
  %1413 = vmatpush2.msra.mxu0 0.0
  %1414 = vmatprep.subr.mxu0 0.0
  %1415 = vmatpush2.msra.mxu0 0.0
  %1416 = vmatprep.subr.mxu0 0.0
  %1417 = vmatpush2.msra.mxu0 0.0
  %1418 = vmatprep.subr.mxu0 0.0
  %1419 = vmatpush2.msra.mxu0 0.0
  %1420 = vmatprep.subr.mxu0 0.0
  %1421 = vmatpush2.msra.mxu0 0.0
  %1422 = vmatprep.subr.mxu0 0.0
  %1423 = vmatpush2.msra.mxu0 0.0
  %1424 = vmatprep.subr.mxu0 0.0
  %1425 = vmatpush2.msra.mxu0 0.0
  %1426 = vmatprep.mubr.f32.mxu0 0.0
  %1427 = vmatmul.mubr.f32.gmra.mxu0 %v1360
  %v1428 = vpop.f32.mrf.mxu0
  %v1429 = vadd.f32 0.0, %v1428
  %v1430 = vpop.f32.mrf.mxu0
  %1431 = vdwg.mxu0
  %v1432 = vadd.f32 %v1359, %v1429
  %v1433 = vmul.f32 %v1432, 0.5
  %v1434 = vtanh.pop %v1433
  %v1435 = vmul.f32 %v1434, 0.5
  %v1436 = vadd.f32 %v1435, 0.5
  %v1437 = vtanh.pop %v1432
  %v1438 = vmul.f32 %v1436, %v1243
  %1440 = vrot.lane.b32.xlu0 %v1437, 64
  %v1441 = vpop.permute.xlu0 %1440
  %v1443 = vmul.f32 %v1436, %v1441
  %1445 = vrot.lane.b32.xlu0 %v1443, 32
  %v1446 = vpop.permute.xlu0 %1445
  %v1448 = vadd.f32 %v1438, %v1446
  %v1449 = vtanh.pop %v1448
  %1451 = vrot.lane.b32.xlu0 %v1449, 64
  %v1452 = vpop.permute.xlu0 %1451
  %v1454 = vmul.f32 %v1436, %v1452
  %1456 = vrot.lane.b32.xlu0 %v1454, 32
  %v1457 = vpop.permute.xlu0 %1456
  %s1459 = sadd.s32 16, 64
  %s1460 = scalar_lea.vmem %s5, %s1459
  %1461 = vst.msk [vmem:[%s1460] sm:$0xff] %vm48, %v1457
  %v1462 = vld [vmem:[%s526] sm:$0xff]
  %v1463 = vsel %vm48, %v1355, 0
  %1465 = vmatprep.subr.mxu0 0.0
  %1466 = vmatpush1.msra.mxu0 0.0
  %1467 = vmatprep.subr.mxu0 0.0
  %1468 = vmatpush1.msra.mxu0 0.0
  %1469 = vmatprep.subr.mxu0 0.0
  %1470 = vmatpush1.msra.mxu0 0.0
  %1471 = vmatprep.subr.mxu0 0.0
  %1472 = vmatpush1.msra.mxu0 0.0
  %1473 = vmatprep.subr.mxu0 0.0
  %1474 = vmatpush1.msra.mxu0 0.0
  %1475 = vmatprep.subr.mxu0 0.0
  %1476 = vmatpush1.msra.mxu0 0.0
  %1477 = vmatprep.subr.mxu0 0.0
  %1478 = vmatpush1.msra.mxu0 0.0
  %1479 = vmatprep.subr.mxu0 0.0
  %1480 = vmatpush1.msra.mxu0 0.0
  %1481 = vmatprep.subr.mxu0 0.0
  %1482 = vmatpush1.msra.mxu0 0.0
  %1483 = vmatprep.subr.mxu0 0.0
  %1484 = vmatpush1.msra.mxu0 0.0
  %1485 = vmatprep.subr.mxu0 0.0
  %1486 = vmatpush1.msra.mxu0 0.0
  %1487 = vmatprep.subr.mxu0 0.0
  %1488 = vmatpush1.msra.mxu0 0.0
  %1489 = vmatprep.subr.mxu0 0.0
  %1490 = vmatpush1.msra.mxu0 %v205
  %1491 = vmatprep.subr.mxu0 0.0
  %1492 = vmatpush1.msra.mxu0 %v204
  %1493 = vmatprep.subr.mxu0 0.0
  %1494 = vmatpush1.msra.mxu0 %v203
  %1495 = vmatprep.subr.mxu0 0.0
  %1496 = vmatpush1.msra.mxu0 %v202
  %1497 = vmatprep.subr.mxu0 0.0
  %1498 = vmatpush2.msra.mxu0 0.0
  %1499 = vmatprep.subr.mxu0 0.0
  %1500 = vmatpush2.msra.mxu0 0.0
  %1501 = vmatprep.subr.mxu0 0.0
  %1502 = vmatpush2.msra.mxu0 0.0
  %1503 = vmatprep.subr.mxu0 0.0
  %1504 = vmatpush2.msra.mxu0 0.0
  %1505 = vmatprep.subr.mxu0 0.0
  %1506 = vmatpush2.msra.mxu0 0.0
  %1507 = vmatprep.subr.mxu0 0.0
  %1508 = vmatpush2.msra.mxu0 0.0
  %1509 = vmatprep.subr.mxu0 0.0
  %1510 = vmatpush2.msra.mxu0 0.0
  %1511 = vmatprep.subr.mxu0 0.0
  %1512 = vmatpush2.msra.mxu0 0.0
  %1513 = vmatprep.subr.mxu0 0.0
  %1514 = vmatpush2.msra.mxu0 0.0
  %1515 = vmatprep.subr.mxu0 0.0
  %1516 = vmatpush2.msra.mxu0 0.0
  %1517 = vmatprep.subr.mxu0 0.0
  %1518 = vmatpush2.msra.mxu0 0.0
  %1519 = vmatprep.subr.mxu0 0.0
  %1520 = vmatpush2.msra.mxu0 0.0
  %1521 = vmatprep.subr.mxu0 0.0
  %1522 = vmatpush2.msra.mxu0 0.0
  %1523 = vmatprep.subr.mxu0 0.0
  %1524 = vmatpush2.msra.mxu0 0.0
  %1525 = vmatprep.subr.mxu0 0.0
  %1526 = vmatpush2.msra.mxu0 0.0
  %1527 = vmatprep.subr.mxu0 0.0
  %1528 = vmatpush2.msra.mxu0 0.0
  %1529 = vmatprep.mubr.f32.mxu0 0.0
  %1530 = vmatmul.mubr.f32.gmra.mxu0 %v1463
  %v1531 = vpop.f32.mrf.mxu0
  %v1532 = vadd.f32 0.0, %v1531
  %v1533 = vpop.f32.mrf.mxu0
  %1534 = vdwg.mxu0
  %v1535 = vadd.f32 %v1462, %v1532
  %v1536 = vmul.f32 %v1535, 0.5
  %v1537 = vtanh.pop %v1536
  %v1538 = vmul.f32 %v1537, 0.5
  %v1539 = vadd.f32 %v1538, 0.5
  %v1540 = vtanh.pop %v1535
  %v1541 = vmul.f32 %v1539, %v1346
  %1543 = vrot.lane.b32.xlu0 %v1540, 64
  %v1544 = vpop.permute.xlu0 %1543
  %v1546 = vmul.f32 %v1539, %v1544
  %1548 = vrot.lane.b32.xlu0 %v1546, 32
  %v1549 = vpop.permute.xlu0 %1548
  %v1551 = vadd.f32 %v1541, %v1549
  %v1552 = vtanh.pop %v1551
  %1554 = vrot.lane.b32.xlu0 %v1552, 64
  %v1555 = vpop.permute.xlu0 %1554
  %v1557 = vmul.f32 %v1539, %v1555
  %1559 = vrot.lane.b32.xlu0 %v1557, 32
  %v1560 = vpop.permute.xlu0 %1559
  %s1562 = scalar_lea.vmem %s5, 48
  %1563 = vst.msk [vmem:[%s1562] sm:$0xff] %vm48, %v1560
  %v1564 = vld [vmem:[%s421 + $0x8] sm:$0xff]
  %v1565 = vsel %vm48, %v1457, 0
  %1567 = vmatprep.subr.mxu0 0.0
  %1568 = vmatpush1.msra.mxu0 0.0
  %1569 = vmatprep.subr.mxu0 0.0
  %1570 = vmatpush1.msra.mxu0 0.0
  %1571 = vmatprep.subr.mxu0 0.0
  %1572 = vmatpush1.msra.mxu0 0.0
  %1573 = vmatprep.subr.mxu0 0.0
  %1574 = vmatpush1.msra.mxu0 0.0
  %1575 = vmatprep.subr.mxu0 0.0
  %1576 = vmatpush1.msra.mxu0 0.0
  %1577 = vmatprep.subr.mxu0 0.0
  %1578 = vmatpush1.msra.mxu0 0.0
  %1579 = vmatprep.subr.mxu0 0.0
  %1580 = vmatpush1.msra.mxu0 0.0
  %1581 = vmatprep.subr.mxu0 0.0
  %1582 = vmatpush1.msra.mxu0 0.0
  %1583 = vmatprep.subr.mxu0 0.0
  %1584 = vmatpush1.msra.mxu0 0.0
  %1585 = vmatprep.subr.mxu0 0.0
  %1586 = vmatpush1.msra.mxu0 0.0
  %1587 = vmatprep.subr.mxu0 0.0
  %1588 = vmatpush1.msra.mxu0 0.0
  %1589 = vmatprep.subr.mxu0 0.0
  %1590 = vmatpush1.msra.mxu0 0.0
  %1591 = vmatprep.subr.mxu0 0.0
  %1592 = vmatpush1.msra.mxu0 %v209
  %1593 = vmatprep.subr.mxu0 0.0
  %1594 = vmatpush1.msra.mxu0 %v208
  %1595 = vmatprep.subr.mxu0 0.0
  %1596 = vmatpush1.msra.mxu0 %v207
  %1597 = vmatprep.subr.mxu0 0.0
  %1598 = vmatpush1.msra.mxu0 %v206
  %1599 = vmatprep.subr.mxu0 0.0
  %1600 = vmatpush2.msra.mxu0 0.0
  %1601 = vmatprep.subr.mxu0 0.0
  %1602 = vmatpush2.msra.mxu0 0.0
  %1603 = vmatprep.subr.mxu0 0.0
  %1604 = vmatpush2.msra.mxu0 0.0
  %1605 = vmatprep.subr.mxu0 0.0
  %1606 = vmatpush2.msra.mxu0 0.0
  %1607 = vmatprep.subr.mxu0 0.0
  %1608 = vmatpush2.msra.mxu0 0.0
  %1609 = vmatprep.subr.mxu0 0.0
  %1610 = vmatpush2.msra.mxu0 0.0
  %1611 = vmatprep.subr.mxu0 0.0
  %1612 = vmatpush2.msra.mxu0 0.0
  %1613 = vmatprep.subr.mxu0 0.0
  %1614 = vmatpush2.msra.mxu0 0.0
  %1615 = vmatprep.subr.mxu0 0.0
  %1616 = vmatpush2.msra.mxu0 0.0
  %1617 = vmatprep.subr.mxu0 0.0
  %1618 = vmatpush2.msra.mxu0 0.0
  %1619 = vmatprep.subr.mxu0 0.0
  %1620 = vmatpush2.msra.mxu0 0.0
  %1621 = vmatprep.subr.mxu0 0.0
  %1622 = vmatpush2.msra.mxu0 0.0
  %1623 = vmatprep.subr.mxu0 0.0
  %1624 = vmatpush2.msra.mxu0 0.0
  %1625 = vmatprep.subr.mxu0 0.0
  %1626 = vmatpush2.msra.mxu0 0.0
  %1627 = vmatprep.subr.mxu0 0.0
  %1628 = vmatpush2.msra.mxu0 0.0
  %1629 = vmatprep.subr.mxu0 0.0
  %1630 = vmatpush2.msra.mxu0 0.0
  %1631 = vmatprep.mubr.f32.mxu0 0.0
  %1632 = vmatmul.mubr.f32.gmra.mxu0 %v1565
  %v1633 = vpop.f32.mrf.mxu0
  %v1634 = vadd.f32 0.0, %v1633
  %v1635 = vpop.f32.mrf.mxu0
  %1636 = vdwg.mxu0
  %v1637 = vadd.f32 %v1564, %v1634
  %v1638 = vmul.f32 %v1637, 0.5
  %v1639 = vtanh.pop %v1638
  %v1640 = vmul.f32 %v1639, 0.5
  %v1641 = vadd.f32 %v1640, 0.5
  %v1642 = vtanh.pop %v1637
  %v1643 = vmul.f32 %v1641, %v1448
  %1645 = vrot.lane.b32.xlu0 %v1642, 64
  %v1646 = vpop.permute.xlu0 %1645
  %v1648 = vmul.f32 %v1641, %v1646
  %1650 = vrot.lane.b32.xlu0 %v1648, 32
  %v1651 = vpop.permute.xlu0 %1650
  %v1653 = vadd.f32 %v1643, %v1651
  %v1654 = vtanh.pop %v1653
  %1656 = vrot.lane.b32.xlu0 %v1654, 64
  %v1657 = vpop.permute.xlu0 %1656
  %v1659 = vmul.f32 %v1641, %v1657
  %1661 = vrot.lane.b32.xlu0 %v1659, 32
  %v1662 = vpop.permute.xlu0 %1661
  %s1664 = sadd.s32 8, 64
  %s1665 = scalar_lea.vmem %s5, %s1664
  %1666 = vst.msk [vmem:[%s1665] sm:$0xff] %vm48, %v1662
  %v1667 = vld [vmem:[%s317] sm:$0xff]
  %v1668 = vsel %vm48, %v1560, 0
  %1670 = vmatprep.subr.mxu0 0.0
  %1671 = vmatpush1.msra.mxu0 0.0
  %1672 = vmatprep.subr.mxu0 0.0
  %1673 = vmatpush1.msra.mxu0 0.0
  %1674 = vmatprep.subr.mxu0 0.0
  %1675 = vmatpush1.msra.mxu0 0.0
  %1676 = vmatprep.subr.mxu0 0.0
  %1677 = vmatpush1.msra.mxu0 0.0
  %1678 = vmatprep.subr.mxu0 0.0
  %1679 = vmatpush1.msra.mxu0 0.0
  %1680 = vmatprep.subr.mxu0 0.0
  %1681 = vmatpush1.msra.mxu0 0.0
  %1682 = vmatprep.subr.mxu0 0.0
  %1683 = vmatpush1.msra.mxu0 0.0
  %1684 = vmatprep.subr.mxu0 0.0
  %1685 = vmatpush1.msra.mxu0 0.0
  %1686 = vmatprep.subr.mxu0 0.0
  %1687 = vmatpush1.msra.mxu0 0.0
  %1688 = vmatprep.subr.mxu0 0.0
  %1689 = vmatpush1.msra.mxu0 0.0
  %1690 = vmatprep.subr.mxu0 0.0
  %1691 = vmatpush1.msra.mxu0 0.0
  %1692 = vmatprep.subr.mxu0 0.0
  %1693 = vmatpush1.msra.mxu0 0.0
  %1694 = vmatprep.subr.mxu0 0.0
  %1695 = vmatpush1.msra.mxu0 %v205
  %1696 = vmatprep.subr.mxu0 0.0
  %1697 = vmatpush1.msra.mxu0 %v204
  %1698 = vmatprep.subr.mxu0 0.0
  %1699 = vmatpush1.msra.mxu0 %v203
  %1700 = vmatprep.subr.mxu0 0.0
  %1701 = vmatpush1.msra.mxu0 %v202
  %1702 = vmatprep.subr.mxu0 0.0
  %1703 = vmatpush2.msra.mxu0 0.0
  %1704 = vmatprep.subr.mxu0 0.0
  %1705 = vmatpush2.msra.mxu0 0.0
  %1706 = vmatprep.subr.mxu0 0.0
  %1707 = vmatpush2.msra.mxu0 0.0
  %1708 = vmatprep.subr.mxu0 0.0
  %1709 = vmatpush2.msra.mxu0 0.0
  %1710 = vmatprep.subr.mxu0 0.0
  %1711 = vmatpush2.msra.mxu0 0.0
  %1712 = vmatprep.subr.mxu0 0.0
  %1713 = vmatpush2.msra.mxu0 0.0
  %1714 = vmatprep.subr.mxu0 0.0
  %1715 = vmatpush2.msra.mxu0 0.0
  %1716 = vmatprep.subr.mxu0 0.0
  %1717 = vmatpush2.msra.mxu0 0.0
  %1718 = vmatprep.subr.mxu0 0.0
  %1719 = vmatpush2.msra.mxu0 0.0
  %1720 = vmatprep.subr.mxu0 0.0
  %1721 = vmatpush2.msra.mxu0 0.0
  %1722 = vmatprep.subr.mxu0 0.0
  %1723 = vmatpush2.msra.mxu0 0.0
  %1724 = vmatprep.subr.mxu0 0.0
  %1725 = vmatpush2.msra.mxu0 0.0
  %1726 = vmatprep.subr.mxu0 0.0
  %1727 = vmatpush2.msra.mxu0 0.0
  %1728 = vmatprep.subr.mxu0 0.0
  %1729 = vmatpush2.msra.mxu0 0.0
  %1730 = vmatprep.subr.mxu0 0.0
  %1731 = vmatpush2.msra.mxu0 0.0
  %1732 = vmatprep.subr.mxu0 0.0
  %1733 = vmatpush2.msra.mxu0 0.0
  %1734 = vmatprep.mubr.f32.mxu0 0.0
  %1735 = vmatmul.mubr.f32.gmra.mxu0 %v1668
  %v1736 = vpop.f32.mrf.mxu0
  %v1737 = vadd.f32 0.0, %v1736
  %v1738 = vpop.f32.mrf.mxu0
  %1739 = vdwg.mxu0
  %v1740 = vadd.f32 %v1667, %v1737
  %v1741 = vmul.f32 %v1740, 0.5
  %v1742 = vtanh.pop %v1741
  %v1743 = vmul.f32 %v1742, 0.5
  %v1744 = vadd.f32 %v1743, 0.5
  %v1745 = vtanh.pop %v1740
  %v1746 = vmul.f32 %v1744, %v1551
  %1748 = vrot.lane.b32.xlu0 %v1745, 64
  %v1749 = vpop.permute.xlu0 %1748
  %v1751 = vmul.f32 %v1744, %v1749
  %1753 = vrot.lane.b32.xlu0 %v1751, 32
  %v1754 = vpop.permute.xlu0 %1753
  %v1756 = vadd.f32 %v1746, %v1754
  %v1757 = vtanh.pop %v1756
  %1759 = vrot.lane.b32.xlu0 %v1757, 64
  %v1760 = vpop.permute.xlu0 %1759
  %v1762 = vmul.f32 %v1744, %v1760
  %1764 = vrot.lane.b32.xlu0 %v1762, 32
  %v1765 = vpop.permute.xlu0 %1764
  %s1767 = scalar_lea.vmem %s5, 56
  %1768 = vst.msk [vmem:[%s1767] sm:$0xff] %vm48, %v1765
  %v1769 = vld [vmem:[%s212 + $0x8] sm:$0xff]
  %v1770 = vsel %vm48, %v1662, 0
  %1772 = vmatprep.subr.mxu0 0.0
  %1773 = vmatpush1.msra.mxu0 0.0
  %1774 = vmatprep.subr.mxu0 0.0
  %1775 = vmatpush1.msra.mxu0 0.0
  %1776 = vmatprep.subr.mxu0 0.0
  %1777 = vmatpush1.msra.mxu0 0.0
  %1778 = vmatprep.subr.mxu0 0.0
  %1779 = vmatpush1.msra.mxu0 0.0
  %1780 = vmatprep.subr.mxu0 0.0
  %1781 = vmatpush1.msra.mxu0 0.0
  %1782 = vmatprep.subr.mxu0 0.0
  %1783 = vmatpush1.msra.mxu0 0.0
  %1784 = vmatprep.subr.mxu0 0.0
  %1785 = vmatpush1.msra.mxu0 0.0
  %1786 = vmatprep.subr.mxu0 0.0
  %1787 = vmatpush1.msra.mxu0 0.0
  %1788 = vmatprep.subr.mxu0 0.0
  %1789 = vmatpush1.msra.mxu0 0.0
  %1790 = vmatprep.subr.mxu0 0.0
  %1791 = vmatpush1.msra.mxu0 0.0
  %1792 = vmatprep.subr.mxu0 0.0
  %1793 = vmatpush1.msra.mxu0 0.0
  %1794 = vmatprep.subr.mxu0 0.0
  %1795 = vmatpush1.msra.mxu0 0.0
  %1796 = vmatprep.subr.mxu0 0.0
  %1797 = vmatpush1.msra.mxu0 %v209
  %1798 = vmatprep.subr.mxu0 0.0
  %1799 = vmatpush1.msra.mxu0 %v208
  %1800 = vmatprep.subr.mxu0 0.0
  %1801 = vmatpush1.msra.mxu0 %v207
  %1802 = vmatprep.subr.mxu0 0.0
  %1803 = vmatpush1.msra.mxu0 %v206
  %1804 = vmatprep.subr.mxu0 0.0
  %1805 = vmatpush2.msra.mxu0 0.0
  %1806 = vmatprep.subr.mxu0 0.0
  %1807 = vmatpush2.msra.mxu0 0.0
  %1808 = vmatprep.subr.mxu0 0.0
  %1809 = vmatpush2.msra.mxu0 0.0
  %1810 = vmatprep.subr.mxu0 0.0
  %1811 = vmatpush2.msra.mxu0 0.0
  %1812 = vmatprep.subr.mxu0 0.0
  %1813 = vmatpush2.msra.mxu0 0.0
  %1814 = vmatprep.subr.mxu0 0.0
  %1815 = vmatpush2.msra.mxu0 0.0
  %1816 = vmatprep.subr.mxu0 0.0
  %1817 = vmatpush2.msra.mxu0 0.0
  %1818 = vmatprep.subr.mxu0 0.0
  %1819 = vmatpush2.msra.mxu0 0.0
  %1820 = vmatprep.subr.mxu0 0.0
  %1821 = vmatpush2.msra.mxu0 0.0
  %1822 = vmatprep.subr.mxu0 0.0
  %1823 = vmatpush2.msra.mxu0 0.0
  %1824 = vmatprep.subr.mxu0 0.0
  %1825 = vmatpush2.msra.mxu0 0.0
  %1826 = vmatprep.subr.mxu0 0.0
  %1827 = vmatpush2.msra.mxu0 0.0
  %1828 = vmatprep.subr.mxu0 0.0
  %1829 = vmatpush2.msra.mxu0 0.0
  %1830 = vmatprep.subr.mxu0 0.0
  %1831 = vmatpush2.msra.mxu0 0.0
  %1832 = vmatprep.subr.mxu0 0.0
  %1833 = vmatpush2.msra.mxu0 0.0
  %1834 = vmatprep.subr.mxu0 0.0
  %1835 = vmatpush2.msra.mxu0 0.0
  %1836 = vmatprep.mubr.f32.mxu0 0.0
  %1837 = vmatmul.mubr.f32.gmra.mxu0 %v1770
  %v1838 = vpop.f32.mrf.mxu0
  %v1839 = vadd.f32 0.0, %v1838
  %v1840 = vpop.f32.mrf.mxu0
  %1841 = vdwg.mxu0
  %v1842 = vadd.f32 %v1769, %v1839
  %v1843 = vmul.f32 %v1842, 0.5
  %v1844 = vtanh.pop %v1843
  %v1845 = vmul.f32 %v1844, 0.5
  %v1846 = vadd.f32 %v1845, 0.5
  %v1847 = vtanh.pop %v1842
  %v1848 = vmul.f32 %v1846, %v1653
  %1850 = vrot.lane.b32.xlu0 %v1847, 64
  %v1851 = vpop.permute.xlu0 %1850
  %v1853 = vmul.f32 %v1846, %v1851
  %1855 = vrot.lane.b32.xlu0 %v1853, 32
  %v1856 = vpop.permute.xlu0 %1855
  %v1858 = vadd.f32 %v1848, %v1856
  %v1859 = vtanh.pop %v1858
  %1861 = vrot.lane.b32.xlu0 %v1859, 64
  %v1862 = vpop.permute.xlu0 %1861
  %v1864 = vmul.f32 %v1846, %v1862
  %1866 = vrot.lane.b32.xlu0 %v1864, 32
  %v1867 = vpop.permute.xlu0 %1866
  %s1869 = sadd.s32 0, 64
  %s1870 = scalar_lea.vmem %s5, %s1869
  %1871 = vst.msk [vmem:[%s1870] sm:$0xff] %vm48, %v1867
  // Predicated region
  $region22: #{bilstm_encoder_forward.2} parent=0 // pred_check
    _
  $region23: #{bilstm_encoder_forward.2} parent=0 // pred_check_branch
    %1873 = sbr.rel (0) target = $region25
  $region24: #{bilstm_encoder_forward.2} parent=0 // pred_region
    _
  $region25: #{bilstm_encoder_forward.2} parent=0 // pred_fallthru
    _
  // Predicated region
  $region26: #{bilstm_encoder_forward.2} parent=0 // pred_check
    _
  $region27: #{bilstm_encoder_forward.2} parent=0 // pred_check_branch
    %1875 = sbr.rel (0) target = $region29
  $region28: #{bilstm_encoder_forward.2} parent=0 // pred_region
    _
  $region29: #{bilstm_encoder_forward.2} parent=0 // pred_fallthru
    _

</llo_original>
